<compile_context>
chip_gen: v7x
topology: tpu7x:2x2x1
jax: 0.10.0
libtpu: 0.0.40
codegen_flags: <defaults>
</compile_context>

<pallas_src>
import functools

import jax
import jax.numpy as jnp
from jax.experimental import pallas as pl
from jax.experimental.pallas import tpu as pltpu

BLOCK_DIMENSION = 200
LAYER_DIMENSION = 400
DESCRIPTOR_LAYER_DIMENSION = 5 * 5 * 9  # 225

# Lane/MXU friendly padded dimensions (multiples of 128).
BLOCK_P = 256
DESC_P = 256
LAYER_P = 512


def _round_up(x, m):
    return ((x + m - 1) // m) * m


def _light_probe_kernel(block_count, z_ref, *refs):
    """One batch tile; all weights resident in VMEM.

    DisneyBlock: out = relu(Linear_a(x) + Linear_z(z)).  The z-path matmul of
    each block is independent of the recurrence and is computed right before
    its use (one live zb tile at a time); block 0's x @ Wa is skipped (x0==0).
    """
    if block_count > 1:
        wa_ref, refs = refs[0], refs[1:]
    else:
        wa_ref = None
    (wb_ref, bab_ref,
     w1_ref, b1_ref, w2_ref, b2_ref, w3_ref, b3_ref, w4_ref, b4_ref,
     out_ref) = refs

    def z_path(i):
        # Block i consumes z layer (block_count - 1 - i); z is already bf16.
        z_i = z_ref[block_count - 1 - i]                       # (TB, DESC_P)
        return jnp.dot(z_i, wb_ref[i],
                       preferred_element_type=jnp.float32) + bab_ref[i]

    # ---- recurrent DisneyBlock chain (block 0: x == 0, no x @ Wa matmul) ----
    x = jnp.maximum(z_path(0), 0.0)
    for i in range(1, block_count):
        a = jnp.dot(x.astype(jnp.bfloat16), wa_ref[i - 1],
                    preferred_element_type=jnp.float32)
        x = jnp.maximum(a + z_path(i), 0.0)

    # ---- fully-connected head: (Linear -> ReLU) x 3, Linear -> Sigmoid ----
    h = jnp.maximum(jnp.dot(x.astype(jnp.bfloat16), w1_ref[...],
                            preferred_element_type=jnp.float32) + b1_ref[...], 0.0)
    h = jnp.maximum(jnp.dot(h.astype(jnp.bfloat16), w2_ref[...],
                            preferred_element_type=jnp.float32) + b2_ref[...], 0.0)
    h = jnp.maximum(jnp.dot(h.astype(jnp.bfloat16), w3_ref[...],
                            preferred_element_type=jnp.float32) + b3_ref[...], 0.0)
    y = jnp.dot(h.astype(jnp.bfloat16), w4_ref[...],
                preferred_element_type=jnp.float32) + b4_ref[...]
    out_ref[...] = jax.nn.sigmoid(y).astype(out_ref.dtype)


def init_params(key, block_count, output_dimension):
    """Deterministic synthetic parameters (torch.nn.Linear shapes, transposed):
    W stored as (in_features, out_features) f32, unpadded."""
    ks = jax.random.split(key, 12)
    s = 0.05
    return {
        "wa": s * jax.random.normal(ks[0], (block_count, BLOCK_DIMENSION, BLOCK_DIMENSION), jnp.float32),
        "ba": s * jax.random.normal(ks[1], (block_count, 1, BLOCK_DIMENSION), jnp.float32),
        "wb": s * jax.random.normal(ks[2], (block_count, DESCRIPTOR_LAYER_DIMENSION, BLOCK_DIMENSION), jnp.float32),
        "bb": s * jax.random.normal(ks[3], (block_count, 1, BLOCK_DIMENSION), jnp.float32),
        "w1": s * jax.random.normal(ks[4], (BLOCK_DIMENSION, LAYER_DIMENSION), jnp.float32),
        "b1": s * jax.random.normal(ks[5], (1, LAYER_DIMENSION), jnp.float32),
        "w2": s * jax.random.normal(ks[6], (LAYER_DIMENSION, LAYER_DIMENSION), jnp.float32),
        "b2": s * jax.random.normal(ks[7], (1, LAYER_DIMENSION), jnp.float32),
        "w3": s * jax.random.normal(ks[8], (LAYER_DIMENSION, LAYER_DIMENSION), jnp.float32),
        "b3": s * jax.random.normal(ks[9], (1, LAYER_DIMENSION), jnp.float32),
        "w4": s * jax.random.normal(ks[10], (LAYER_DIMENSION, output_dimension), jnp.float32),
        "b4": s * jax.random.normal(ks[11], (1, output_dimension), jnp.float32),
    }


def prepare_params(params, block_count):
    """Host-side prep: zero-pad every matmul dim to a 128 multiple, fold the two
    per-block biases, drop block 0's (never used) Wa, cast weights to bf16.
    Biases stay f32 (tiny; added into the f32 accumulator)."""
    out_dim = params["w4"].shape[1]
    out_p = _round_up(out_dim, 128)

    def padw(w, rp, cp):
        return jnp.pad(w, ((0, rp - w.shape[0]), (0, cp - w.shape[1])))

    def padb(b, cp):
        return jnp.pad(b, ((0, 0), (0, cp - b.shape[1])))

    wa = jnp.pad(params["wa"], ((0, 0),
                                (0, BLOCK_P - BLOCK_DIMENSION),
                                (0, BLOCK_P - BLOCK_DIMENSION))).astype(jnp.bfloat16)
    wb = jnp.pad(params["wb"], ((0, 0),
                                (0, DESC_P - DESCRIPTOR_LAYER_DIMENSION),
                                (0, BLOCK_P - BLOCK_DIMENSION))).astype(jnp.bfloat16)
    bab = jnp.pad(params["ba"] + params["bb"],
                  ((0, 0), (0, 0), (0, BLOCK_P - BLOCK_DIMENSION)))
    return {
        "wa": wa[1:] if block_count > 1 else None,   # block 0's Wa is never used
        "wb": wb,
        "bab": bab,
        "w1": padw(params["w1"], BLOCK_P, LAYER_P).astype(jnp.bfloat16),
        "b1": padb(params["b1"], LAYER_P),
        "w2": padw(params["w2"], LAYER_P, LAYER_P).astype(jnp.bfloat16),
        "b2": padb(params["b2"], LAYER_P),
        "w3": padw(params["w3"], LAYER_P, LAYER_P).astype(jnp.bfloat16),
        "b3": padb(params["b3"], LAYER_P),
        "w4": padw(params["w4"], LAYER_P, out_p).astype(jnp.bfloat16),
        "b4": padb(params["b4"], out_p),
    }


def light_probe_forward(z_layers, prepared, out_dim, *,
                        batch_tile=1024, out_dtype=jnp.float32):
    """Pallas wrapper: batch-tiled grid, weights VMEM-resident across the grid.

    Set out_dtype=jnp.bfloat16 to halve the output writeback if the consumer
    tolerates bf16 sigmoid outputs.
    """
    batch, block_count, zdim = z_layers.shape
    assert zdim == DESCRIPTOR_LAYER_DIMENSION
    out_p = prepared["w4"].shape[1]
    out_itemsize = jnp.dtype(out_dtype).itemsize

    b8 = _round_up(batch, 8)
    tb = _round_up(min(batch_tile, b8), 8)
    # v7x has two TensorCores: keep >= 2 grid steps whenever each tile can
    # still be >= 256 rows, so the "parallel" batch axis shards across them.
    if b8 >= 512:
        tb = min(tb, _round_up((b8 + 1) // 2, 8))
    b_pad = _round_up(batch, tb)
    grid = (b_pad // tb,)

    # Re-layout z once: (B, bc, 225) -> (bc, B_pad, 256) bf16.  Zero padding
    # (exact), lane-contiguous per-block slabs, half the streamed DMA vs f32.
    # TODO(synk): hoist this re-layout to data-prep time (or use
    # allow_input_fusion) when the same z_layers feeds repeated calls, to
    # avoid the extra HBM pass -- most visible on v5e.
    z = jnp.transpose(z_layers, (1, 0, 2)).astype(jnp.bfloat16)
    z = jnp.pad(z, ((0, 0), (0, b_pad - batch), (0, DESC_P - zdim)))

    weight_args = []
    if block_count > 1:
        weight_args.append(prepared["wa"])
    weight_args += [prepared["wb"], prepared["bab"],
                    prepared["w1"], prepared["b1"],
                    prepared["w2"], prepared["b2"],
                    prepared["w3"], prepared["b3"],
                    prepared["w4"], prepared["b4"]]

    def resident(arr):
        # Full array, constant block index -> DMA'd once, resident for the
        # whole grid.  Single-buffered: the block never changes, so the
        # default second pipeline buffer would be dead VMEM.
        nd = arr.ndim
        return pl.BlockSpec(arr.shape, lambda i, _n=nd: (0,) * _n,
                            pipeline_mode=pl.Buffered(1))

    in_specs = [pl.BlockSpec((block_count, tb, DESC_P), lambda i: (0, i, 0))]
    in_specs += [resident(a) for a in weight_args]
    out_spec = pl.BlockSpec((tb, out_p), lambda i: (i, 0))

    flops = 2 * b_pad * (block_count * DESC_P * BLOCK_P
                         + (block_count - 1) * BLOCK_P * BLOCK_P
                         + BLOCK_P * LAYER_P + 2 * LAYER_P * LAYER_P
                         + LAYER_P * out_p)
    weight_bytes = sum(int(a.size) * a.dtype.itemsize for a in weight_args)
    bytes_accessed = (weight_bytes
                      + int(z.size) * z.dtype.itemsize
                      + b_pad * out_p * out_itemsize)
    cost = pl.CostEstimate(flops=flops,
                           transcendentals=b_pad * out_p,
                           bytes_accessed=bytes_accessed)

    # VMEM budget: single-buffered resident weights + double-buffered z / out
    # tiles + headroom for in-kernel activations; capped below v7x's 64 MiB.
    vmem_limit = min(
        weight_bytes
        + 2 * block_count * tb * DESC_P * 2       # z tiles (bf16, 2 buffers)
        + 2 * tb * out_p * out_itemsize           # out tiles (2 buffers)
        + (24 << 20),                             # activation / spill headroom
        48 << 20)

    out_pad = pl.pallas_call(
        functools.partial(_light_probe_kernel, block_count),
        out_shape=jax.ShapeDtypeStruct((b_pad, out_p), out_dtype),
        grid=grid,
        in_specs=in_specs,
        out_specs=out_spec,
        compiler_params=pltpu.CompilerParams(
            dimension_semantics=("parallel",),
            vmem_limit_bytes=int(vmem_limit)),
        cost_estimate=cost,
    )(z, *weight_args)

    return out_pad[:batch, :out_dim]


def light_probe_reference(z_layers, params):
    """Pure-JAX f32 reference of the original module's semantics."""
    batch, block_count, _ = z_layers.shape
    x = jnp.zeros((batch, BLOCK_DIMENSION), jnp.float32)
    for i in range(block_count):
        li = block_count - 1 - i
        z_i = z_layers[:, li, :]
        x = jax.nn.relu(x @ params["wa"][i] + params["ba"][i]
                        + z_i @ params["wb"][i] + params["bb"][i])
    h = jax.nn.relu(x @ params["w1"] + params["b1"])
    h = jax.nn.relu(h @ params["w2"] + params["b2"])
    h = jax.nn.relu(h @ params["w3"] + params["b3"])
    return jax.nn.sigmoid(h @ params["w4"] + params["b4"])


if __name__ == "__main__":
    batch = 2
    block_count = 4
    output_dimension = 64

    key = jax.random.PRNGKey(0)
    k_params, k_data = jax.random.split(key)
    params = init_params(k_params, block_count, output_dimension)
    prepared = prepare_params(params, block_count)
    z_layers = jax.random.normal(
        k_data, (batch, block_count, DESCRIPTOR_LAYER_DIMENSION), jnp.float32)

    fwd = jax.jit(functools.partial(light_probe_forward,
                                    out_dim=output_dimension))
    out = jax.block_until_ready(fwd(z_layers, prepared))
    ref = jax.block_until_ready(light_probe_reference(z_layers, params))

    assert out.shape == (batch, output_dimension)
    max_err = float(jnp.max(jnp.abs(out - ref)))
    # bf16 weights / z / activation-operands (f32 accumulate) -> loose tolerance.
    assert jnp.allclose(out, ref, atol=2e-2, rtol=2e-2), max_err

    print("KERNEL_OK")
</pallas_src>

<mosaic_0001>
module attributes {stable_mosaic.version = 11 : i64} {
  func.func @_light_probe_kernel(%arg0: i32, %arg1: memref<4x8x256xbf16, #tpu.memory_space<vmem>>, %arg2: memref<3x256x256xbf16, #tpu.memory_space<vmem>>, %arg3: memref<4x256x256xbf16, #tpu.memory_space<vmem>>, %arg4: memref<4x1x256xf32, #tpu.memory_space<vmem>>, %arg5: memref<256x512xbf16, #tpu.memory_space<vmem>>, %arg6: memref<1x512xf32, #tpu.memory_space<vmem>>, %arg7: memref<512x512xbf16, #tpu.memory_space<vmem>>, %arg8: memref<1x512xf32, #tpu.memory_space<vmem>>, %arg9: memref<512x512xbf16, #tpu.memory_space<vmem>>, %arg10: memref<1x512xf32, #tpu.memory_space<vmem>>, %arg11: memref<512x128xbf16, #tpu.memory_space<vmem>>, %arg12: memref<1x128xf32, #tpu.memory_space<vmem>>, %arg13: memref<8x128xf32, #tpu.memory_space<vmem>>) attributes {dimension_semantics = [#tpu.dimension_semantics<parallel>], iteration_bounds = array<i64: 1>, scalar_prefetch = 0 : i64, scratch_operands = 0 : i64, tpu.core_type = #tpu.core_type<tc>, window_params = [{transform_indices = @transform_0, window_bounds = array<i64: 4, 8, 256>}, {pipeline_mode = #tpu.pipeline_mode<synchronous>, transform_indices = @transform_1, window_bounds = array<i64: 3, 256, 256>}, {pipeline_mode = #tpu.pipeline_mode<synchronous>, transform_indices = @transform_2, window_bounds = array<i64: 4, 256, 256>}, {pipeline_mode = #tpu.pipeline_mode<synchronous>, transform_indices = @transform_3, window_bounds = array<i64: 4, 1, 256>}, {pipeline_mode = #tpu.pipeline_mode<synchronous>, transform_indices = @transform_4, window_bounds = array<i64: 256, 512>}, {pipeline_mode = #tpu.pipeline_mode<synchronous>, transform_indices = @transform_5, window_bounds = array<i64: 1, 512>}, {pipeline_mode = #tpu.pipeline_mode<synchronous>, transform_indices = @transform_6, window_bounds = array<i64: 512, 512>}, {pipeline_mode = #tpu.pipeline_mode<synchronous>, transform_indices = @transform_7, window_bounds = array<i64: 1, 512>}, {pipeline_mode = #tpu.pipeline_mode<synchronous>, transform_indices = @transform_8, window_bounds = array<i64: 512, 512>}, {pipeline_mode = #tpu.pipeline_mode<synchronous>, transform_indices = @transform_9, window_bounds = array<i64: 1, 512>}, {pipeline_mode = #tpu.pipeline_mode<synchronous>, transform_indices = @transform_10, window_bounds = array<i64: 512, 128>}, {pipeline_mode = #tpu.pipeline_mode<synchronous>, transform_indices = @transform_11, window_bounds = array<i64: 1, 128>}, {transform_indices = @transform_12, window_bounds = array<i64: 8, 128>}]} {
    %c3 = arith.constant 3 : index
    %c0 = arith.constant 0 : index
    %c0_0 = arith.constant 0 : index
    %0 = vector.load %arg1[%c3, %c0, %c0_0] : memref<4x8x256xbf16, #tpu.memory_space<vmem>>, vector<1x8x256xbf16>
    %1 = vector.shape_cast %0 : vector<1x8x256xbf16> to vector<8x256xbf16>
    %c0_1 = arith.constant 0 : index
    %c0_2 = arith.constant 0 : index
    %c0_3 = arith.constant 0 : index
    %2 = vector.load %arg3[%c0_1, %c0_2, %c0_3] : memref<4x256x256xbf16, #tpu.memory_space<vmem>>, vector<1x256x256xbf16>
    %3 = vector.shape_cast %2 : vector<1x256x256xbf16> to vector<256x256xbf16>
    %cst = arith.constant dense<0.000000e+00> : vector<8x256xf32>
    %4 = tpu.matmul %1, %3, %cst {dimension_numbers = #tpu.dot_dimension_numbers<[1], [0], [0], [1], [0, 0, 1, 1], [], []>} : vector<8x256xbf16>, vector<256x256xbf16>, vector<8x256xf32> -> vector<8x256xf32>
    %c0_4 = arith.constant 0 : index
    %c0_5 = arith.constant 0 : index
    %c0_6 = arith.constant 0 : index
    %5 = vector.load %arg4[%c0_4, %c0_5, %c0_6] : memref<4x1x256xf32, #tpu.memory_space<vmem>>, vector<1x1x256xf32>
    %6 = vector.shape_cast %5 : vector<1x1x256xf32> to vector<1x256xf32>
    %7 = vector.broadcast %6 : vector<1x256xf32> to vector<8x256xf32>
    %8 = arith.addf %4, %7 : vector<8x256xf32>
    %cst_7 = arith.constant 0.000000e+00 : f32
    %9 = vector.broadcast %cst_7 : f32 to vector<8x256xf32>
    %10 = arith.maximumf %8, %9 : vector<8x256xf32>
    %11 = arith.truncf %10 : vector<8x256xf32> to vector<8x256xbf16>
    %c0_8 = arith.constant 0 : index
    %c0_9 = arith.constant 0 : index
    %c0_10 = arith.constant 0 : index
    %12 = vector.load %arg2[%c0_8, %c0_9, %c0_10] : memref<3x256x256xbf16, #tpu.memory_space<vmem>>, vector<1x256x256xbf16>
    %13 = vector.shape_cast %12 : vector<1x256x256xbf16> to vector<256x256xbf16>
    %cst_11 = arith.constant dense<0.000000e+00> : vector<8x256xf32>
    %14 = tpu.matmul %11, %13, %cst_11 {dimension_numbers = #tpu.dot_dimension_numbers<[1], [0], [0], [1], [0, 0, 1, 1], [], []>} : vector<8x256xbf16>, vector<256x256xbf16>, vector<8x256xf32> -> vector<8x256xf32>
    %c2 = arith.constant 2 : index
    %c0_12 = arith.constant 0 : index
    %c0_13 = arith.constant 0 : index
    %15 = vector.load %arg1[%c2, %c0_12, %c0_13] : memref<4x8x256xbf16, #tpu.memory_space<vmem>>, vector<1x8x256xbf16>
    %16 = vector.shape_cast %15 : vector<1x8x256xbf16> to vector<8x256xbf16>
    %c1 = arith.constant 1 : index
    %c0_14 = arith.constant 0 : index
    %c0_15 = arith.constant 0 : index
    %17 = vector.load %arg3[%c1, %c0_14, %c0_15] : memref<4x256x256xbf16, #tpu.memory_space<vmem>>, vector<1x256x256xbf16>
    %18 = vector.shape_cast %17 : vector<1x256x256xbf16> to vector<256x256xbf16>
    %cst_16 = arith.constant dense<0.000000e+00> : vector<8x256xf32>
    %19 = tpu.matmul %16, %18, %cst_16 {dimension_numbers = #tpu.dot_dimension_numbers<[1], [0], [0], [1], [0, 0, 1, 1], [], []>} : vector<8x256xbf16>, vector<256x256xbf16>, vector<8x256xf32> -> vector<8x256xf32>
    %c1_17 = arith.constant 1 : index
    %c0_18 = arith.constant 0 : index
    %c0_19 = arith.constant 0 : index
    %20 = vector.load %arg4[%c1_17, %c0_18, %c0_19] : memref<4x1x256xf32, #tpu.memory_space<vmem>>, vector<1x1x256xf32>
    %21 = vector.shape_cast %20 : vector<1x1x256xf32> to vector<1x256xf32>
    %22 = vector.broadcast %21 : vector<1x256xf32> to vector<8x256xf32>
    %23 = arith.addf %19, %22 : vector<8x256xf32>
    %24 = arith.addf %14, %23 : vector<8x256xf32>
    %cst_20 = arith.constant 0.000000e+00 : f32
    %25 = vector.broadcast %cst_20 : f32 to vector<8x256xf32>
    %26 = arith.maximumf %24, %25 : vector<8x256xf32>
    %27 = arith.truncf %26 : vector<8x256xf32> to vector<8x256xbf16>
    %c1_21 = arith.constant 1 : index
    %c0_22 = arith.constant 0 : index
    %c0_23 = arith.constant 0 : index
    %28 = vector.load %arg2[%c1_21, %c0_22, %c0_23] : memref<3x256x256xbf16, #tpu.memory_space<vmem>>, vector<1x256x256xbf16>
    %29 = vector.shape_cast %28 : vector<1x256x256xbf16> to vector<256x256xbf16>
    %cst_24 = arith.constant dense<0.000000e+00> : vector<8x256xf32>
    %30 = tpu.matmul %27, %29, %cst_24 {dimension_numbers = #tpu.dot_dimension_numbers<[1], [0], [0], [1], [0, 0, 1, 1], [], []>} : vector<8x256xbf16>, vector<256x256xbf16>, vector<8x256xf32> -> vector<8x256xf32>
    %c1_25 = arith.constant 1 : index
    %c0_26 = arith.constant 0 : index
    %c0_27 = arith.constant 0 : index
    %31 = vector.load %arg1[%c1_25, %c0_26, %c0_27] : memref<4x8x256xbf16, #tpu.memory_space<vmem>>, vector<1x8x256xbf16>
    %32 = vector.shape_cast %31 : vector<1x8x256xbf16> to vector<8x256xbf16>
    %c2_28 = arith.constant 2 : index
    %c0_29 = arith.constant 0 : index
    %c0_30 = arith.constant 0 : index
    %33 = vector.load %arg3[%c2_28, %c0_29, %c0_30] : memref<4x256x256xbf16, #tpu.memory_space<vmem>>, vector<1x256x256xbf16>
    %34 = vector.shape_cast %33 : vector<1x256x256xbf16> to vector<256x256xbf16>
    %cst_31 = arith.constant dense<0.000000e+00> : vector<8x256xf32>
    %35 = tpu.matmul %32, %34, %cst_31 {dimension_numbers = #tpu.dot_dimension_numbers<[1], [0], [0], [1], [0, 0, 1, 1], [], []>} : vector<8x256xbf16>, vector<256x256xbf16>, vector<8x256xf32> -> vector<8x256xf32>
    %c2_32 = arith.constant 2 : index
    %c0_33 = arith.constant 0 : index
    %c0_34 = arith.constant 0 : index
    %36 = vector.load %arg4[%c2_32, %c0_33, %c0_34] : memref<4x1x256xf32, #tpu.memory_space<vmem>>, vector<1x1x256xf32>
    %37 = vector.shape_cast %36 : vector<1x1x256xf32> to vector<1x256xf32>
    %38 = vector.broadcast %37 : vector<1x256xf32> to vector<8x256xf32>
    %39 = arith.addf %35, %38 : vector<8x256xf32>
    %40 = arith.addf %30, %39 : vector<8x256xf32>
    %cst_35 = arith.constant 0.000000e+00 : f32
    %41 = vector.broadcast %cst_35 : f32 to vector<8x256xf32>
    %42 = arith.maximumf %40, %41 : vector<8x256xf32>
    %43 = arith.truncf %42 : vector<8x256xf32> to vector<8x256xbf16>
    %c2_36 = arith.constant 2 : index
    %c0_37 = arith.constant 0 : index
    %c0_38 = arith.constant 0 : index
    %44 = vector.load %arg2[%c2_36, %c0_37, %c0_38] : memref<3x256x256xbf16, #tpu.memory_space<vmem>>, vector<1x256x256xbf16>
    %45 = vector.shape_cast %44 : vector<1x256x256xbf16> to vector<256x256xbf16>
    %cst_39 = arith.constant dense<0.000000e+00> : vector<8x256xf32>
    %46 = tpu.matmul %43, %45, %cst_39 {dimension_numbers = #tpu.dot_dimension_numbers<[1], [0], [0], [1], [0, 0, 1, 1], [], []>} : vector<8x256xbf16>, vector<256x256xbf16>, vector<8x256xf32> -> vector<8x256xf32>
    %c0_40 = arith.constant 0 : index
    %c0_41 = arith.constant 0 : index
    %c0_42 = arith.constant 0 : index
    %47 = vector.load %arg1[%c0_40, %c0_41, %c0_42] : memref<4x8x256xbf16, #tpu.memory_space<vmem>>, vector<1x8x256xbf16>
    %48 = vector.shape_cast %47 : vector<1x8x256xbf16> to vector<8x256xbf16>
    %c3_43 = arith.constant 3 : index
    %c0_44 = arith.constant 0 : index
    %c0_45 = arith.constant 0 : index
    %49 = vector.load %arg3[%c3_43, %c0_44, %c0_45] : memref<4x256x256xbf16, #tpu.memory_space<vmem>>, vector<1x256x256xbf16>
    %50 = vector.shape_cast %49 : vector<1x256x256xbf16> to vector<256x256xbf16>
    %cst_46 = arith.constant dense<0.000000e+00> : vector<8x256xf32>
    %51 = tpu.matmul %48, %50, %cst_46 {dimension_numbers = #tpu.dot_dimension_numbers<[1], [0], [0], [1], [0, 0, 1, 1], [], []>} : vector<8x256xbf16>, vector<256x256xbf16>, vector<8x256xf32> -> vector<8x256xf32>
    %c3_47 = arith.constant 3 : index
    %c0_48 = arith.constant 0 : index
    %c0_49 = arith.constant 0 : index
    %52 = vector.load %arg4[%c3_47, %c0_48, %c0_49] : memref<4x1x256xf32, #tpu.memory_space<vmem>>, vector<1x1x256xf32>
    %53 = vector.shape_cast %52 : vector<1x1x256xf32> to vector<1x256xf32>
    %54 = vector.broadcast %53 : vector<1x256xf32> to vector<8x256xf32>
    %55 = arith.addf %51, %54 : vector<8x256xf32>
    %56 = arith.addf %46, %55 : vector<8x256xf32>
    %cst_50 = arith.constant 0.000000e+00 : f32
    %57 = vector.broadcast %cst_50 : f32 to vector<8x256xf32>
    %58 = arith.maximumf %56, %57 : vector<8x256xf32>
    %59 = arith.truncf %58 : vector<8x256xf32> to vector<8x256xbf16>
    %c0_51 = arith.constant 0 : index
    %c0_52 = arith.constant 0 : index
    %60 = vector.load %arg5[%c0_51, %c0_52] : memref<256x512xbf16, #tpu.memory_space<vmem>>, vector<256x512xbf16>
    %cst_53 = arith.constant dense<0.000000e+00> : vector<8x512xf32>
    %61 = tpu.matmul %59, %60, %cst_53 {dimension_numbers = #tpu.dot_dimension_numbers<[1], [0], [0], [1], [0, 0, 1, 1], [], []>} : vector<8x256xbf16>, vector<256x512xbf16>, vector<8x512xf32> -> vector<8x512xf32>
    %c0_54 = arith.constant 0 : index
    %c0_55 = arith.constant 0 : index
    %62 = vector.load %arg6[%c0_54, %c0_55] : memref<1x512xf32, #tpu.memory_space<vmem>>, vector<1x512xf32>
    %63 = vector.broadcast %62 : vector<1x512xf32> to vector<8x512xf32>
    %64 = arith.addf %61, %63 : vector<8x512xf32>
    %cst_56 = arith.constant 0.000000e+00 : f32
    %65 = vector.broadcast %cst_56 : f32 to vector<8x512xf32>
    %66 = arith.maximumf %64, %65 : vector<8x512xf32>
    %67 = arith.truncf %66 : vector<8x512xf32> to vector<8x512xbf16>
    %c0_57 = arith.constant 0 : index
    %c0_58 = arith.constant 0 : index
    %68 = vector.load %arg7[%c0_57, %c0_58] : memref<512x512xbf16, #tpu.memory_space<vmem>>, vector<512x512xbf16>
    %cst_59 = arith.constant dense<0.000000e+00> : vector<8x512xf32>
    %69 = tpu.matmul %67, %68, %cst_59 {dimension_numbers = #tpu.dot_dimension_numbers<[1], [0], [0], [1], [0, 0, 1, 1], [], []>} : vector<8x512xbf16>, vector<512x512xbf16>, vector<8x512xf32> -> vector<8x512xf32>
    %c0_60 = arith.constant 0 : index
    %c0_61 = arith.constant 0 : index
    %70 = vector.load %arg8[%c0_60, %c0_61] : memref<1x512xf32, #tpu.memory_space<vmem>>, vector<1x512xf32>
    %71 = vector.broadcast %70 : vector<1x512xf32> to vector<8x512xf32>
    %72 = arith.addf %69, %71 : vector<8x512xf32>
    %cst_62 = arith.constant 0.000000e+00 : f32
    %73 = vector.broadcast %cst_62 : f32 to vector<8x512xf32>
    %74 = arith.maximumf %72, %73 : vector<8x512xf32>
    %75 = arith.truncf %74 : vector<8x512xf32> to vector<8x512xbf16>
    %c0_63 = arith.constant 0 : index
    %c0_64 = arith.constant 0 : index
    %76 = vector.load %arg9[%c0_63, %c0_64] : memref<512x512xbf16, #tpu.memory_space<vmem>>, vector<512x512xbf16>
    %cst_65 = arith.constant dense<0.000000e+00> : vector<8x512xf32>
    %77 = tpu.matmul %75, %76, %cst_65 {dimension_numbers = #tpu.dot_dimension_numbers<[1], [0], [0], [1], [0, 0, 1, 1], [], []>} : vector<8x512xbf16>, vector<512x512xbf16>, vector<8x512xf32> -> vector<8x512xf32>
    %c0_66 = arith.constant 0 : index
    %c0_67 = arith.constant 0 : index
    %78 = vector.load %arg10[%c0_66, %c0_67] : memref<1x512xf32, #tpu.memory_space<vmem>>, vector<1x512xf32>
    %79 = vector.broadcast %78 : vector<1x512xf32> to vector<8x512xf32>
    %80 = arith.addf %77, %79 : vector<8x512xf32>
    %cst_68 = arith.constant 0.000000e+00 : f32
    %81 = vector.broadcast %cst_68 : f32 to vector<8x512xf32>
    %82 = arith.maximumf %80, %81 : vector<8x512xf32>
    %83 = arith.truncf %82 : vector<8x512xf32> to vector<8x512xbf16>
    %c0_69 = arith.constant 0 : index
    %c0_70 = arith.constant 0 : index
    %84 = vector.load %arg11[%c0_69, %c0_70] : memref<512x128xbf16, #tpu.memory_space<vmem>>, vector<512x128xbf16>
    %cst_71 = arith.constant dense<0.000000e+00> : vector<8x128xf32>
    %85 = tpu.matmul %83, %84, %cst_71 {dimension_numbers = #tpu.dot_dimension_numbers<[1], [0], [0], [1], [0, 0, 1, 1], [], []>} : vector<8x512xbf16>, vector<512x128xbf16>, vector<8x128xf32> -> vector<8x128xf32>
    %c0_72 = arith.constant 0 : index
    %c0_73 = arith.constant 0 : index
    %86 = vector.load %arg12[%c0_72, %c0_73] : memref<1x128xf32, #tpu.memory_space<vmem>>, vector<1x128xf32>
    %87 = vector.broadcast %86 : vector<1x128xf32> to vector<8x128xf32>
    %88 = arith.addf %85, %87 : vector<8x128xf32>
    %89 = arith.negf %88 : vector<8x128xf32>
    %90 = math.exp %89 : vector<8x128xf32>
    %cst_74 = arith.constant 1.000000e+00 : f32
    %91 = vector.broadcast %cst_74 : f32 to vector<8x128xf32>
    %92 = arith.addf %91, %90 : vector<8x128xf32>
    %93 = arith.divf %91, %92 : vector<8x128xf32>
    %c0_75 = arith.constant 0 : index
    %c0_76 = arith.constant 0 : index
    %94 = vector.load %arg13[%c0_75, %c0_76] : memref<8x128xf32, #tpu.memory_space<vmem>>, vector<8x128xf32>
    tpu.vector_store %arg13[%c0_75, %c0_76], %93 {strides = array<i32>} : memref<8x128xf32, #tpu.memory_space<vmem>>, vector<8x128xf32>,
    return
  }
  func.func @transform_0(%arg0: i32) -> (i32, i32, i32) {
    %c0_i32 = arith.constant 0 : i32
    %c0_i32_0 = arith.constant 0 : i32
    %c0_i32_1 = arith.constant 0 : i32
    return %c0_i32, %arg0, %c0_i32_0 : i32, i32, i32
  }
  func.func @transform_1(%arg0: i32) -> (i32, i32, i32) {
    %c0_i32 = arith.constant 0 : i32
    %c0_i32_0 = arith.constant 0 : i32
    %c0_i32_1 = arith.constant 0 : i32
    %c0_i32_2 = arith.constant 0 : i32
    return %c0_i32, %c0_i32_0, %c0_i32_1 : i32, i32, i32
  }
  func.func @transform_2(%arg0: i32) -> (i32, i32, i32) {
    %c0_i32 = arith.constant 0 : i32
    %c0_i32_0 = arith.constant 0 : i32
    %c0_i32_1 = arith.constant 0 : i32
    %c0_i32_2 = arith.constant 0 : i32
    return %c0_i32, %c0_i32_0, %c0_i32_1 : i32, i32, i32
  }
  func.func @transform_3(%arg0: i32) -> (i32, i32, i32) {
    %c0_i32 = arith.constant 0 : i32
    %c0_i32_0 = arith.constant 0 : i32
    %c0_i32_1 = arith.constant 0 : i32
    %c0_i32_2 = arith.constant 0 : i32
    return %c0_i32, %c0_i32_0, %c0_i32_1 : i32, i32, i32
  }
  func.func @transform_4(%arg0: i32) -> (i32, i32) {
    %c0_i32 = arith.constant 0 : i32
    %c0_i32_0 = arith.constant 0 : i32
    %c0_i32_1 = arith.constant 0 : i32
    return %c0_i32, %c0_i32_0 : i32, i32
  }
  func.func @transform_5(%arg0: i32) -> (i32, i32) {
    %c0_i32 = arith.constant 0 : i32
    %c0_i32_0 = arith.constant 0 : i32
    %c0_i32_1 = arith.constant 0 : i32
    return %c0_i32, %c0_i32_0 : i32, i32
  }
  func.func @transform_6(%arg0: i32) -> (i32, i32) {
    %c0_i32 = arith.constant 0 : i32
    %c0_i32_0 = arith.constant 0 : i32
    %c0_i32_1 = arith.constant 0 : i32
    return %c0_i32, %c0_i32_0 : i32, i32
  }
  func.func @transform_7(%arg0: i32) -> (i32, i32) {
    %c0_i32 = arith.constant 0 : i32
    %c0_i32_0 = arith.constant 0 : i32
    %c0_i32_1 = arith.constant 0 : i32
    return %c0_i32, %c0_i32_0 : i32, i32
  }
  func.func @transform_8(%arg0: i32) -> (i32, i32) {
    %c0_i32 = arith.constant 0 : i32
    %c0_i32_0 = arith.constant 0 : i32
    %c0_i32_1 = arith.constant 0 : i32
    return %c0_i32, %c0_i32_0 : i32, i32
  }
  func.func @transform_9(%arg0: i32) -> (i32, i32) {
    %c0_i32 = arith.constant 0 : i32
    %c0_i32_0 = arith.constant 0 : i32
    %c0_i32_1 = arith.constant 0 : i32
    return %c0_i32, %c0_i32_0 : i32, i32
  }
  func.func @transform_10(%arg0: i32) -> (i32, i32) {
    %c0_i32 = arith.constant 0 : i32
    %c0_i32_0 = arith.constant 0 : i32
    %c0_i32_1 = arith.constant 0 : i32
    return %c0_i32, %c0_i32_0 : i32, i32
  }
  func.func @transform_11(%arg0: i32) -> (i32, i32) {
    %c0_i32 = arith.constant 0 : i32
    %c0_i32_0 = arith.constant 0 : i32
    %c0_i32_1 = arith.constant 0 : i32
    return %c0_i32, %c0_i32_0 : i32, i32
  }
  func.func @transform_12(%arg0: i32) -> (i32, i32) {
    %c0_i32 = arith.constant 0 : i32
    %c0_i32_0 = arith.constant 0 : i32
    return %arg0, %c0_i32 : i32, i32
  }
}

</mosaic_0001>

<llo_original>
// kernel: light_probe_forward.1
$region0: #{light_probe_forward.1}
  #allocation0 [shape = 'u32[]', space=smem, size = 0x4, offset = 0x4, fixed_abs, tag = 'smem constant byte address 0x4 - core index']
  #allocation1 [shape = 'u32[144,128]{1,0:T(1,128)}', space=vmem, size = 0x12000, scoped, tag = 'internal scratch']
  %s0 = inlined_call_operand.vmem [shape: bf16[4,8,256], index: 0, kind: input, shape index: {}]
  %s1 = inlined_call_operand.hbm [shape: bf16[3,256,256], index: 1, kind: input, shape index: {}]
  %s2 = inlined_call_operand.hbm [shape: bf16[4,256,256], index: 2, kind: input, shape index: {}]
  %s3 = inlined_call_operand.vmem [shape: f32[4,1,256], index: 3, kind: input, shape index: {}]
  %s4 = inlined_call_operand.hbm [shape: bf16[256,512], index: 4, kind: input, shape index: {}]
  %s5 = inlined_call_operand.vmem [shape: f32[1,512], index: 5, kind: input, shape index: {}]
  %s6 = inlined_call_operand.hbm [shape: bf16[512,512], index: 6, kind: input, shape index: {}]
  %s7 = inlined_call_operand.vmem [shape: f32[1,512], index: 7, kind: input, shape index: {}]
  %s8 = inlined_call_operand.hbm [shape: bf16[512,512], index: 8, kind: input, shape index: {}]
  %s9 = inlined_call_operand.vmem [shape: f32[1,512], index: 9, kind: input, shape index: {}]
  %s10 = inlined_call_operand.hbm [shape: bf16[512,128], index: 10, kind: input, shape index: {}]
  %s11 = inlined_call_operand.vmem [shape: f32[1,128], index: 11, kind: input, shape index: {}]
  %s12 = inlined_call_operand.vmem [shape: f32[8,128], index: 12, kind: output, shape index: {}]
  %s13 = sld [smem:[#allocation0]]
  $region82: #{light_probe_forward.1} parent=0
    _
  %s15 = ssub.s32 1, %s13
  %s16 = scalar_select 0, %s15, %s13
  $region1: #{light_probe_forward.1} parent=0
    #allocation2 [shape = 'u8[393216]{0}', space=vmem, size = 0x60000, scoped, tag = 'input window, operand 1, single buffered']
    #allocation3 [shape = 's32[1]{0}', space=sflag, size = 0x4, scoped, tag = 'scoped memory for light_probe_forward.1']
    #allocation4 [shape = 'u8[524288]{0}', space=vmem, size = 0x80000, scoped, tag = 'input window, operand 2, single buffered']
    #allocation5 [shape = 's32[1]{0}', space=sflag, size = 0x4, scoped, tag = 'scoped memory for light_probe_forward.1']
    #allocation6 [shape = 'u8[262144]{0}', space=vmem, size = 0x40000, scoped, tag = 'input window, operand 4, single buffered']
    #allocation7 [shape = 'u8[524288]{0}', space=vmem, size = 0x80000, scoped, tag = 'input window, operand 6, single buffered']
    #allocation8 [shape = 's32[1]{0}', space=sflag, size = 0x4, scoped, tag = 'scoped memory for light_probe_forward.1']
    #allocation9 [shape = 'u8[524288]{0}', space=vmem, size = 0x80000, scoped, tag = 'input window, operand 8, single buffered']
    #allocation10 [shape = 'u8[131072]{0}', space=vmem, size = 0x20000, scoped, tag = 'input window, operand 10, single buffered']
    #allocation11 [shape = 's32[1]{0}', space=sflag, size = 0x4, scoped, tag = 'scoped memory for light_probe_forward.1']
    %17 = vsyncpa [#allocation3], 0
    %18 = vsyncpa [#allocation5], 0
    %19 = vsyncpa [#allocation8], 0
    %20 = vsyncpa [#allocation11], 0
    // Predicated region
    $region2: #{light_probe_forward.1} parent=1 // pred_check
      _
    $region3: #{light_probe_forward.1} parent=1 // pred_check_branch
      %22 = sbr.rel (0) target = $region5
    $region4: #{light_probe_forward.1} parent=1 // pred_region
      _
    $region5: #{light_probe_forward.1} parent=1 // pred_fallthru
      _
    // Predicated region
    $region6: #{light_probe_forward.1} parent=1 // pred_check
      _
    $region7: #{light_probe_forward.1} parent=1 // pred_check_branch
      %24 = sbr.rel (0) target = $region9
    $region8: #{light_probe_forward.1} parent=1 // pred_region
      %s26 = ssub.s32 12288, 12288
      %27 = vsyncadd [#allocation3], %s26
      %s28 = sshll.u32 [#allocation2], 4
      %s29 = int_to_ptr.vmem [resolvable:$true] %s28
      %34 = dma.hbm_to_vmem [thread:$0]  %s1, 12288, %s29, [#allocation3], 128, 128, 8
    $region9: #{light_probe_forward.1} parent=1 // pred_fallthru
      _
    // Predicated region
    $region10: #{light_probe_forward.1} parent=1 // pred_check
      _
    $region11: #{light_probe_forward.1} parent=1 // pred_check_branch
      %36 = sbr.rel (0) target = $region13
    $region12: #{light_probe_forward.1} parent=1 // pred_region
      %s38 = ssub.s32 16384, 16384
      %39 = vsyncadd [#allocation5], %s38
      %s40 = sshll.u32 [#allocation4], 4
      %s41 = int_to_ptr.vmem [resolvable:$true] %s40
      %46 = dma.hbm_to_vmem [thread:$0]  %s2, 16384, %s41, [#allocation5], 128, 128, 8
    $region13: #{light_probe_forward.1} parent=1 // pred_fallthru
      _
    // Predicated region
    $region14: #{light_probe_forward.1} parent=1 // pred_check
      _
    $region15: #{light_probe_forward.1} parent=1 // pred_check_branch
      %48 = sbr.rel (0) target = $region17
    $region16: #{light_probe_forward.1} parent=1 // pred_region
      _
    $region17: #{light_probe_forward.1} parent=1 // pred_fallthru
      _
    // Predicated region
    $region18: #{light_probe_forward.1} parent=1 // pred_check
      _
    $region19: #{light_probe_forward.1} parent=1 // pred_check_branch
      %50 = sbr.rel (0) target = $region21
    $region20: #{light_probe_forward.1} parent=1 // pred_region
      %s52 = ssub.s32 8192, 8192
      %53 = vsyncadd [#allocation5], %s52
      %s54 = sshll.u32 [#allocation6], 4
      %s55 = int_to_ptr.vmem [resolvable:$true] %s54
      %60 = dma.hbm_to_vmem [thread:$0]  %s4, 8192, %s55, [#allocation5], 256, 256, 16
    $region21: #{light_probe_forward.1} parent=1 // pred_fallthru
      _
    // Predicated region
    $region22: #{light_probe_forward.1} parent=1 // pred_check
      _
    $region23: #{light_probe_forward.1} parent=1 // pred_check_branch
      %62 = sbr.rel (0) target = $region25
    $region24: #{light_probe_forward.1} parent=1 // pred_region
      _
    $region25: #{light_probe_forward.1} parent=1 // pred_fallthru
      _
    // Predicated region
    $region26: #{light_probe_forward.1} parent=1 // pred_check
      _
    $region27: #{light_probe_forward.1} parent=1 // pred_check_branch
      %64 = sbr.rel (0) target = $region29
    $region28: #{light_probe_forward.1} parent=1 // pred_region
      %s66 = ssub.s32 16384, 16384
      %67 = vsyncadd [#allocation8], %s66
      %s68 = sshll.u32 [#allocation7], 4
      %s69 = int_to_ptr.vmem [resolvable:$true] %s68
      %74 = dma.hbm_to_vmem [thread:$0]  %s6, 16384, %s69, [#allocation8], 256, 256, 16
    $region29: #{light_probe_forward.1} parent=1 // pred_fallthru
      _
    // Predicated region
    $region30: #{light_probe_forward.1} parent=1 // pred_check
      _
    $region31: #{light_probe_forward.1} parent=1 // pred_check_branch
      %76 = sbr.rel (0) target = $region33
    $region32: #{light_probe_forward.1} parent=1 // pred_region
      _
    $region33: #{light_probe_forward.1} parent=1 // pred_fallthru
      _
    // Predicated region
    $region34: #{light_probe_forward.1} parent=1 // pred_check
      _
    $region35: #{light_probe_forward.1} parent=1 // pred_check_branch
      %78 = sbr.rel (0) target = $region37
    $region36: #{light_probe_forward.1} parent=1 // pred_region
      %s80 = ssub.s32 16384, 16384
      %81 = vsyncadd [#allocation8], %s80
      %s82 = sshll.u32 [#allocation9], 4
      %s83 = int_to_ptr.vmem [resolvable:$true] %s82
      %88 = dma.hbm_to_vmem [thread:$0]  %s8, 16384, %s83, [#allocation8], 256, 256, 16
    $region37: #{light_probe_forward.1} parent=1 // pred_fallthru
      _
    // Predicated region
    $region38: #{light_probe_forward.1} parent=1 // pred_check
      _
    $region39: #{light_probe_forward.1} parent=1 // pred_check_branch
      %90 = sbr.rel (0) target = $region41
    $region40: #{light_probe_forward.1} parent=1 // pred_region
      _
    $region41: #{light_probe_forward.1} parent=1 // pred_fallthru
      _
    // Predicated region
    $region42: #{light_probe_forward.1} parent=1 // pred_check
      _
    $region43: #{light_probe_forward.1} parent=1 // pred_check_branch
      %92 = sbr.rel (0) target = $region45
    $region44: #{light_probe_forward.1} parent=1 // pred_region
      %s94 = ssub.s32 4096, 4096
      %95 = vsyncadd [#allocation11], %s94
      %s96 = sshll.u32 [#allocation10], 4
      %s97 = int_to_ptr.vmem [resolvable:$true] %s96
      %102 = dma.hbm_to_vmem [thread:$0]  %s10, 4096, %s97, [#allocation11], 64, 64, 4
    $region45: #{light_probe_forward.1} parent=1 // pred_fallthru
      _
    // Predicated region
    $region46: #{light_probe_forward.1} parent=1 // pred_check
      _
    $region47: #{light_probe_forward.1} parent=1 // pred_check_branch
      %104 = sbr.rel (0) target = $region49
    $region48: #{light_probe_forward.1} parent=1 // pred_region
      _
    $region49: #{light_probe_forward.1} parent=1 // pred_fallthru
      _
    // Predicated region
    $region50: #{light_probe_forward.1} parent=1 // pred_check
      _
    $region51: #{light_probe_forward.1} parent=1 // pred_check_branch
      %106 = sbr.rel (0) target = $region53
    $region52: #{light_probe_forward.1} parent=1 // pred_region
      %107 = dma.done [#allocation3], 12288
    $region53: #{light_probe_forward.1} parent=1 // pred_fallthru
      _
    // Predicated region
    $region54: #{light_probe_forward.1} parent=1 // pred_check
      _
    $region55: #{light_probe_forward.1} parent=1 // pred_check_branch
      %109 = sbr.rel (0) target = $region57
    $region56: #{light_probe_forward.1} parent=1 // pred_region
      %110 = dma.done [#allocation5], 16384
    $region57: #{light_probe_forward.1} parent=1 // pred_fallthru
      _
    // Predicated region
    $region58: #{light_probe_forward.1} parent=1 // pred_check
      _
    $region59: #{light_probe_forward.1} parent=1 // pred_check_branch
      %112 = sbr.rel (0) target = $region61
    $region60: #{light_probe_forward.1} parent=1 // pred_region
      %113 = dma.done [#allocation5], 8192
    $region61: #{light_probe_forward.1} parent=1 // pred_fallthru
      _
    // Predicated region
    $region62: #{light_probe_forward.1} parent=1 // pred_check
      _
    $region63: #{light_probe_forward.1} parent=1 // pred_check_branch
      %115 = sbr.rel (0) target = $region65
    $region64: #{light_probe_forward.1} parent=1 // pred_region
      %116 = dma.done [#allocation8], 16384
    $region65: #{light_probe_forward.1} parent=1 // pred_fallthru
      _
    // Predicated region
    $region66: #{light_probe_forward.1} parent=1 // pred_check
      _
    $region67: #{light_probe_forward.1} parent=1 // pred_check_branch
      %118 = sbr.rel (0) target = $region69
    $region68: #{light_probe_forward.1} parent=1 // pred_region
      %119 = dma.done [#allocation8], 16384
    $region69: #{light_probe_forward.1} parent=1 // pred_fallthru
      _
    // Predicated region
    $region70: #{light_probe_forward.1} parent=1 // pred_check
      _
    $region71: #{light_probe_forward.1} parent=1 // pred_check_branch
      %121 = sbr.rel (0) target = $region73
    $region72: #{light_probe_forward.1} parent=1 // pred_region
      %122 = dma.done [#allocation11], 4096
    $region73: #{light_probe_forward.1} parent=1 // pred_fallthru
      _
    %s124 = scalar_lea.vmem %s0, 24
    %v125 = vld [vmem:[%s124] sm:$0xff]
    %v126 = vld [vmem:[#allocation4] sm:$0xff]
    %v127 = vld [vmem:[#allocation4 + $0x8] sm:$0xff]
    %v128 = vld [vmem:[#allocation4 + $0x10] sm:$0xff]
    %v129 = vld [vmem:[#allocation4 + $0x18] sm:$0xff]
    %v130 = vld [vmem:[#allocation4 + $0x20] sm:$0xff]
    %v131 = vld [vmem:[#allocation4 + $0x28] sm:$0xff]
    %v132 = vld [vmem:[#allocation4 + $0x30] sm:$0xff]
    %v133 = vld [vmem:[#allocation4 + $0x38] sm:$0xff]
    %v134 = vld [vmem:[#allocation4 + $0x40] sm:$0xff]
    %v135 = vld [vmem:[#allocation4 + $0x48] sm:$0xff]
    %v136 = vld [vmem:[#allocation4 + $0x50] sm:$0xff]
    %v137 = vld [vmem:[#allocation4 + $0x58] sm:$0xff]
    %v138 = vld [vmem:[#allocation4 + $0x60] sm:$0xff]
    %v139 = vld [vmem:[#allocation4 + $0x68] sm:$0xff]
    %v140 = vld [vmem:[#allocation4 + $0x70] sm:$0xff]
    %v141 = vld [vmem:[#allocation4 + $0x78] sm:$0xff]
    %v142 = vld [vmem:[#allocation4 + $0x80] sm:$0xff]
    %v143 = vld [vmem:[#allocation4 + $0x88] sm:$0xff]
    %v144 = vld [vmem:[#allocation4 + $0x90] sm:$0xff]
    %v145 = vld [vmem:[#allocation4 + $0x98] sm:$0xff]
    %v146 = vld [vmem:[#allocation4 + $0xa0] sm:$0xff]
    %v147 = vld [vmem:[#allocation4 + $0xa8] sm:$0xff]
    %v148 = vld [vmem:[#allocation4 + $0xb0] sm:$0xff]
    %v149 = vld [vmem:[#allocation4 + $0xb8] sm:$0xff]
    %v150 = vld [vmem:[#allocation4 + $0xc0] sm:$0xff]
    %v151 = vld [vmem:[#allocation4 + $0xc8] sm:$0xff]
    %v152 = vld [vmem:[#allocation4 + $0xd0] sm:$0xff]
    %v153 = vld [vmem:[#allocation4 + $0xd8] sm:$0xff]
    %v154 = vld [vmem:[#allocation4 + $0xe0] sm:$0xff]
    %v155 = vld [vmem:[#allocation4 + $0xe8] sm:$0xff]
    %v156 = vld [vmem:[#allocation4 + $0xf0] sm:$0xff]
    %v157 = vld [vmem:[#allocation4 + $0xf8] sm:$0xff]
    %v158 = vld [vmem:[%s3] sm:$0x3]
    %v160 = vlaneseq
    %v161 = vshrl.u32 %v160, 7
    %v162 = vsub.s32 0, %v161
    %v163 = vrot.slane %v158, %v162
    %v164 = vlaneseq
    %v165 = vshrl.u32 %v164, 7
    %v166 = vsub.s32 1, %v165
    %v167 = vrot.slane %v158, %v166
    %v171 = vunpack.c.l.b16 %v125
    %v172 = vunpack.c.h.b16 %v125
    %v173 = vpack.c.b16 %v171, %v171
    %v174 = vpack.c.b16 %v172, %v172
    %v209 = vunpack.c.l.b16 %v126
    %v210 = vunpack.c.h.b16 %v126
    %v211 = vunpack.c.l.b16 %v127
    %v212 = vunpack.c.h.b16 %v127
    %v213 = vunpack.c.l.b16 %v128
    %v214 = vunpack.c.h.b16 %v128
    %v215 = vunpack.c.l.b16 %v129
    %v216 = vunpack.c.h.b16 %v129
    %v217 = vunpack.c.l.b16 %v130
    %v218 = vunpack.c.h.b16 %v130
    %v219 = vunpack.c.l.b16 %v131
    %v220 = vunpack.c.h.b16 %v131
    %v221 = vunpack.c.l.b16 %v132
    %v222 = vunpack.c.h.b16 %v132
    %v223 = vunpack.c.l.b16 %v133
    %v224 = vunpack.c.h.b16 %v133
    %v225 = vunpack.c.l.b16 %v134
    %v226 = vunpack.c.h.b16 %v134
    %v227 = vunpack.c.l.b16 %v135
    %v228 = vunpack.c.h.b16 %v135
    %v229 = vunpack.c.l.b16 %v136
    %v230 = vunpack.c.h.b16 %v136
    %v231 = vunpack.c.l.b16 %v137
    %v232 = vunpack.c.h.b16 %v137
    %v233 = vunpack.c.l.b16 %v138
    %v234 = vunpack.c.h.b16 %v138
    %v235 = vunpack.c.l.b16 %v139
    %v236 = vunpack.c.h.b16 %v139
    %v237 = vunpack.c.l.b16 %v140
    %v238 = vunpack.c.h.b16 %v140
    %v239 = vunpack.c.l.b16 %v141
    %v240 = vunpack.c.h.b16 %v141
    %v241 = vunpack.c.l.b16 %v142
    %v242 = vunpack.c.h.b16 %v142
    %v243 = vunpack.c.l.b16 %v143
    %v244 = vunpack.c.h.b16 %v143
    %v245 = vunpack.c.l.b16 %v144
    %v246 = vunpack.c.h.b16 %v144
    %v247 = vunpack.c.l.b16 %v145
    %v248 = vunpack.c.h.b16 %v145
    %v249 = vunpack.c.l.b16 %v146
    %v250 = vunpack.c.h.b16 %v146
    %v251 = vunpack.c.l.b16 %v147
    %v252 = vunpack.c.h.b16 %v147
    %v253 = vunpack.c.l.b16 %v148
    %v254 = vunpack.c.h.b16 %v148
    %v255 = vunpack.c.l.b16 %v149
    %v256 = vunpack.c.h.b16 %v149
    %v257 = vunpack.c.l.b16 %v150
    %v258 = vunpack.c.h.b16 %v150
    %v259 = vunpack.c.l.b16 %v151
    %v260 = vunpack.c.h.b16 %v151
    %v261 = vunpack.c.l.b16 %v152
    %v262 = vunpack.c.h.b16 %v152
    %v263 = vunpack.c.l.b16 %v153
    %v264 = vunpack.c.h.b16 %v153
    %v265 = vunpack.c.l.b16 %v154
    %v266 = vunpack.c.h.b16 %v154
    %v267 = vunpack.c.l.b16 %v155
    %v268 = vunpack.c.h.b16 %v155
    %v269 = vunpack.c.l.b16 %v156
    %v270 = vunpack.c.h.b16 %v156
    %v271 = vunpack.c.l.b16 %v157
    %v272 = vunpack.c.h.b16 %v157
    %v273 = vpack.c.b16 %v211, %v209
    %v274 = vpack.c.b16 %v212, %v210
    %v275 = vpack.c.b16 %v215, %v213
    %v276 = vpack.c.b16 %v216, %v214
    %v277 = vpack.c.b16 %v219, %v217
    %v278 = vpack.c.b16 %v220, %v218
    %v279 = vpack.c.b16 %v223, %v221
    %v280 = vpack.c.b16 %v224, %v222
    %v281 = vpack.c.b16 %v227, %v225
    %v282 = vpack.c.b16 %v228, %v226
    %v283 = vpack.c.b16 %v231, %v229
    %v284 = vpack.c.b16 %v232, %v230
    %v285 = vpack.c.b16 %v235, %v233
    %v286 = vpack.c.b16 %v236, %v234
    %v287 = vpack.c.b16 %v239, %v237
    %v288 = vpack.c.b16 %v240, %v238
    %v289 = vpack.c.b16 %v243, %v241
    %v290 = vpack.c.b16 %v244, %v242
    %v291 = vpack.c.b16 %v247, %v245
    %v292 = vpack.c.b16 %v248, %v246
    %v293 = vpack.c.b16 %v251, %v249
    %v294 = vpack.c.b16 %v252, %v250
    %v295 = vpack.c.b16 %v255, %v253
    %v296 = vpack.c.b16 %v256, %v254
    %v297 = vpack.c.b16 %v259, %v257
    %v298 = vpack.c.b16 %v260, %v258
    %v299 = vpack.c.b16 %v263, %v261
    %v300 = vpack.c.b16 %v264, %v262
    %v301 = vpack.c.b16 %v267, %v265
    %v302 = vpack.c.b16 %v268, %v266
    %v303 = vpack.c.b16 %v271, %v269
    %v304 = vpack.c.b16 %v272, %v270
    %337 = vmatprep.subr.bf16.mxu0 %v274
    %338 = vmatpush1.bf16.msra.mxu0 %v273
    %339 = vmatprep.subr.bf16.mxu0 %v276
    %340 = vmatpush1.bf16.msra.mxu0 %v275
    %341 = vmatprep.subr.bf16.mxu0 %v278
    %342 = vmatpush1.bf16.msra.mxu0 %v277
    %343 = vmatprep.subr.bf16.mxu0 %v280
    %344 = vmatpush1.bf16.msra.mxu0 %v279
    %345 = vmatprep.subr.bf16.mxu0 %v282
    %346 = vmatpush1.bf16.msra.mxu0 %v281
    %347 = vmatprep.subr.bf16.mxu0 %v284
    %348 = vmatpush1.bf16.msra.mxu0 %v283
    %349 = vmatprep.subr.bf16.mxu0 %v286
    %350 = vmatpush1.bf16.msra.mxu0 %v285
    %351 = vmatprep.subr.bf16.mxu0 %v288
    %352 = vmatpush1.bf16.msra.mxu0 %v287
    %353 = vmatprep.subr.bf16.mxu0 %v290
    %354 = vmatpush1.bf16.msra.mxu0 %v289
    %355 = vmatprep.subr.bf16.mxu0 %v292
    %356 = vmatpush1.bf16.msra.mxu0 %v291
    %357 = vmatprep.subr.bf16.mxu0 %v294
    %358 = vmatpush1.bf16.msra.mxu0 %v293
    %359 = vmatprep.subr.bf16.mxu0 %v296
    %360 = vmatpush1.bf16.msra.mxu0 %v295
    %361 = vmatprep.subr.bf16.mxu0 %v298
    %362 = vmatpush1.bf16.msra.mxu0 %v297
    %363 = vmatprep.subr.bf16.mxu0 %v300
    %364 = vmatpush1.bf16.msra.mxu0 %v299
    %365 = vmatprep.subr.bf16.mxu0 %v302
    %366 = vmatpush1.bf16.msra.mxu0 %v301
    %367 = vmatprep.subr.bf16.mxu0 %v304
    %368 = vmatpush1.bf16.msra.mxu0 %v303
    %369 = vmatprep.mubr.bf16.mxu0 %v174
    %370 = vmatmul.mubr.bf16.gmra.mrb[0].mxu0 %v173
    %v371 = vpop.f32.mrb[0].mxu0
    %v372 = vadd.f32 %v163, %v371
    %v373 = vpop.f32.mrb[0].mxu0
    %v374 = vadd.f32 %v167, %v373
    %v375 = vpop.f32.mrb[0].mxu0
    %v376 = vpop.f32.mrb[0].mxu0
    %377 = vdwg.mxu0
    %v378 = vmax.f32 %v372, 0.0
    %v379 = vmax.f32 %v374, 0.0
    %v380 = vpack.c.bf16 %v378, %v378
    %v381 = vpack.c.bf16 %v379, %v379
    %v382 = vld [vmem:[#allocation2] sm:$0xff]
    %v383 = vld [vmem:[#allocation2 + $0x8] sm:$0xff]
    %v384 = vld [vmem:[#allocation2 + $0x10] sm:$0xff]
    %v385 = vld [vmem:[#allocation2 + $0x18] sm:$0xff]
    %v386 = vld [vmem:[#allocation2 + $0x20] sm:$0xff]
    %v387 = vld [vmem:[#allocation2 + $0x28] sm:$0xff]
    %v388 = vld [vmem:[#allocation2 + $0x30] sm:$0xff]
    %v389 = vld [vmem:[#allocation2 + $0x38] sm:$0xff]
    %v390 = vld [vmem:[#allocation2 + $0x40] sm:$0xff]
    %v391 = vld [vmem:[#allocation2 + $0x48] sm:$0xff]
    %v392 = vld [vmem:[#allocation2 + $0x50] sm:$0xff]
    %v393 = vld [vmem:[#allocation2 + $0x58] sm:$0xff]
    %v394 = vld [vmem:[#allocation2 + $0x60] sm:$0xff]
    %v395 = vld [vmem:[#allocation2 + $0x68] sm:$0xff]
    %v396 = vld [vmem:[#allocation2 + $0x70] sm:$0xff]
    %v397 = vld [vmem:[#allocation2 + $0x78] sm:$0xff]
    %v398 = vld [vmem:[#allocation2 + $0x80] sm:$0xff]
    %v399 = vld [vmem:[#allocation2 + $0x88] sm:$0xff]
    %v400 = vld [vmem:[#allocation2 + $0x90] sm:$0xff]
    %v401 = vld [vmem:[#allocation2 + $0x98] sm:$0xff]
    %v402 = vld [vmem:[#allocation2 + $0xa0] sm:$0xff]
    %v403 = vld [vmem:[#allocation2 + $0xa8] sm:$0xff]
    %v404 = vld [vmem:[#allocation2 + $0xb0] sm:$0xff]
    %v405 = vld [vmem:[#allocation2 + $0xb8] sm:$0xff]
    %v406 = vld [vmem:[#allocation2 + $0xc0] sm:$0xff]
    %v407 = vld [vmem:[#allocation2 + $0xc8] sm:$0xff]
    %v408 = vld [vmem:[#allocation2 + $0xd0] sm:$0xff]
    %v409 = vld [vmem:[#allocation2 + $0xd8] sm:$0xff]
    %v410 = vld [vmem:[#allocation2 + $0xe0] sm:$0xff]
    %v411 = vld [vmem:[#allocation2 + $0xe8] sm:$0xff]
    %v412 = vld [vmem:[#allocation2 + $0xf0] sm:$0xff]
    %v413 = vld [vmem:[#allocation2 + $0xf8] sm:$0xff]
    %s414 = scalar_lea.vmem %s0, 16
    %v415 = vld [vmem:[%s414] sm:$0xff]
    %s416 = scalar_lea.vmem [#allocation4], 256
    %v417 = vld [vmem:[%s416] sm:$0xff]
    %v418 = vld [vmem:[%s416 + $0x8] sm:$0xff]
    %v419 = vld [vmem:[%s416 + $0x10] sm:$0xff]
    %v420 = vld [vmem:[%s416 + $0x18] sm:$0xff]
    %v421 = vld [vmem:[%s416 + $0x20] sm:$0xff]
    %v422 = vld [vmem:[%s416 + $0x28] sm:$0xff]
    %v423 = vld [vmem:[%s416 + $0x30] sm:$0xff]
    %v424 = vld [vmem:[%s416 + $0x38] sm:$0xff]
    %v425 = vld [vmem:[%s416 + $0x40] sm:$0xff]
    %v426 = vld [vmem:[%s416 + $0x48] sm:$0xff]
    %v427 = vld [vmem:[%s416 + $0x50] sm:$0xff]
    %v428 = vld [vmem:[%s416 + $0x58] sm:$0xff]
    %v429 = vld [vmem:[%s416 + $0x60] sm:$0xff]
    %v430 = vld [vmem:[%s416 + $0x68] sm:$0xff]
    %v431 = vld [vmem:[%s416 + $0x70] sm:$0xff]
    %v432 = vld [vmem:[%s416 + $0x78] sm:$0xff]
    %v433 = vld [vmem:[%s416 + $0x80] sm:$0xff]
    %v434 = vld [vmem:[%s416 + $0x88] sm:$0xff]
    %v435 = vld [vmem:[%s416 + $0x90] sm:$0xff]
    %v436 = vld [vmem:[%s416 + $0x98] sm:$0xff]
    %v437 = vld [vmem:[%s416 + $0xa0] sm:$0xff]
    %v438 = vld [vmem:[%s416 + $0xa8] sm:$0xff]
    %v439 = vld [vmem:[%s416 + $0xb0] sm:$0xff]
    %v440 = vld [vmem:[%s416 + $0xb8] sm:$0xff]
    %v441 = vld [vmem:[%s416 + $0xc0] sm:$0xff]
    %v442 = vld [vmem:[%s416 + $0xc8] sm:$0xff]
    %v443 = vld [vmem:[%s416 + $0xd0] sm:$0xff]
    %v444 = vld [vmem:[%s416 + $0xd8] sm:$0xff]
    %v445 = vld [vmem:[%s416 + $0xe0] sm:$0xff]
    %v446 = vld [vmem:[%s416 + $0xe8] sm:$0xff]
    %v447 = vld [vmem:[%s416 + $0xf0] sm:$0xff]
    %v448 = vld [vmem:[%s416 + $0xf8] sm:$0xff]
    %s449 = scalar_lea.vmem %s3, 2
    %v450 = vld [vmem:[%s449] sm:$0x3]
    %v452 = vlaneseq
    %v453 = vshrl.u32 %v452, 7
    %v454 = vsub.s32 0, %v453
    %v455 = vrot.slane %v450, %v454
    %v456 = vlaneseq
    %v457 = vshrl.u32 %v456, 7
    %v458 = vsub.s32 1, %v457
    %v459 = vrot.slane %v450, %v458
    %v463 = vunpack.c.l.b16 %v415
    %v464 = vunpack.c.h.b16 %v415
    %v465 = vpack.c.b16 %v463, %v463
    %v466 = vpack.c.b16 %v464, %v464
    %v501 = vunpack.c.l.b16 %v417
    %v502 = vunpack.c.h.b16 %v417
    %v503 = vunpack.c.l.b16 %v418
    %v504 = vunpack.c.h.b16 %v418
    %v505 = vunpack.c.l.b16 %v419
    %v506 = vunpack.c.h.b16 %v419
    %v507 = vunpack.c.l.b16 %v420
    %v508 = vunpack.c.h.b16 %v420
    %v509 = vunpack.c.l.b16 %v421
    %v510 = vunpack.c.h.b16 %v421
    %v511 = vunpack.c.l.b16 %v422
    %v512 = vunpack.c.h.b16 %v422
    %v513 = vunpack.c.l.b16 %v423
    %v514 = vunpack.c.h.b16 %v423
    %v515 = vunpack.c.l.b16 %v424
    %v516 = vunpack.c.h.b16 %v424
    %v517 = vunpack.c.l.b16 %v425
    %v518 = vunpack.c.h.b16 %v425
    %v519 = vunpack.c.l.b16 %v426
    %v520 = vunpack.c.h.b16 %v426
    %v521 = vunpack.c.l.b16 %v427
    %v522 = vunpack.c.h.b16 %v427
    %v523 = vunpack.c.l.b16 %v428
    %v524 = vunpack.c.h.b16 %v428
    %v525 = vunpack.c.l.b16 %v429
    %v526 = vunpack.c.h.b16 %v429
    %v527 = vunpack.c.l.b16 %v430
    %v528 = vunpack.c.h.b16 %v430
    %v529 = vunpack.c.l.b16 %v431
    %v530 = vunpack.c.h.b16 %v431
    %v531 = vunpack.c.l.b16 %v432
    %v532 = vunpack.c.h.b16 %v432
    %v533 = vunpack.c.l.b16 %v433
    %v534 = vunpack.c.h.b16 %v433
    %v535 = vunpack.c.l.b16 %v434
    %v536 = vunpack.c.h.b16 %v434
    %v537 = vunpack.c.l.b16 %v435
    %v538 = vunpack.c.h.b16 %v435
    %v539 = vunpack.c.l.b16 %v436
    %v540 = vunpack.c.h.b16 %v436
    %v541 = vunpack.c.l.b16 %v437
    %v542 = vunpack.c.h.b16 %v437
    %v543 = vunpack.c.l.b16 %v438
    %v544 = vunpack.c.h.b16 %v438
    %v545 = vunpack.c.l.b16 %v439
    %v546 = vunpack.c.h.b16 %v439
    %v547 = vunpack.c.l.b16 %v440
    %v548 = vunpack.c.h.b16 %v440
    %v549 = vunpack.c.l.b16 %v441
    %v550 = vunpack.c.h.b16 %v441
    %v551 = vunpack.c.l.b16 %v442
    %v552 = vunpack.c.h.b16 %v442
    %v553 = vunpack.c.l.b16 %v443
    %v554 = vunpack.c.h.b16 %v443
    %v555 = vunpack.c.l.b16 %v444
    %v556 = vunpack.c.h.b16 %v444
    %v557 = vunpack.c.l.b16 %v445
    %v558 = vunpack.c.h.b16 %v445
    %v559 = vunpack.c.l.b16 %v446
    %v560 = vunpack.c.h.b16 %v446
    %v561 = vunpack.c.l.b16 %v447
    %v562 = vunpack.c.h.b16 %v447
    %v563 = vunpack.c.l.b16 %v448
    %v564 = vunpack.c.h.b16 %v448
    %v565 = vpack.c.b16 %v503, %v501
    %v566 = vpack.c.b16 %v504, %v502
    %v567 = vpack.c.b16 %v507, %v505
    %v568 = vpack.c.b16 %v508, %v506
    %v569 = vpack.c.b16 %v511, %v509
    %v570 = vpack.c.b16 %v512, %v510
    %v571 = vpack.c.b16 %v515, %v513
    %v572 = vpack.c.b16 %v516, %v514
    %v573 = vpack.c.b16 %v519, %v517
    %v574 = vpack.c.b16 %v520, %v518
    %v575 = vpack.c.b16 %v523, %v521
    %v576 = vpack.c.b16 %v524, %v522
    %v577 = vpack.c.b16 %v527, %v525
    %v578 = vpack.c.b16 %v528, %v526
    %v579 = vpack.c.b16 %v531, %v529
    %v580 = vpack.c.b16 %v532, %v530
    %v581 = vpack.c.b16 %v535, %v533
    %v582 = vpack.c.b16 %v536, %v534
    %v583 = vpack.c.b16 %v539, %v537
    %v584 = vpack.c.b16 %v540, %v538
    %v585 = vpack.c.b16 %v543, %v541
    %v586 = vpack.c.b16 %v544, %v542
    %v587 = vpack.c.b16 %v547, %v545
    %v588 = vpack.c.b16 %v548, %v546
    %v589 = vpack.c.b16 %v551, %v549
    %v590 = vpack.c.b16 %v552, %v550
    %v591 = vpack.c.b16 %v555, %v553
    %v592 = vpack.c.b16 %v556, %v554
    %v593 = vpack.c.b16 %v559, %v557
    %v594 = vpack.c.b16 %v560, %v558
    %v595 = vpack.c.b16 %v563, %v561
    %v596 = vpack.c.b16 %v564, %v562
    %629 = vmatprep.subr.bf16.mxu0 %v566
    %630 = vmatpush1.bf16.msra.mxu0 %v565
    %631 = vmatprep.subr.bf16.mxu0 %v568
    %632 = vmatpush1.bf16.msra.mxu0 %v567
    %633 = vmatprep.subr.bf16.mxu0 %v570
    %634 = vmatpush1.bf16.msra.mxu0 %v569
    %635 = vmatprep.subr.bf16.mxu0 %v572
    %636 = vmatpush1.bf16.msra.mxu0 %v571
    %637 = vmatprep.subr.bf16.mxu0 %v574
    %638 = vmatpush1.bf16.msra.mxu0 %v573
    %639 = vmatprep.subr.bf16.mxu0 %v576
    %640 = vmatpush1.bf16.msra.mxu0 %v575
    %641 = vmatprep.subr.bf16.mxu0 %v578
    %642 = vmatpush1.bf16.msra.mxu0 %v577
    %643 = vmatprep.subr.bf16.mxu0 %v580
    %644 = vmatpush1.bf16.msra.mxu0 %v579
    %645 = vmatprep.subr.bf16.mxu0 %v582
    %646 = vmatpush1.bf16.msra.mxu0 %v581
    %647 = vmatprep.subr.bf16.mxu0 %v584
    %648 = vmatpush1.bf16.msra.mxu0 %v583
    %649 = vmatprep.subr.bf16.mxu0 %v586
    %650 = vmatpush1.bf16.msra.mxu0 %v585
    %651 = vmatprep.subr.bf16.mxu0 %v588
    %652 = vmatpush1.bf16.msra.mxu0 %v587
    %653 = vmatprep.subr.bf16.mxu0 %v590
    %654 = vmatpush1.bf16.msra.mxu0 %v589
    %655 = vmatprep.subr.bf16.mxu0 %v592
    %656 = vmatpush1.bf16.msra.mxu0 %v591
    %657 = vmatprep.subr.bf16.mxu0 %v594
    %658 = vmatpush1.bf16.msra.mxu0 %v593
    %659 = vmatprep.subr.bf16.mxu0 %v596
    %660 = vmatpush1.bf16.msra.mxu0 %v595
    %661 = vmatprep.mubr.bf16.mxu0 %v466
    %662 = vmatmul.mubr.bf16.gmra.mrb[0].mxu0 %v465
    %v663 = vpop.f32.mrb[0].mxu0
    %v664 = vadd.f32 %v455, %v663
    %v665 = vpop.f32.mrb[0].mxu0
    %v666 = vadd.f32 %v459, %v665
    %v667 = vpop.f32.mrb[0].mxu0
    %v668 = vpop.f32.mrb[0].mxu0
    %669 = vdwg.mxu0
    %v702 = vunpack.c.l.b16 %v382
    %v703 = vunpack.c.h.b16 %v382
    %v704 = vunpack.c.l.b16 %v383
    %v705 = vunpack.c.h.b16 %v383
    %v706 = vunpack.c.l.b16 %v384
    %v707 = vunpack.c.h.b16 %v384
    %v708 = vunpack.c.l.b16 %v385
    %v709 = vunpack.c.h.b16 %v385
    %v710 = vunpack.c.l.b16 %v386
    %v711 = vunpack.c.h.b16 %v386
    %v712 = vunpack.c.l.b16 %v387
    %v713 = vunpack.c.h.b16 %v387
    %v714 = vunpack.c.l.b16 %v388
    %v715 = vunpack.c.h.b16 %v388
    %v716 = vunpack.c.l.b16 %v389
    %v717 = vunpack.c.h.b16 %v389
    %v718 = vunpack.c.l.b16 %v390
    %v719 = vunpack.c.h.b16 %v390
    %v720 = vunpack.c.l.b16 %v391
    %v721 = vunpack.c.h.b16 %v391
    %v722 = vunpack.c.l.b16 %v392
    %v723 = vunpack.c.h.b16 %v392
    %v724 = vunpack.c.l.b16 %v393
    %v725 = vunpack.c.h.b16 %v393
    %v726 = vunpack.c.l.b16 %v394
    %v727 = vunpack.c.h.b16 %v394
    %v728 = vunpack.c.l.b16 %v395
    %v729 = vunpack.c.h.b16 %v395
    %v730 = vunpack.c.l.b16 %v396
    %v731 = vunpack.c.h.b16 %v396
    %v732 = vunpack.c.l.b16 %v397
    %v733 = vunpack.c.h.b16 %v397
    %v734 = vunpack.c.l.b16 %v398
    %v735 = vunpack.c.h.b16 %v398
    %v736 = vunpack.c.l.b16 %v399
    %v737 = vunpack.c.h.b16 %v399
    %v738 = vunpack.c.l.b16 %v400
    %v739 = vunpack.c.h.b16 %v400
    %v740 = vunpack.c.l.b16 %v401
    %v741 = vunpack.c.h.b16 %v401
    %v742 = vunpack.c.l.b16 %v402
    %v743 = vunpack.c.h.b16 %v402
    %v744 = vunpack.c.l.b16 %v403
    %v745 = vunpack.c.h.b16 %v403
    %v746 = vunpack.c.l.b16 %v404
    %v747 = vunpack.c.h.b16 %v404
    %v748 = vunpack.c.l.b16 %v405
    %v749 = vunpack.c.h.b16 %v405
    %v750 = vunpack.c.l.b16 %v406
    %v751 = vunpack.c.h.b16 %v406
    %v752 = vunpack.c.l.b16 %v407
    %v753 = vunpack.c.h.b16 %v407
    %v754 = vunpack.c.l.b16 %v408
    %v755 = vunpack.c.h.b16 %v408
    %v756 = vunpack.c.l.b16 %v409
    %v757 = vunpack.c.h.b16 %v409
    %v758 = vunpack.c.l.b16 %v410
    %v759 = vunpack.c.h.b16 %v410
    %v760 = vunpack.c.l.b16 %v411
    %v761 = vunpack.c.h.b16 %v411
    %v762 = vunpack.c.l.b16 %v412
    %v763 = vunpack.c.h.b16 %v412
    %v764 = vunpack.c.l.b16 %v413
    %v765 = vunpack.c.h.b16 %v413
    %v766 = vpack.c.b16 %v704, %v702
    %v767 = vpack.c.b16 %v705, %v703
    %v768 = vpack.c.b16 %v708, %v706
    %v769 = vpack.c.b16 %v709, %v707
    %v770 = vpack.c.b16 %v712, %v710
    %v771 = vpack.c.b16 %v713, %v711
    %v772 = vpack.c.b16 %v716, %v714
    %v773 = vpack.c.b16 %v717, %v715
    %v774 = vpack.c.b16 %v720, %v718
    %v775 = vpack.c.b16 %v721, %v719
    %v776 = vpack.c.b16 %v724, %v722
    %v777 = vpack.c.b16 %v725, %v723
    %v778 = vpack.c.b16 %v728, %v726
    %v779 = vpack.c.b16 %v729, %v727
    %v780 = vpack.c.b16 %v732, %v730
    %v781 = vpack.c.b16 %v733, %v731
    %v782 = vpack.c.b16 %v736, %v734
    %v783 = vpack.c.b16 %v737, %v735
    %v784 = vpack.c.b16 %v740, %v738
    %v785 = vpack.c.b16 %v741, %v739
    %v786 = vpack.c.b16 %v744, %v742
    %v787 = vpack.c.b16 %v745, %v743
    %v788 = vpack.c.b16 %v748, %v746
    %v789 = vpack.c.b16 %v749, %v747
    %v790 = vpack.c.b16 %v752, %v750
    %v791 = vpack.c.b16 %v753, %v751
    %v792 = vpack.c.b16 %v756, %v754
    %v793 = vpack.c.b16 %v757, %v755
    %v794 = vpack.c.b16 %v760, %v758
    %v795 = vpack.c.b16 %v761, %v759
    %v796 = vpack.c.b16 %v764, %v762
    %v797 = vpack.c.b16 %v765, %v763
    %830 = vmatprep.subr.bf16.mxu0 %v767
    %831 = vmatpush1.bf16.msra.mxu0 %v766
    %832 = vmatprep.subr.bf16.mxu0 %v769
    %833 = vmatpush1.bf16.msra.mxu0 %v768
    %834 = vmatprep.subr.bf16.mxu0 %v771
    %835 = vmatpush1.bf16.msra.mxu0 %v770
    %836 = vmatprep.subr.bf16.mxu0 %v773
    %837 = vmatpush1.bf16.msra.mxu0 %v772
    %838 = vmatprep.subr.bf16.mxu0 %v775
    %839 = vmatpush1.bf16.msra.mxu0 %v774
    %840 = vmatprep.subr.bf16.mxu0 %v777
    %841 = vmatpush1.bf16.msra.mxu0 %v776
    %842 = vmatprep.subr.bf16.mxu0 %v779
    %843 = vmatpush1.bf16.msra.mxu0 %v778
    %844 = vmatprep.subr.bf16.mxu0 %v781
    %845 = vmatpush1.bf16.msra.mxu0 %v780
    %846 = vmatprep.subr.bf16.mxu0 %v783
    %847 = vmatpush1.bf16.msra.mxu0 %v782
    %848 = vmatprep.subr.bf16.mxu0 %v785
    %849 = vmatpush1.bf16.msra.mxu0 %v784
    %850 = vmatprep.subr.bf16.mxu0 %v787
    %851 = vmatpush1.bf16.msra.mxu0 %v786
    %852 = vmatprep.subr.bf16.mxu0 %v789
    %853 = vmatpush1.bf16.msra.mxu0 %v788
    %854 = vmatprep.subr.bf16.mxu0 %v791
    %855 = vmatpush1.bf16.msra.mxu0 %v790
    %856 = vmatprep.subr.bf16.mxu0 %v793
    %857 = vmatpush1.bf16.msra.mxu0 %v792
    %858 = vmatprep.subr.bf16.mxu0 %v795
    %859 = vmatpush1.bf16.msra.mxu0 %v794
    %860 = vmatprep.subr.bf16.mxu0 %v797
    %861 = vmatpush1.bf16.msra.mxu0 %v796
    %862 = vmatprep.mubr.bf16.mxu0 %v381
    %863 = vmatmul.mubr.bf16.gmra.mrb[0].mxu0 %v380
    %v864 = vpop.f32.mrb[0].mxu0
    %v865 = vadd.f32 %v664, %v864
    %v866 = vpop.f32.mrb[0].mxu0
    %v867 = vadd.f32 %v666, %v866
    %v868 = vpop.f32.mrb[0].mxu0
    %v869 = vpop.f32.mrb[0].mxu0
    %870 = vdwg.mxu0
    %v871 = vmax.f32 %v865, 0.0
    %v872 = vmax.f32 %v867, 0.0
    %v873 = vpack.c.bf16 %v871, %v871
    %v874 = vpack.c.bf16 %v872, %v872
    %s875 = scalar_lea.vmem [#allocation2], 256
    %v876 = vld [vmem:[%s875] sm:$0xff]
    %v877 = vld [vmem:[%s875 + $0x8] sm:$0xff]
    %v878 = vld [vmem:[%s875 + $0x10] sm:$0xff]
    %v879 = vld [vmem:[%s875 + $0x18] sm:$0xff]
    %v880 = vld [vmem:[%s875 + $0x20] sm:$0xff]
    %v881 = vld [vmem:[%s875 + $0x28] sm:$0xff]
    %v882 = vld [vmem:[%s875 + $0x30] sm:$0xff]
    %v883 = vld [vmem:[%s875 + $0x38] sm:$0xff]
    %v884 = vld [vmem:[%s875 + $0x40] sm:$0xff]
    %v885 = vld [vmem:[%s875 + $0x48] sm:$0xff]
    %v886 = vld [vmem:[%s875 + $0x50] sm:$0xff]
    %v887 = vld [vmem:[%s875 + $0x58] sm:$0xff]
    %v888 = vld [vmem:[%s875 + $0x60] sm:$0xff]
    %v889 = vld [vmem:[%s875 + $0x68] sm:$0xff]
    %v890 = vld [vmem:[%s875 + $0x70] sm:$0xff]
    %v891 = vld [vmem:[%s875 + $0x78] sm:$0xff]
    %v892 = vld [vmem:[%s875 + $0x80] sm:$0xff]
    %v893 = vld [vmem:[%s875 + $0x88] sm:$0xff]
    %v894 = vld [vmem:[%s875 + $0x90] sm:$0xff]
    %v895 = vld [vmem:[%s875 + $0x98] sm:$0xff]
    %v896 = vld [vmem:[%s875 + $0xa0] sm:$0xff]
    %v897 = vld [vmem:[%s875 + $0xa8] sm:$0xff]
    %v898 = vld [vmem:[%s875 + $0xb0] sm:$0xff]
    %v899 = vld [vmem:[%s875 + $0xb8] sm:$0xff]
    %v900 = vld [vmem:[%s875 + $0xc0] sm:$0xff]
    %v901 = vld [vmem:[%s875 + $0xc8] sm:$0xff]
    %v902 = vld [vmem:[%s875 + $0xd0] sm:$0xff]
    %v903 = vld [vmem:[%s875 + $0xd8] sm:$0xff]
    %v904 = vld [vmem:[%s875 + $0xe0] sm:$0xff]
    %v905 = vld [vmem:[%s875 + $0xe8] sm:$0xff]
    %v906 = vld [vmem:[%s875 + $0xf0] sm:$0xff]
    %v907 = vld [vmem:[%s875 + $0xf8] sm:$0xff]
    %s908 = scalar_lea.vmem %s0, 8
    %v909 = vld [vmem:[%s908] sm:$0xff]
    %s910 = scalar_lea.vmem [#allocation4], 512
    %v911 = vld [vmem:[%s910] sm:$0xff]
    %v912 = vld [vmem:[%s910 + $0x8] sm:$0xff]
    %v913 = vld [vmem:[%s910 + $0x10] sm:$0xff]
    %v914 = vld [vmem:[%s910 + $0x18] sm:$0xff]
    %v915 = vld [vmem:[%s910 + $0x20] sm:$0xff]
    %v916 = vld [vmem:[%s910 + $0x28] sm:$0xff]
    %v917 = vld [vmem:[%s910 + $0x30] sm:$0xff]
    %v918 = vld [vmem:[%s910 + $0x38] sm:$0xff]
    %v919 = vld [vmem:[%s910 + $0x40] sm:$0xff]
    %v920 = vld [vmem:[%s910 + $0x48] sm:$0xff]
    %v921 = vld [vmem:[%s910 + $0x50] sm:$0xff]
    %v922 = vld [vmem:[%s910 + $0x58] sm:$0xff]
    %v923 = vld [vmem:[%s910 + $0x60] sm:$0xff]
    %v924 = vld [vmem:[%s910 + $0x68] sm:$0xff]
    %v925 = vld [vmem:[%s910 + $0x70] sm:$0xff]
    %v926 = vld [vmem:[%s910 + $0x78] sm:$0xff]
    %v927 = vld [vmem:[%s910 + $0x80] sm:$0xff]
    %v928 = vld [vmem:[%s910 + $0x88] sm:$0xff]
    %v929 = vld [vmem:[%s910 + $0x90] sm:$0xff]
    %v930 = vld [vmem:[%s910 + $0x98] sm:$0xff]
    %v931 = vld [vmem:[%s910 + $0xa0] sm:$0xff]
    %v932 = vld [vmem:[%s910 + $0xa8] sm:$0xff]
    %v933 = vld [vmem:[%s910 + $0xb0] sm:$0xff]
    %v934 = vld [vmem:[%s910 + $0xb8] sm:$0xff]
    %v935 = vld [vmem:[%s910 + $0xc0] sm:$0xff]
    %v936 = vld [vmem:[%s910 + $0xc8] sm:$0xff]
    %v937 = vld [vmem:[%s910 + $0xd0] sm:$0xff]
    %v938 = vld [vmem:[%s910 + $0xd8] sm:$0xff]
    %v939 = vld [vmem:[%s910 + $0xe0] sm:$0xff]
    %v940 = vld [vmem:[%s910 + $0xe8] sm:$0xff]
    %v941 = vld [vmem:[%s910 + $0xf0] sm:$0xff]
    %v942 = vld [vmem:[%s910 + $0xf8] sm:$0xff]
    %s943 = scalar_lea.vmem %s3, 4
    %v944 = vld [vmem:[%s943] sm:$0x3]
    %v946 = vlaneseq
    %v947 = vshrl.u32 %v946, 7
    %v948 = vsub.s32 0, %v947
    %v949 = vrot.slane %v944, %v948
    %v950 = vlaneseq
    %v951 = vshrl.u32 %v950, 7
    %v952 = vsub.s32 1, %v951
    %v953 = vrot.slane %v944, %v952
    %v957 = vunpack.c.l.b16 %v909
    %v958 = vunpack.c.h.b16 %v909
    %v959 = vpack.c.b16 %v957, %v957
    %v960 = vpack.c.b16 %v958, %v958
    %v995 = vunpack.c.l.b16 %v911
    %v996 = vunpack.c.h.b16 %v911
    %v997 = vunpack.c.l.b16 %v912
    %v998 = vunpack.c.h.b16 %v912
    %v999 = vunpack.c.l.b16 %v913
    %v1000 = vunpack.c.h.b16 %v913
    %v1001 = vunpack.c.l.b16 %v914
    %v1002 = vunpack.c.h.b16 %v914
    %v1003 = vunpack.c.l.b16 %v915
    %v1004 = vunpack.c.h.b16 %v915
    %v1005 = vunpack.c.l.b16 %v916
    %v1006 = vunpack.c.h.b16 %v916
    %v1007 = vunpack.c.l.b16 %v917
    %v1008 = vunpack.c.h.b16 %v917
    %v1009 = vunpack.c.l.b16 %v918
    %v1010 = vunpack.c.h.b16 %v918
    %v1011 = vunpack.c.l.b16 %v919
    %v1012 = vunpack.c.h.b16 %v919
    %v1013 = vunpack.c.l.b16 %v920
    %v1014 = vunpack.c.h.b16 %v920
    %v1015 = vunpack.c.l.b16 %v921
    %v1016 = vunpack.c.h.b16 %v921
    %v1017 = vunpack.c.l.b16 %v922
    %v1018 = vunpack.c.h.b16 %v922
    %v1019 = vunpack.c.l.b16 %v923
    %v1020 = vunpack.c.h.b16 %v923
    %v1021 = vunpack.c.l.b16 %v924
    %v1022 = vunpack.c.h.b16 %v924
    %v1023 = vunpack.c.l.b16 %v925
    %v1024 = vunpack.c.h.b16 %v925
    %v1025 = vunpack.c.l.b16 %v926
    %v1026 = vunpack.c.h.b16 %v926
    %v1027 = vunpack.c.l.b16 %v927
    %v1028 = vunpack.c.h.b16 %v927
    %v1029 = vunpack.c.l.b16 %v928
    %v1030 = vunpack.c.h.b16 %v928
    %v1031 = vunpack.c.l.b16 %v929
    %v1032 = vunpack.c.h.b16 %v929
    %v1033 = vunpack.c.l.b16 %v930
    %v1034 = vunpack.c.h.b16 %v930
    %v1035 = vunpack.c.l.b16 %v931
    %v1036 = vunpack.c.h.b16 %v931
    %v1037 = vunpack.c.l.b16 %v932
    %v1038 = vunpack.c.h.b16 %v932
    %v1039 = vunpack.c.l.b16 %v933
    %v1040 = vunpack.c.h.b16 %v933
    %v1041 = vunpack.c.l.b16 %v934
    %v1042 = vunpack.c.h.b16 %v934
    %v1043 = vunpack.c.l.b16 %v935
    %v1044 = vunpack.c.h.b16 %v935
    %v1045 = vunpack.c.l.b16 %v936
    %v1046 = vunpack.c.h.b16 %v936
    %v1047 = vunpack.c.l.b16 %v937
    %v1048 = vunpack.c.h.b16 %v937
    %v1049 = vunpack.c.l.b16 %v938
    %v1050 = vunpack.c.h.b16 %v938
    %v1051 = vunpack.c.l.b16 %v939
    %v1052 = vunpack.c.h.b16 %v939
    %v1053 = vunpack.c.l.b16 %v940
    %v1054 = vunpack.c.h.b16 %v940
    %v1055 = vunpack.c.l.b16 %v941
    %v1056 = vunpack.c.h.b16 %v941
    %v1057 = vunpack.c.l.b16 %v942
    %v1058 = vunpack.c.h.b16 %v942
    %v1059 = vpack.c.b16 %v997, %v995
    %v1060 = vpack.c.b16 %v998, %v996
    %v1061 = vpack.c.b16 %v1001, %v999
    %v1062 = vpack.c.b16 %v1002, %v1000
    %v1063 = vpack.c.b16 %v1005, %v1003
    %v1064 = vpack.c.b16 %v1006, %v1004
    %v1065 = vpack.c.b16 %v1009, %v1007
    %v1066 = vpack.c.b16 %v1010, %v1008
    %v1067 = vpack.c.b16 %v1013, %v1011
    %v1068 = vpack.c.b16 %v1014, %v1012
    %v1069 = vpack.c.b16 %v1017, %v1015
    %v1070 = vpack.c.b16 %v1018, %v1016
    %v1071 = vpack.c.b16 %v1021, %v1019
    %v1072 = vpack.c.b16 %v1022, %v1020
    %v1073 = vpack.c.b16 %v1025, %v1023
    %v1074 = vpack.c.b16 %v1026, %v1024
    %v1075 = vpack.c.b16 %v1029, %v1027
    %v1076 = vpack.c.b16 %v1030, %v1028
    %v1077 = vpack.c.b16 %v1033, %v1031
    %v1078 = vpack.c.b16 %v1034, %v1032
    %v1079 = vpack.c.b16 %v1037, %v1035
    %v1080 = vpack.c.b16 %v1038, %v1036
    %v1081 = vpack.c.b16 %v1041, %v1039
    %v1082 = vpack.c.b16 %v1042, %v1040
    %v1083 = vpack.c.b16 %v1045, %v1043
    %v1084 = vpack.c.b16 %v1046, %v1044
    %v1085 = vpack.c.b16 %v1049, %v1047
    %v1086 = vpack.c.b16 %v1050, %v1048
    %v1087 = vpack.c.b16 %v1053, %v1051
    %v1088 = vpack.c.b16 %v1054, %v1052
    %v1089 = vpack.c.b16 %v1057, %v1055
    %v1090 = vpack.c.b16 %v1058, %v1056
    %1123 = vmatprep.subr.bf16.mxu0 %v1060
    %1124 = vmatpush1.bf16.msra.mxu0 %v1059
    %1125 = vmatprep.subr.bf16.mxu0 %v1062
    %1126 = vmatpush1.bf16.msra.mxu0 %v1061
    %1127 = vmatprep.subr.bf16.mxu0 %v1064
    %1128 = vmatpush1.bf16.msra.mxu0 %v1063
    %1129 = vmatprep.subr.bf16.mxu0 %v1066
    %1130 = vmatpush1.bf16.msra.mxu0 %v1065
    %1131 = vmatprep.subr.bf16.mxu0 %v1068
    %1132 = vmatpush1.bf16.msra.mxu0 %v1067
    %1133 = vmatprep.subr.bf16.mxu0 %v1070
    %1134 = vmatpush1.bf16.msra.mxu0 %v1069
    %1135 = vmatprep.subr.bf16.mxu0 %v1072
    %1136 = vmatpush1.bf16.msra.mxu0 %v1071
    %1137 = vmatprep.subr.bf16.mxu0 %v1074
    %1138 = vmatpush1.bf16.msra.mxu0 %v1073
    %1139 = vmatprep.subr.bf16.mxu0 %v1076
    %1140 = vmatpush1.bf16.msra.mxu0 %v1075
    %1141 = vmatprep.subr.bf16.mxu0 %v1078
    %1142 = vmatpush1.bf16.msra.mxu0 %v1077
    %1143 = vmatprep.subr.bf16.mxu0 %v1080
    %1144 = vmatpush1.bf16.msra.mxu0 %v1079
    %1145 = vmatprep.subr.bf16.mxu0 %v1082
    %1146 = vmatpush1.bf16.msra.mxu0 %v1081
    %1147 = vmatprep.subr.bf16.mxu0 %v1084
    %1148 = vmatpush1.bf16.msra.mxu0 %v1083
    %1149 = vmatprep.subr.bf16.mxu0 %v1086
    %1150 = vmatpush1.bf16.msra.mxu0 %v1085
    %1151 = vmatprep.subr.bf16.mxu0 %v1088
    %1152 = vmatpush1.bf16.msra.mxu0 %v1087
    %1153 = vmatprep.subr.bf16.mxu0 %v1090
    %1154 = vmatpush1.bf16.msra.mxu0 %v1089
    %1155 = vmatprep.mubr.bf16.mxu0 %v960
    %1156 = vmatmul.mubr.bf16.gmra.mrb[0].mxu0 %v959
    %v1157 = vpop.f32.mrb[0].mxu0
    %v1158 = vadd.f32 %v949, %v1157
    %v1159 = vpop.f32.mrb[0].mxu0
    %v1160 = vadd.f32 %v953, %v1159
    %v1161 = vpop.f32.mrb[0].mxu0
    %v1162 = vpop.f32.mrb[0].mxu0
    %1163 = vdwg.mxu0
    %v1196 = vunpack.c.l.b16 %v876
    %v1197 = vunpack.c.h.b16 %v876
    %v1198 = vunpack.c.l.b16 %v877
    %v1199 = vunpack.c.h.b16 %v877
    %v1200 = vunpack.c.l.b16 %v878
    %v1201 = vunpack.c.h.b16 %v878
    %v1202 = vunpack.c.l.b16 %v879
    %v1203 = vunpack.c.h.b16 %v879
    %v1204 = vunpack.c.l.b16 %v880
    %v1205 = vunpack.c.h.b16 %v880
    %v1206 = vunpack.c.l.b16 %v881
    %v1207 = vunpack.c.h.b16 %v881
    %v1208 = vunpack.c.l.b16 %v882
    %v1209 = vunpack.c.h.b16 %v882
    %v1210 = vunpack.c.l.b16 %v883
    %v1211 = vunpack.c.h.b16 %v883
    %v1212 = vunpack.c.l.b16 %v884
    %v1213 = vunpack.c.h.b16 %v884
    %v1214 = vunpack.c.l.b16 %v885
    %v1215 = vunpack.c.h.b16 %v885
    %v1216 = vunpack.c.l.b16 %v886
    %v1217 = vunpack.c.h.b16 %v886
    %v1218 = vunpack.c.l.b16 %v887
    %v1219 = vunpack.c.h.b16 %v887
    %v1220 = vunpack.c.l.b16 %v888
    %v1221 = vunpack.c.h.b16 %v888
    %v1222 = vunpack.c.l.b16 %v889
    %v1223 = vunpack.c.h.b16 %v889
    %v1224 = vunpack.c.l.b16 %v890
    %v1225 = vunpack.c.h.b16 %v890
    %v1226 = vunpack.c.l.b16 %v891
    %v1227 = vunpack.c.h.b16 %v891
    %v1228 = vunpack.c.l.b16 %v892
    %v1229 = vunpack.c.h.b16 %v892
    %v1230 = vunpack.c.l.b16 %v893
    %v1231 = vunpack.c.h.b16 %v893
    %v1232 = vunpack.c.l.b16 %v894
    %v1233 = vunpack.c.h.b16 %v894
    %v1234 = vunpack.c.l.b16 %v895
    %v1235 = vunpack.c.h.b16 %v895
    %v1236 = vunpack.c.l.b16 %v896
    %v1237 = vunpack.c.h.b16 %v896
    %v1238 = vunpack.c.l.b16 %v897
    %v1239 = vunpack.c.h.b16 %v897
    %v1240 = vunpack.c.l.b16 %v898
    %v1241 = vunpack.c.h.b16 %v898
    %v1242 = vunpack.c.l.b16 %v899
    %v1243 = vunpack.c.h.b16 %v899
    %v1244 = vunpack.c.l.b16 %v900
    %v1245 = vunpack.c.h.b16 %v900
    %v1246 = vunpack.c.l.b16 %v901
    %v1247 = vunpack.c.h.b16 %v901
    %v1248 = vunpack.c.l.b16 %v902
    %v1249 = vunpack.c.h.b16 %v902
    %v1250 = vunpack.c.l.b16 %v903
    %v1251 = vunpack.c.h.b16 %v903
    %v1252 = vunpack.c.l.b16 %v904
    %v1253 = vunpack.c.h.b16 %v904
    %v1254 = vunpack.c.l.b16 %v905
    %v1255 = vunpack.c.h.b16 %v905
    %v1256 = vunpack.c.l.b16 %v906
    %v1257 = vunpack.c.h.b16 %v906
    %v1258 = vunpack.c.l.b16 %v907
    %v1259 = vunpack.c.h.b16 %v907
    %v1260 = vpack.c.b16 %v1198, %v1196
    %v1261 = vpack.c.b16 %v1199, %v1197
    %v1262 = vpack.c.b16 %v1202, %v1200
    %v1263 = vpack.c.b16 %v1203, %v1201
    %v1264 = vpack.c.b16 %v1206, %v1204
    %v1265 = vpack.c.b16 %v1207, %v1205
    %v1266 = vpack.c.b16 %v1210, %v1208
    %v1267 = vpack.c.b16 %v1211, %v1209
    %v1268 = vpack.c.b16 %v1214, %v1212
    %v1269 = vpack.c.b16 %v1215, %v1213
    %v1270 = vpack.c.b16 %v1218, %v1216
    %v1271 = vpack.c.b16 %v1219, %v1217
    %v1272 = vpack.c.b16 %v1222, %v1220
    %v1273 = vpack.c.b16 %v1223, %v1221
    %v1274 = vpack.c.b16 %v1226, %v1224
    %v1275 = vpack.c.b16 %v1227, %v1225
    %v1276 = vpack.c.b16 %v1230, %v1228
    %v1277 = vpack.c.b16 %v1231, %v1229
    %v1278 = vpack.c.b16 %v1234, %v1232
    %v1279 = vpack.c.b16 %v1235, %v1233
    %v1280 = vpack.c.b16 %v1238, %v1236
    %v1281 = vpack.c.b16 %v1239, %v1237
    %v1282 = vpack.c.b16 %v1242, %v1240
    %v1283 = vpack.c.b16 %v1243, %v1241
    %v1284 = vpack.c.b16 %v1246, %v1244
    %v1285 = vpack.c.b16 %v1247, %v1245
    %v1286 = vpack.c.b16 %v1250, %v1248
    %v1287 = vpack.c.b16 %v1251, %v1249
    %v1288 = vpack.c.b16 %v1254, %v1252
    %v1289 = vpack.c.b16 %v1255, %v1253
    %v1290 = vpack.c.b16 %v1258, %v1256
    %v1291 = vpack.c.b16 %v1259, %v1257
    %1324 = vmatprep.subr.bf16.mxu0 %v1261
    %1325 = vmatpush1.bf16.msra.mxu0 %v1260
    %1326 = vmatprep.subr.bf16.mxu0 %v1263
    %1327 = vmatpush1.bf16.msra.mxu0 %v1262
    %1328 = vmatprep.subr.bf16.mxu0 %v1265
    %1329 = vmatpush1.bf16.msra.mxu0 %v1264
    %1330 = vmatprep.subr.bf16.mxu0 %v1267
    %1331 = vmatpush1.bf16.msra.mxu0 %v1266
    %1332 = vmatprep.subr.bf16.mxu0 %v1269
    %1333 = vmatpush1.bf16.msra.mxu0 %v1268
    %1334 = vmatprep.subr.bf16.mxu0 %v1271
    %1335 = vmatpush1.bf16.msra.mxu0 %v1270
    %1336 = vmatprep.subr.bf16.mxu0 %v1273
    %1337 = vmatpush1.bf16.msra.mxu0 %v1272
    %1338 = vmatprep.subr.bf16.mxu0 %v1275
    %1339 = vmatpush1.bf16.msra.mxu0 %v1274
    %1340 = vmatprep.subr.bf16.mxu0 %v1277
    %1341 = vmatpush1.bf16.msra.mxu0 %v1276
    %1342 = vmatprep.subr.bf16.mxu0 %v1279
    %1343 = vmatpush1.bf16.msra.mxu0 %v1278
    %1344 = vmatprep.subr.bf16.mxu0 %v1281
    %1345 = vmatpush1.bf16.msra.mxu0 %v1280
    %1346 = vmatprep.subr.bf16.mxu0 %v1283
    %1347 = vmatpush1.bf16.msra.mxu0 %v1282
    %1348 = vmatprep.subr.bf16.mxu0 %v1285
    %1349 = vmatpush1.bf16.msra.mxu0 %v1284
    %1350 = vmatprep.subr.bf16.mxu0 %v1287
    %1351 = vmatpush1.bf16.msra.mxu0 %v1286
    %1352 = vmatprep.subr.bf16.mxu0 %v1289
    %1353 = vmatpush1.bf16.msra.mxu0 %v1288
    %1354 = vmatprep.subr.bf16.mxu0 %v1291
    %1355 = vmatpush1.bf16.msra.mxu0 %v1290
    %1356 = vmatprep.mubr.bf16.mxu0 %v874
    %1357 = vmatmul.mubr.bf16.gmra.mrb[0].mxu0 %v873
    %v1358 = vpop.f32.mrb[0].mxu0
    %v1359 = vadd.f32 %v1158, %v1358
    %v1360 = vpop.f32.mrb[0].mxu0
    %v1361 = vadd.f32 %v1160, %v1360
    %v1362 = vpop.f32.mrb[0].mxu0
    %v1363 = vpop.f32.mrb[0].mxu0
    %1364 = vdwg.mxu0
    %v1365 = vmax.f32 %v1359, 0.0
    %v1366 = vmax.f32 %v1361, 0.0
    %v1367 = vpack.c.bf16 %v1365, %v1365
    %v1368 = vpack.c.bf16 %v1366, %v1366
    %s1369 = scalar_lea.vmem [#allocation2], 512
    %v1370 = vld [vmem:[%s1369] sm:$0xff]
    %v1371 = vld [vmem:[%s1369 + $0x8] sm:$0xff]
    %v1372 = vld [vmem:[%s1369 + $0x10] sm:$0xff]
    %v1373 = vld [vmem:[%s1369 + $0x18] sm:$0xff]
    %v1374 = vld [vmem:[%s1369 + $0x20] sm:$0xff]
    %v1375 = vld [vmem:[%s1369 + $0x28] sm:$0xff]
    %v1376 = vld [vmem:[%s1369 + $0x30] sm:$0xff]
    %v1377 = vld [vmem:[%s1369 + $0x38] sm:$0xff]
    %v1378 = vld [vmem:[%s1369 + $0x40] sm:$0xff]
    %v1379 = vld [vmem:[%s1369 + $0x48] sm:$0xff]
    %v1380 = vld [vmem:[%s1369 + $0x50] sm:$0xff]
    %v1381 = vld [vmem:[%s1369 + $0x58] sm:$0xff]
    %v1382 = vld [vmem:[%s1369 + $0x60] sm:$0xff]
    %v1383 = vld [vmem:[%s1369 + $0x68] sm:$0xff]
    %v1384 = vld [vmem:[%s1369 + $0x70] sm:$0xff]
    %v1385 = vld [vmem:[%s1369 + $0x78] sm:$0xff]
    %v1386 = vld [vmem:[%s1369 + $0x80] sm:$0xff]
    %v1387 = vld [vmem:[%s1369 + $0x88] sm:$0xff]
    %v1388 = vld [vmem:[%s1369 + $0x90] sm:$0xff]
    %v1389 = vld [vmem:[%s1369 + $0x98] sm:$0xff]
    %v1390 = vld [vmem:[%s1369 + $0xa0] sm:$0xff]
    %v1391 = vld [vmem:[%s1369 + $0xa8] sm:$0xff]
    %v1392 = vld [vmem:[%s1369 + $0xb0] sm:$0xff]
    %v1393 = vld [vmem:[%s1369 + $0xb8] sm:$0xff]
    %v1394 = vld [vmem:[%s1369 + $0xc0] sm:$0xff]
    %v1395 = vld [vmem:[%s1369 + $0xc8] sm:$0xff]
    %v1396 = vld [vmem:[%s1369 + $0xd0] sm:$0xff]
    %v1397 = vld [vmem:[%s1369 + $0xd8] sm:$0xff]
    %v1398 = vld [vmem:[%s1369 + $0xe0] sm:$0xff]
    %v1399 = vld [vmem:[%s1369 + $0xe8] sm:$0xff]
    %v1400 = vld [vmem:[%s1369 + $0xf0] sm:$0xff]
    %v1401 = vld [vmem:[%s1369 + $0xf8] sm:$0xff]
    %v1402 = vld [vmem:[%s0] sm:$0xff]
    %s1403 = scalar_lea.vmem [#allocation4], 768
    %v1404 = vld [vmem:[%s1403] sm:$0xff]
    %v1405 = vld [vmem:[%s1403 + $0x8] sm:$0xff]
    %v1406 = vld [vmem:[%s1403 + $0x10] sm:$0xff]
    %v1407 = vld [vmem:[%s1403 + $0x18] sm:$0xff]
    %v1408 = vld [vmem:[%s1403 + $0x20] sm:$0xff]
    %v1409 = vld [vmem:[%s1403 + $0x28] sm:$0xff]
    %v1410 = vld [vmem:[%s1403 + $0x30] sm:$0xff]
    %v1411 = vld [vmem:[%s1403 + $0x38] sm:$0xff]
    %v1412 = vld [vmem:[%s1403 + $0x40] sm:$0xff]
    %v1413 = vld [vmem:[%s1403 + $0x48] sm:$0xff]
    %v1414 = vld [vmem:[%s1403 + $0x50] sm:$0xff]
    %v1415 = vld [vmem:[%s1403 + $0x58] sm:$0xff]
    %v1416 = vld [vmem:[%s1403 + $0x60] sm:$0xff]
    %v1417 = vld [vmem:[%s1403 + $0x68] sm:$0xff]
    %v1418 = vld [vmem:[%s1403 + $0x70] sm:$0xff]
    %v1419 = vld [vmem:[%s1403 + $0x78] sm:$0xff]
    %v1420 = vld [vmem:[%s1403 + $0x80] sm:$0xff]
    %v1421 = vld [vmem:[%s1403 + $0x88] sm:$0xff]
    %v1422 = vld [vmem:[%s1403 + $0x90] sm:$0xff]
    %v1423 = vld [vmem:[%s1403 + $0x98] sm:$0xff]
    %v1424 = vld [vmem:[%s1403 + $0xa0] sm:$0xff]
    %v1425 = vld [vmem:[%s1403 + $0xa8] sm:$0xff]
    %v1426 = vld [vmem:[%s1403 + $0xb0] sm:$0xff]
    %v1427 = vld [vmem:[%s1403 + $0xb8] sm:$0xff]
    %v1428 = vld [vmem:[%s1403 + $0xc0] sm:$0xff]
    %v1429 = vld [vmem:[%s1403 + $0xc8] sm:$0xff]
    %v1430 = vld [vmem:[%s1403 + $0xd0] sm:$0xff]
    %v1431 = vld [vmem:[%s1403 + $0xd8] sm:$0xff]
    %v1432 = vld [vmem:[%s1403 + $0xe0] sm:$0xff]
    %v1433 = vld [vmem:[%s1403 + $0xe8] sm:$0xff]
    %v1434 = vld [vmem:[%s1403 + $0xf0] sm:$0xff]
    %v1435 = vld [vmem:[%s1403 + $0xf8] sm:$0xff]
    %s1436 = scalar_lea.vmem %s3, 6
    %v1437 = vld [vmem:[%s1436] sm:$0x3]
    %v1439 = vlaneseq
    %v1440 = vshrl.u32 %v1439, 7
    %v1441 = vsub.s32 0, %v1440
    %v1442 = vrot.slane %v1437, %v1441
    %v1443 = vlaneseq
    %v1444 = vshrl.u32 %v1443, 7
    %v1445 = vsub.s32 1, %v1444
    %v1446 = vrot.slane %v1437, %v1445
    %v1450 = vunpack.c.l.b16 %v1402
    %v1451 = vunpack.c.h.b16 %v1402
    %v1452 = vpack.c.b16 %v1450, %v1450
    %v1453 = vpack.c.b16 %v1451, %v1451
    %v1488 = vunpack.c.l.b16 %v1404
    %v1489 = vunpack.c.h.b16 %v1404
    %v1490 = vunpack.c.l.b16 %v1405
    %v1491 = vunpack.c.h.b16 %v1405
    %v1492 = vunpack.c.l.b16 %v1406
    %v1493 = vunpack.c.h.b16 %v1406
    %v1494 = vunpack.c.l.b16 %v1407
    %v1495 = vunpack.c.h.b16 %v1407
    %v1496 = vunpack.c.l.b16 %v1408
    %v1497 = vunpack.c.h.b16 %v1408
    %v1498 = vunpack.c.l.b16 %v1409
    %v1499 = vunpack.c.h.b16 %v1409
    %v1500 = vunpack.c.l.b16 %v1410
    %v1501 = vunpack.c.h.b16 %v1410
    %v1502 = vunpack.c.l.b16 %v1411
    %v1503 = vunpack.c.h.b16 %v1411
    %v1504 = vunpack.c.l.b16 %v1412
    %v1505 = vunpack.c.h.b16 %v1412
    %v1506 = vunpack.c.l.b16 %v1413
    %v1507 = vunpack.c.h.b16 %v1413
    %v1508 = vunpack.c.l.b16 %v1414
    %v1509 = vunpack.c.h.b16 %v1414
    %v1510 = vunpack.c.l.b16 %v1415
    %v1511 = vunpack.c.h.b16 %v1415
    %v1512 = vunpack.c.l.b16 %v1416
    %v1513 = vunpack.c.h.b16 %v1416
    %v1514 = vunpack.c.l.b16 %v1417
    %v1515 = vunpack.c.h.b16 %v1417
    %v1516 = vunpack.c.l.b16 %v1418
    %v1517 = vunpack.c.h.b16 %v1418
    %v1518 = vunpack.c.l.b16 %v1419
    %v1519 = vunpack.c.h.b16 %v1419
    %v1520 = vunpack.c.l.b16 %v1420
    %v1521 = vunpack.c.h.b16 %v1420
    %v1522 = vunpack.c.l.b16 %v1421
    %v1523 = vunpack.c.h.b16 %v1421
    %v1524 = vunpack.c.l.b16 %v1422
    %v1525 = vunpack.c.h.b16 %v1422
    %v1526 = vunpack.c.l.b16 %v1423
    %v1527 = vunpack.c.h.b16 %v1423
    %v1528 = vunpack.c.l.b16 %v1424
    %v1529 = vunpack.c.h.b16 %v1424
    %v1530 = vunpack.c.l.b16 %v1425
    %v1531 = vunpack.c.h.b16 %v1425
    %v1532 = vunpack.c.l.b16 %v1426
    %v1533 = vunpack.c.h.b16 %v1426
    %v1534 = vunpack.c.l.b16 %v1427
    %v1535 = vunpack.c.h.b16 %v1427
    %v1536 = vunpack.c.l.b16 %v1428
    %v1537 = vunpack.c.h.b16 %v1428
    %v1538 = vunpack.c.l.b16 %v1429
    %v1539 = vunpack.c.h.b16 %v1429
    %v1540 = vunpack.c.l.b16 %v1430
    %v1541 = vunpack.c.h.b16 %v1430
    %v1542 = vunpack.c.l.b16 %v1431
    %v1543 = vunpack.c.h.b16 %v1431
    %v1544 = vunpack.c.l.b16 %v1432
    %v1545 = vunpack.c.h.b16 %v1432
    %v1546 = vunpack.c.l.b16 %v1433
    %v1547 = vunpack.c.h.b16 %v1433
    %v1548 = vunpack.c.l.b16 %v1434
    %v1549 = vunpack.c.h.b16 %v1434
    %v1550 = vunpack.c.l.b16 %v1435
    %v1551 = vunpack.c.h.b16 %v1435
    %v1552 = vpack.c.b16 %v1490, %v1488
    %v1553 = vpack.c.b16 %v1491, %v1489
    %v1554 = vpack.c.b16 %v1494, %v1492
    %v1555 = vpack.c.b16 %v1495, %v1493
    %v1556 = vpack.c.b16 %v1498, %v1496
    %v1557 = vpack.c.b16 %v1499, %v1497
    %v1558 = vpack.c.b16 %v1502, %v1500
    %v1559 = vpack.c.b16 %v1503, %v1501
    %v1560 = vpack.c.b16 %v1506, %v1504
    %v1561 = vpack.c.b16 %v1507, %v1505
    %v1562 = vpack.c.b16 %v1510, %v1508
    %v1563 = vpack.c.b16 %v1511, %v1509
    %v1564 = vpack.c.b16 %v1514, %v1512
    %v1565 = vpack.c.b16 %v1515, %v1513
    %v1566 = vpack.c.b16 %v1518, %v1516
    %v1567 = vpack.c.b16 %v1519, %v1517
    %v1568 = vpack.c.b16 %v1522, %v1520
    %v1569 = vpack.c.b16 %v1523, %v1521
    %v1570 = vpack.c.b16 %v1526, %v1524
    %v1571 = vpack.c.b16 %v1527, %v1525
    %v1572 = vpack.c.b16 %v1530, %v1528
    %v1573 = vpack.c.b16 %v1531, %v1529
    %v1574 = vpack.c.b16 %v1534, %v1532
    %v1575 = vpack.c.b16 %v1535, %v1533
    %v1576 = vpack.c.b16 %v1538, %v1536
    %v1577 = vpack.c.b16 %v1539, %v1537
    %v1578 = vpack.c.b16 %v1542, %v1540
    %v1579 = vpack.c.b16 %v1543, %v1541
    %v1580 = vpack.c.b16 %v1546, %v1544
    %v1581 = vpack.c.b16 %v1547, %v1545
    %v1582 = vpack.c.b16 %v1550, %v1548
    %v1583 = vpack.c.b16 %v1551, %v1549
    %1616 = vmatprep.subr.bf16.mxu0 %v1553
    %1617 = vmatpush1.bf16.msra.mxu0 %v1552
    %1618 = vmatprep.subr.bf16.mxu0 %v1555
    %1619 = vmatpush1.bf16.msra.mxu0 %v1554
    %1620 = vmatprep.subr.bf16.mxu0 %v1557
    %1621 = vmatpush1.bf16.msra.mxu0 %v1556
    %1622 = vmatprep.subr.bf16.mxu0 %v1559
    %1623 = vmatpush1.bf16.msra.mxu0 %v1558
    %1624 = vmatprep.subr.bf16.mxu0 %v1561
    %1625 = vmatpush1.bf16.msra.mxu0 %v1560
    %1626 = vmatprep.subr.bf16.mxu0 %v1563
    %1627 = vmatpush1.bf16.msra.mxu0 %v1562
    %1628 = vmatprep.subr.bf16.mxu0 %v1565
    %1629 = vmatpush1.bf16.msra.mxu0 %v1564
    %1630 = vmatprep.subr.bf16.mxu0 %v1567
    %1631 = vmatpush1.bf16.msra.mxu0 %v1566
    %1632 = vmatprep.subr.bf16.mxu0 %v1569
    %1633 = vmatpush1.bf16.msra.mxu0 %v1568
    %1634 = vmatprep.subr.bf16.mxu0 %v1571
    %1635 = vmatpush1.bf16.msra.mxu0 %v1570
    %1636 = vmatprep.subr.bf16.mxu0 %v1573
    %1637 = vmatpush1.bf16.msra.mxu0 %v1572
    %1638 = vmatprep.subr.bf16.mxu0 %v1575
    %1639 = vmatpush1.bf16.msra.mxu0 %v1574
    %1640 = vmatprep.subr.bf16.mxu0 %v1577
    %1641 = vmatpush1.bf16.msra.mxu0 %v1576
    %1642 = vmatprep.subr.bf16.mxu0 %v1579
    %1643 = vmatpush1.bf16.msra.mxu0 %v1578
    %1644 = vmatprep.subr.bf16.mxu0 %v1581
    %1645 = vmatpush1.bf16.msra.mxu0 %v1580
    %1646 = vmatprep.subr.bf16.mxu0 %v1583
    %1647 = vmatpush1.bf16.msra.mxu0 %v1582
    %1648 = vmatprep.mubr.bf16.mxu0 %v1453
    %1649 = vmatmul.mubr.bf16.gmra.mrb[0].mxu0 %v1452
    %v1650 = vpop.f32.mrb[0].mxu0
    %v1651 = vadd.f32 %v1442, %v1650
    %v1652 = vpop.f32.mrb[0].mxu0
    %v1653 = vadd.f32 %v1446, %v1652
    %v1654 = vpop.f32.mrb[0].mxu0
    %v1655 = vpop.f32.mrb[0].mxu0
    %1656 = vdwg.mxu0
    %v1689 = vunpack.c.l.b16 %v1370
    %v1690 = vunpack.c.h.b16 %v1370
    %v1691 = vunpack.c.l.b16 %v1371
    %v1692 = vunpack.c.h.b16 %v1371
    %v1693 = vunpack.c.l.b16 %v1372
    %v1694 = vunpack.c.h.b16 %v1372
    %v1695 = vunpack.c.l.b16 %v1373
    %v1696 = vunpack.c.h.b16 %v1373
    %v1697 = vunpack.c.l.b16 %v1374
    %v1698 = vunpack.c.h.b16 %v1374
    %v1699 = vunpack.c.l.b16 %v1375
    %v1700 = vunpack.c.h.b16 %v1375
    %v1701 = vunpack.c.l.b16 %v1376
    %v1702 = vunpack.c.h.b16 %v1376
    %v1703 = vunpack.c.l.b16 %v1377
    %v1704 = vunpack.c.h.b16 %v1377
    %v1705 = vunpack.c.l.b16 %v1378
    %v1706 = vunpack.c.h.b16 %v1378
    %v1707 = vunpack.c.l.b16 %v1379
    %v1708 = vunpack.c.h.b16 %v1379
    %v1709 = vunpack.c.l.b16 %v1380
    %v1710 = vunpack.c.h.b16 %v1380
    %v1711 = vunpack.c.l.b16 %v1381
    %v1712 = vunpack.c.h.b16 %v1381
    %v1713 = vunpack.c.l.b16 %v1382
    %v1714 = vunpack.c.h.b16 %v1382
    %v1715 = vunpack.c.l.b16 %v1383
    %v1716 = vunpack.c.h.b16 %v1383
    %v1717 = vunpack.c.l.b16 %v1384
    %v1718 = vunpack.c.h.b16 %v1384
    %v1719 = vunpack.c.l.b16 %v1385
    %v1720 = vunpack.c.h.b16 %v1385
    %v1721 = vunpack.c.l.b16 %v1386
    %v1722 = vunpack.c.h.b16 %v1386
    %v1723 = vunpack.c.l.b16 %v1387
    %v1724 = vunpack.c.h.b16 %v1387
    %v1725 = vunpack.c.l.b16 %v1388
    %v1726 = vunpack.c.h.b16 %v1388
    %v1727 = vunpack.c.l.b16 %v1389
    %v1728 = vunpack.c.h.b16 %v1389
    %v1729 = vunpack.c.l.b16 %v1390
    %v1730 = vunpack.c.h.b16 %v1390
    %v1731 = vunpack.c.l.b16 %v1391
    %v1732 = vunpack.c.h.b16 %v1391
    %v1733 = vunpack.c.l.b16 %v1392
    %v1734 = vunpack.c.h.b16 %v1392
    %v1735 = vunpack.c.l.b16 %v1393
    %v1736 = vunpack.c.h.b16 %v1393
    %v1737 = vunpack.c.l.b16 %v1394
    %v1738 = vunpack.c.h.b16 %v1394
    %v1739 = vunpack.c.l.b16 %v1395
    %v1740 = vunpack.c.h.b16 %v1395
    %v1741 = vunpack.c.l.b16 %v1396
    %v1742 = vunpack.c.h.b16 %v1396
    %v1743 = vunpack.c.l.b16 %v1397
    %v1744 = vunpack.c.h.b16 %v1397
    %v1745 = vunpack.c.l.b16 %v1398
    %v1746 = vunpack.c.h.b16 %v1398
    %v1747 = vunpack.c.l.b16 %v1399
    %v1748 = vunpack.c.h.b16 %v1399
    %v1749 = vunpack.c.l.b16 %v1400
    %v1750 = vunpack.c.h.b16 %v1400
    %v1751 = vunpack.c.l.b16 %v1401
    %v1752 = vunpack.c.h.b16 %v1401
    %v1753 = vpack.c.b16 %v1691, %v1689
    %v1754 = vpack.c.b16 %v1692, %v1690
    %v1755 = vpack.c.b16 %v1695, %v1693
    %v1756 = vpack.c.b16 %v1696, %v1694
    %v1757 = vpack.c.b16 %v1699, %v1697
    %v1758 = vpack.c.b16 %v1700, %v1698
    %v1759 = vpack.c.b16 %v1703, %v1701
    %v1760 = vpack.c.b16 %v1704, %v1702
    %v1761 = vpack.c.b16 %v1707, %v1705
    %v1762 = vpack.c.b16 %v1708, %v1706
    %v1763 = vpack.c.b16 %v1711, %v1709
    %v1764 = vpack.c.b16 %v1712, %v1710
    %v1765 = vpack.c.b16 %v1715, %v1713
    %v1766 = vpack.c.b16 %v1716, %v1714
    %v1767 = vpack.c.b16 %v1719, %v1717
    %v1768 = vpack.c.b16 %v1720, %v1718
    %v1769 = vpack.c.b16 %v1723, %v1721
    %v1770 = vpack.c.b16 %v1724, %v1722
    %v1771 = vpack.c.b16 %v1727, %v1725
    %v1772 = vpack.c.b16 %v1728, %v1726
    %v1773 = vpack.c.b16 %v1731, %v1729
    %v1774 = vpack.c.b16 %v1732, %v1730
    %v1775 = vpack.c.b16 %v1735, %v1733
    %v1776 = vpack.c.b16 %v1736, %v1734
    %v1777 = vpack.c.b16 %v1739, %v1737
    %v1778 = vpack.c.b16 %v1740, %v1738
    %v1779 = vpack.c.b16 %v1743, %v1741
    %v1780 = vpack.c.b16 %v1744, %v1742
    %v1781 = vpack.c.b16 %v1747, %v1745
    %v1782 = vpack.c.b16 %v1748, %v1746
    %v1783 = vpack.c.b16 %v1751, %v1749
    %v1784 = vpack.c.b16 %v1752, %v1750
    %1817 = vmatprep.subr.bf16.mxu0 %v1754
    %1818 = vmatpush1.bf16.msra.mxu0 %v1753
    %1819 = vmatprep.subr.bf16.mxu0 %v1756
    %1820 = vmatpush1.bf16.msra.mxu0 %v1755
    %1821 = vmatprep.subr.bf16.mxu0 %v1758
    %1822 = vmatpush1.bf16.msra.mxu0 %v1757
    %1823 = vmatprep.subr.bf16.mxu0 %v1760
    %1824 = vmatpush1.bf16.msra.mxu0 %v1759
    %1825 = vmatprep.subr.bf16.mxu0 %v1762
    %1826 = vmatpush1.bf16.msra.mxu0 %v1761
    %1827 = vmatprep.subr.bf16.mxu0 %v1764
    %1828 = vmatpush1.bf16.msra.mxu0 %v1763
    %1829 = vmatprep.subr.bf16.mxu0 %v1766
    %1830 = vmatpush1.bf16.msra.mxu0 %v1765
    %1831 = vmatprep.subr.bf16.mxu0 %v1768
    %1832 = vmatpush1.bf16.msra.mxu0 %v1767
    %1833 = vmatprep.subr.bf16.mxu0 %v1770
    %1834 = vmatpush1.bf16.msra.mxu0 %v1769
    %1835 = vmatprep.subr.bf16.mxu0 %v1772
    %1836 = vmatpush1.bf16.msra.mxu0 %v1771
    %1837 = vmatprep.subr.bf16.mxu0 %v1774
    %1838 = vmatpush1.bf16.msra.mxu0 %v1773
    %1839 = vmatprep.subr.bf16.mxu0 %v1776
    %1840 = vmatpush1.bf16.msra.mxu0 %v1775
    %1841 = vmatprep.subr.bf16.mxu0 %v1778
    %1842 = vmatpush1.bf16.msra.mxu0 %v1777
    %1843 = vmatprep.subr.bf16.mxu0 %v1780
    %1844 = vmatpush1.bf16.msra.mxu0 %v1779
    %1845 = vmatprep.subr.bf16.mxu0 %v1782
    %1846 = vmatpush1.bf16.msra.mxu0 %v1781
    %1847 = vmatprep.subr.bf16.mxu0 %v1784
    %1848 = vmatpush1.bf16.msra.mxu0 %v1783
    %1849 = vmatprep.mubr.bf16.mxu0 %v1368
    %1850 = vmatmul.mubr.bf16.gmra.mrb[0].mxu0 %v1367
    %v1851 = vpop.f32.mrb[0].mxu0
    %v1852 = vadd.f32 %v1651, %v1851
    %v1853 = vpop.f32.mrb[0].mxu0
    %v1854 = vadd.f32 %v1653, %v1853
    %v1855 = vpop.f32.mrb[0].mxu0
    %v1856 = vpop.f32.mrb[0].mxu0
    %1857 = vdwg.mxu0
    %v1858 = vmax.f32 %v1852, 0.0
    %v1859 = vmax.f32 %v1854, 0.0
    %v1860 = vpack.c.bf16 %v1858, %v1858
    %v1861 = vpack.c.bf16 %v1859, %v1859
    %v1862 = vld [vmem:[#allocation6] sm:$0xff]
    %v1863 = vld [vmem:[#allocation6 + $0x8] sm:$0xff]
    %v1864 = vld [vmem:[#allocation6 + $0x10] sm:$0xff]
    %v1865 = vld [vmem:[#allocation6 + $0x18] sm:$0xff]
    %v1866 = vld [vmem:[#allocation6 + $0x20] sm:$0xff]
    %v1867 = vld [vmem:[#allocation6 + $0x28] sm:$0xff]
    %v1868 = vld [vmem:[#allocation6 + $0x30] sm:$0xff]
    %v1869 = vld [vmem:[#allocation6 + $0x38] sm:$0xff]
    %v1870 = vld [vmem:[#allocation6 + $0x40] sm:$0xff]
    %v1871 = vld [vmem:[#allocation6 + $0x48] sm:$0xff]
    %v1872 = vld [vmem:[#allocation6 + $0x50] sm:$0xff]
    %v1873 = vld [vmem:[#allocation6 + $0x58] sm:$0xff]
    %v1874 = vld [vmem:[#allocation6 + $0x60] sm:$0xff]
    %v1875 = vld [vmem:[#allocation6 + $0x68] sm:$0xff]
    %v1876 = vld [vmem:[#allocation6 + $0x70] sm:$0xff]
    %v1877 = vld [vmem:[#allocation6 + $0x78] sm:$0xff]
    %v1878 = vld [vmem:[#allocation6 + $0x80] sm:$0xff]
    %v1879 = vld [vmem:[#allocation6 + $0x88] sm:$0xff]
    %v1880 = vld [vmem:[#allocation6 + $0x90] sm:$0xff]
    %v1881 = vld [vmem:[#allocation6 + $0x98] sm:$0xff]
    %v1882 = vld [vmem:[#allocation6 + $0xa0] sm:$0xff]
    %v1883 = vld [vmem:[#allocation6 + $0xa8] sm:$0xff]
    %v1884 = vld [vmem:[#allocation6 + $0xb0] sm:$0xff]
    %v1885 = vld [vmem:[#allocation6 + $0xb8] sm:$0xff]
    %v1886 = vld [vmem:[#allocation6 + $0xc0] sm:$0xff]
    %v1887 = vld [vmem:[#allocation6 + $0xc8] sm:$0xff]
    %v1888 = vld [vmem:[#allocation6 + $0xd0] sm:$0xff]
    %v1889 = vld [vmem:[#allocation6 + $0xd8] sm:$0xff]
    %v1890 = vld [vmem:[#allocation6 + $0xe0] sm:$0xff]
    %v1891 = vld [vmem:[#allocation6 + $0xe8] sm:$0xff]
    %v1892 = vld [vmem:[#allocation6 + $0xf0] sm:$0xff]
    %v1893 = vld [vmem:[#allocation6 + $0xf8] sm:$0xff]
    %v1894 = vld [vmem:[#allocation6 + $0x100] sm:$0xff]
    %v1895 = vld [vmem:[#allocation6 + $0x108] sm:$0xff]
    %v1896 = vld [vmem:[#allocation6 + $0x110] sm:$0xff]
    %v1897 = vld [vmem:[#allocation6 + $0x118] sm:$0xff]
    %v1898 = vld [vmem:[#allocation6 + $0x120] sm:$0xff]
    %v1899 = vld [vmem:[#allocation6 + $0x128] sm:$0xff]
    %v1900 = vld [vmem:[#allocation6 + $0x130] sm:$0xff]
    %v1901 = vld [vmem:[#allocation6 + $0x138] sm:$0xff]
    %v1902 = vld [vmem:[#allocation6 + $0x140] sm:$0xff]
    %v1903 = vld [vmem:[#allocation6 + $0x148] sm:$0xff]
    %v1904 = vld [vmem:[#allocation6 + $0x150] sm:$0xff]
    %v1905 = vld [vmem:[#allocation6 + $0x158] sm:$0xff]
    %v1906 = vld [vmem:[#allocation6 + $0x160] sm:$0xff]
    %v1907 = vld [vmem:[#allocation6 + $0x168] sm:$0xff]
    %v1908 = vld [vmem:[#allocation6 + $0x170] sm:$0xff]
    %v1909 = vld [vmem:[#allocation6 + $0x178] sm:$0xff]
    %v1910 = vld [vmem:[#allocation6 + $0x180] sm:$0xff]
    %v1911 = vld [vmem:[#allocation6 + $0x188] sm:$0xff]
    %v1912 = vld [vmem:[#allocation6 + $0x190] sm:$0xff]
    %v1913 = vld [vmem:[#allocation6 + $0x198] sm:$0xff]
    %v1914 = vld [vmem:[#allocation6 + $0x1a0] sm:$0xff]
    %v1915 = vld [vmem:[#allocation6 + $0x1a8] sm:$0xff]
    %v1916 = vld [vmem:[#allocation6 + $0x1b0] sm:$0xff]
    %v1917 = vld [vmem:[#allocation6 + $0x1b8] sm:$0xff]
    %v1918 = vld [vmem:[#allocation6 + $0x1c0] sm:$0xff]
    %v1919 = vld [vmem:[#allocation6 + $0x1c8] sm:$0xff]
    %v1920 = vld [vmem:[#allocation6 + $0x1d0] sm:$0xff]
    %v1921 = vld [vmem:[#allocation6 + $0x1d8] sm:$0xff]
    %v1922 = vld [vmem:[#allocation6 + $0x1e0] sm:$0xff]
    %v1923 = vld [vmem:[#allocation6 + $0x1e8] sm:$0xff]
    %v1924 = vld [vmem:[#allocation6 + $0x1f0] sm:$0xff]
    %v1925 = vld [vmem:[#allocation6 + $0x1f8] sm:$0xff]
    %v1926 = vld [vmem:[%s5] sm:$0xf]
    %v1928 = vlaneseq
    %v1929 = vshrl.u32 %v1928, 7
    %v1930 = vsub.s32 0, %v1929
    %v1931 = vrot.slane %v1926, %v1930
    %v1932 = vlaneseq
    %v1933 = vshrl.u32 %v1932, 7
    %v1934 = vsub.s32 1, %v1933
    %v1935 = vrot.slane %v1926, %v1934
    %v1936 = vlaneseq
    %v1937 = vshrl.u32 %v1936, 7
    %v1938 = vsub.s32 2, %v1937
    %v1939 = vrot.slane %v1926, %v1938
    %v1940 = vlaneseq
    %v1941 = vshrl.u32 %v1940, 7
    %v1942 = vsub.s32 3, %v1941
    %v1943 = vrot.slane %v1926, %v1942
    %v2012 = vunpack.c.l.b16 %v1862
    %v2013 = vunpack.c.h.b16 %v1862
    %v2014 = vunpack.c.l.b16 %v1863
    %v2015 = vunpack.c.h.b16 %v1863
    %v2016 = vunpack.c.l.b16 %v1864
    %v2017 = vunpack.c.h.b16 %v1864
    %v2018 = vunpack.c.l.b16 %v1865
    %v2019 = vunpack.c.h.b16 %v1865
    %v2020 = vunpack.c.l.b16 %v1866
    %v2021 = vunpack.c.h.b16 %v1866
    %v2022 = vunpack.c.l.b16 %v1867
    %v2023 = vunpack.c.h.b16 %v1867
    %v2024 = vunpack.c.l.b16 %v1868
    %v2025 = vunpack.c.h.b16 %v1868
    %v2026 = vunpack.c.l.b16 %v1869
    %v2027 = vunpack.c.h.b16 %v1869
    %v2028 = vunpack.c.l.b16 %v1870
    %v2029 = vunpack.c.h.b16 %v1870
    %v2030 = vunpack.c.l.b16 %v1871
    %v2031 = vunpack.c.h.b16 %v1871
    %v2032 = vunpack.c.l.b16 %v1872
    %v2033 = vunpack.c.h.b16 %v1872
    %v2034 = vunpack.c.l.b16 %v1873
    %v2035 = vunpack.c.h.b16 %v1873
    %v2036 = vunpack.c.l.b16 %v1874
    %v2037 = vunpack.c.h.b16 %v1874
    %v2038 = vunpack.c.l.b16 %v1875
    %v2039 = vunpack.c.h.b16 %v1875
    %v2040 = vunpack.c.l.b16 %v1876
    %v2041 = vunpack.c.h.b16 %v1876
    %v2042 = vunpack.c.l.b16 %v1877
    %v2043 = vunpack.c.h.b16 %v1877
    %v2044 = vunpack.c.l.b16 %v1878
    %v2045 = vunpack.c.h.b16 %v1878
    %v2046 = vunpack.c.l.b16 %v1879
    %v2047 = vunpack.c.h.b16 %v1879
    %v2048 = vunpack.c.l.b16 %v1880
    %v2049 = vunpack.c.h.b16 %v1880
    %v2050 = vunpack.c.l.b16 %v1881
    %v2051 = vunpack.c.h.b16 %v1881
    %v2052 = vunpack.c.l.b16 %v1882
    %v2053 = vunpack.c.h.b16 %v1882
    %v2054 = vunpack.c.l.b16 %v1883
    %v2055 = vunpack.c.h.b16 %v1883
    %v2056 = vunpack.c.l.b16 %v1884
    %v2057 = vunpack.c.h.b16 %v1884
    %v2058 = vunpack.c.l.b16 %v1885
    %v2059 = vunpack.c.h.b16 %v1885
    %v2060 = vunpack.c.l.b16 %v1886
    %v2061 = vunpack.c.h.b16 %v1886
    %v2062 = vunpack.c.l.b16 %v1887
    %v2063 = vunpack.c.h.b16 %v1887
    %v2064 = vunpack.c.l.b16 %v1888
    %v2065 = vunpack.c.h.b16 %v1888
    %v2066 = vunpack.c.l.b16 %v1889
    %v2067 = vunpack.c.h.b16 %v1889
    %v2068 = vunpack.c.l.b16 %v1890
    %v2069 = vunpack.c.h.b16 %v1890
    %v2070 = vunpack.c.l.b16 %v1891
    %v2071 = vunpack.c.h.b16 %v1891
    %v2072 = vunpack.c.l.b16 %v1892
    %v2073 = vunpack.c.h.b16 %v1892
    %v2074 = vunpack.c.l.b16 %v1893
    %v2075 = vunpack.c.h.b16 %v1893
    %v2076 = vunpack.c.l.b16 %v1894
    %v2077 = vunpack.c.h.b16 %v1894
    %v2078 = vunpack.c.l.b16 %v1895
    %v2079 = vunpack.c.h.b16 %v1895
    %v2080 = vunpack.c.l.b16 %v1896
    %v2081 = vunpack.c.h.b16 %v1896
    %v2082 = vunpack.c.l.b16 %v1897
    %v2083 = vunpack.c.h.b16 %v1897
    %v2084 = vunpack.c.l.b16 %v1898
    %v2085 = vunpack.c.h.b16 %v1898
    %v2086 = vunpack.c.l.b16 %v1899
    %v2087 = vunpack.c.h.b16 %v1899
    %v2088 = vunpack.c.l.b16 %v1900
    %v2089 = vunpack.c.h.b16 %v1900
    %v2090 = vunpack.c.l.b16 %v1901
    %v2091 = vunpack.c.h.b16 %v1901
    %v2092 = vunpack.c.l.b16 %v1902
    %v2093 = vunpack.c.h.b16 %v1902
    %v2094 = vunpack.c.l.b16 %v1903
    %v2095 = vunpack.c.h.b16 %v1903
    %v2096 = vunpack.c.l.b16 %v1904
    %v2097 = vunpack.c.h.b16 %v1904
    %v2098 = vunpack.c.l.b16 %v1905
    %v2099 = vunpack.c.h.b16 %v1905
    %v2100 = vunpack.c.l.b16 %v1906
    %v2101 = vunpack.c.h.b16 %v1906
    %v2102 = vunpack.c.l.b16 %v1907
    %v2103 = vunpack.c.h.b16 %v1907
    %v2104 = vunpack.c.l.b16 %v1908
    %v2105 = vunpack.c.h.b16 %v1908
    %v2106 = vunpack.c.l.b16 %v1909
    %v2107 = vunpack.c.h.b16 %v1909
    %v2108 = vunpack.c.l.b16 %v1910
    %v2109 = vunpack.c.h.b16 %v1910
    %v2110 = vunpack.c.l.b16 %v1911
    %v2111 = vunpack.c.h.b16 %v1911
    %v2112 = vunpack.c.l.b16 %v1912
    %v2113 = vunpack.c.h.b16 %v1912
    %v2114 = vunpack.c.l.b16 %v1913
    %v2115 = vunpack.c.h.b16 %v1913
    %v2116 = vunpack.c.l.b16 %v1914
    %v2117 = vunpack.c.h.b16 %v1914
    %v2118 = vunpack.c.l.b16 %v1915
    %v2119 = vunpack.c.h.b16 %v1915
    %v2120 = vunpack.c.l.b16 %v1916
    %v2121 = vunpack.c.h.b16 %v1916
    %v2122 = vunpack.c.l.b16 %v1917
    %v2123 = vunpack.c.h.b16 %v1917
    %v2124 = vunpack.c.l.b16 %v1918
    %v2125 = vunpack.c.h.b16 %v1918
    %v2126 = vunpack.c.l.b16 %v1919
    %v2127 = vunpack.c.h.b16 %v1919
    %v2128 = vunpack.c.l.b16 %v1920
    %v2129 = vunpack.c.h.b16 %v1920
    %v2130 = vunpack.c.l.b16 %v1921
    %v2131 = vunpack.c.h.b16 %v1921
    %v2132 = vunpack.c.l.b16 %v1922
    %v2133 = vunpack.c.h.b16 %v1922
    %v2134 = vunpack.c.l.b16 %v1923
    %v2135 = vunpack.c.h.b16 %v1923
    %v2136 = vunpack.c.l.b16 %v1924
    %v2137 = vunpack.c.h.b16 %v1924
    %v2138 = vunpack.c.l.b16 %v1925
    %v2139 = vunpack.c.h.b16 %v1925
    %v2140 = vpack.c.b16 %v2016, %v2012
    %v2141 = vpack.c.b16 %v2017, %v2013
    %v2142 = vpack.c.b16 %v2018, %v2014
    %v2143 = vpack.c.b16 %v2019, %v2015
    %v2144 = vpack.c.b16 %v2024, %v2020
    %v2145 = vpack.c.b16 %v2025, %v2021
    %v2146 = vpack.c.b16 %v2026, %v2022
    %v2147 = vpack.c.b16 %v2027, %v2023
    %v2148 = vpack.c.b16 %v2032, %v2028
    %v2149 = vpack.c.b16 %v2033, %v2029
    %v2150 = vpack.c.b16 %v2034, %v2030
    %v2151 = vpack.c.b16 %v2035, %v2031
    %v2152 = vpack.c.b16 %v2040, %v2036
    %v2153 = vpack.c.b16 %v2041, %v2037
    %v2154 = vpack.c.b16 %v2042, %v2038
    %v2155 = vpack.c.b16 %v2043, %v2039
    %v2156 = vpack.c.b16 %v2048, %v2044
    %v2157 = vpack.c.b16 %v2049, %v2045
    %v2158 = vpack.c.b16 %v2050, %v2046
    %v2159 = vpack.c.b16 %v2051, %v2047
    %v2160 = vpack.c.b16 %v2056, %v2052
    %v2161 = vpack.c.b16 %v2057, %v2053
    %v2162 = vpack.c.b16 %v2058, %v2054
    %v2163 = vpack.c.b16 %v2059, %v2055
    %v2164 = vpack.c.b16 %v2064, %v2060
    %v2165 = vpack.c.b16 %v2065, %v2061
    %v2166 = vpack.c.b16 %v2066, %v2062
    %v2167 = vpack.c.b16 %v2067, %v2063
    %v2168 = vpack.c.b16 %v2072, %v2068
    %v2169 = vpack.c.b16 %v2073, %v2069
    %v2170 = vpack.c.b16 %v2074, %v2070
    %v2171 = vpack.c.b16 %v2075, %v2071
    %v2172 = vpack.c.b16 %v2080, %v2076
    %v2173 = vpack.c.b16 %v2081, %v2077
    %v2174 = vpack.c.b16 %v2082, %v2078
    %v2175 = vpack.c.b16 %v2083, %v2079
    %v2176 = vpack.c.b16 %v2088, %v2084
    %v2177 = vpack.c.b16 %v2089, %v2085
    %v2178 = vpack.c.b16 %v2090, %v2086
    %v2179 = vpack.c.b16 %v2091, %v2087
    %v2180 = vpack.c.b16 %v2096, %v2092
    %v2181 = vpack.c.b16 %v2097, %v2093
    %v2182 = vpack.c.b16 %v2098, %v2094
    %v2183 = vpack.c.b16 %v2099, %v2095
    %v2184 = vpack.c.b16 %v2104, %v2100
    %v2185 = vpack.c.b16 %v2105, %v2101
    %v2186 = vpack.c.b16 %v2106, %v2102
    %v2187 = vpack.c.b16 %v2107, %v2103
    %v2188 = vpack.c.b16 %v2112, %v2108
    %v2189 = vpack.c.b16 %v2113, %v2109
    %v2190 = vpack.c.b16 %v2114, %v2110
    %v2191 = vpack.c.b16 %v2115, %v2111
    %v2192 = vpack.c.b16 %v2120, %v2116
    %v2193 = vpack.c.b16 %v2121, %v2117
    %v2194 = vpack.c.b16 %v2122, %v2118
    %v2195 = vpack.c.b16 %v2123, %v2119
    %v2196 = vpack.c.b16 %v2128, %v2124
    %v2197 = vpack.c.b16 %v2129, %v2125
    %v2198 = vpack.c.b16 %v2130, %v2126
    %v2199 = vpack.c.b16 %v2131, %v2127
    %v2200 = vpack.c.b16 %v2136, %v2132
    %v2201 = vpack.c.b16 %v2137, %v2133
    %v2202 = vpack.c.b16 %v2138, %v2134
    %v2203 = vpack.c.b16 %v2139, %v2135
    %2268 = vmatprep.subr.bf16.mxu0 %v2141
    %2269 = vmatpush1.bf16.msra.mxu0 %v2140
    %2270 = vmatprep.subr.bf16.mxu0 %v2145
    %2271 = vmatpush1.bf16.msra.mxu0 %v2144
    %2272 = vmatprep.subr.bf16.mxu0 %v2149
    %2273 = vmatpush1.bf16.msra.mxu0 %v2148
    %2274 = vmatprep.subr.bf16.mxu0 %v2153
    %2275 = vmatpush1.bf16.msra.mxu0 %v2152
    %2276 = vmatprep.subr.bf16.mxu0 %v2157
    %2277 = vmatpush1.bf16.msra.mxu0 %v2156
    %2278 = vmatprep.subr.bf16.mxu0 %v2161
    %2279 = vmatpush1.bf16.msra.mxu0 %v2160
    %2280 = vmatprep.subr.bf16.mxu0 %v2165
    %2281 = vmatpush1.bf16.msra.mxu0 %v2164
    %2282 = vmatprep.subr.bf16.mxu0 %v2169
    %2283 = vmatpush1.bf16.msra.mxu0 %v2168
    %2284 = vmatprep.subr.bf16.mxu0 %v2173
    %2285 = vmatpush1.bf16.msra.mxu0 %v2172
    %2286 = vmatprep.subr.bf16.mxu0 %v2177
    %2287 = vmatpush1.bf16.msra.mxu0 %v2176
    %2288 = vmatprep.subr.bf16.mxu0 %v2181
    %2289 = vmatpush1.bf16.msra.mxu0 %v2180
    %2290 = vmatprep.subr.bf16.mxu0 %v2185
    %2291 = vmatpush1.bf16.msra.mxu0 %v2184
    %2292 = vmatprep.subr.bf16.mxu0 %v2189
    %2293 = vmatpush1.bf16.msra.mxu0 %v2188
    %2294 = vmatprep.subr.bf16.mxu0 %v2193
    %2295 = vmatpush1.bf16.msra.mxu0 %v2192
    %2296 = vmatprep.subr.bf16.mxu0 %v2197
    %2297 = vmatpush1.bf16.msra.mxu0 %v2196
    %2298 = vmatprep.subr.bf16.mxu0 %v2201
    %2299 = vmatpush1.bf16.msra.mxu0 %v2200
    %2300 = vmatprep.mubr.bf16.mxu0 %v1861
    %2301 = vmatmul.mubr.bf16.gmra.mrb[0].mxu0 %v1860
    %v2302 = vpop.f32.mrb[0].mxu0
    %v2303 = vadd.f32 %v1931, %v2302
    %v2304 = vpop.f32.mrb[0].mxu0
    %v2305 = vadd.f32 %v1935, %v2304
    %v2306 = vpop.f32.mrb[0].mxu0
    %v2307 = vpop.f32.mrb[0].mxu0
    %2308 = vdwg.mxu0
    %2309 = vmatprep.subr.bf16.mxu0 %v2143
    %2310 = vmatpush1.bf16.msra.mxu0 %v2142
    %2311 = vmatprep.subr.bf16.mxu0 %v2147
    %2312 = vmatpush1.bf16.msra.mxu0 %v2146
    %2313 = vmatprep.subr.bf16.mxu0 %v2151
    %2314 = vmatpush1.bf16.msra.mxu0 %v2150
    %2315 = vmatprep.subr.bf16.mxu0 %v2155
    %2316 = vmatpush1.bf16.msra.mxu0 %v2154
    %2317 = vmatprep.subr.bf16.mxu0 %v2159
    %2318 = vmatpush1.bf16.msra.mxu0 %v2158
    %2319 = vmatprep.subr.bf16.mxu0 %v2163
    %2320 = vmatpush1.bf16.msra.mxu0 %v2162
    %2321 = vmatprep.subr.bf16.mxu0 %v2167
    %2322 = vmatpush1.bf16.msra.mxu0 %v2166
    %2323 = vmatprep.subr.bf16.mxu0 %v2171
    %2324 = vmatpush1.bf16.msra.mxu0 %v2170
    %2325 = vmatprep.subr.bf16.mxu0 %v2175
    %2326 = vmatpush1.bf16.msra.mxu0 %v2174
    %2327 = vmatprep.subr.bf16.mxu0 %v2179
    %2328 = vmatpush1.bf16.msra.mxu0 %v2178
    %2329 = vmatprep.subr.bf16.mxu0 %v2183
    %2330 = vmatpush1.bf16.msra.mxu0 %v2182
    %2331 = vmatprep.subr.bf16.mxu0 %v2187
    %2332 = vmatpush1.bf16.msra.mxu0 %v2186
    %2333 = vmatprep.subr.bf16.mxu0 %v2191
    %2334 = vmatpush1.bf16.msra.mxu0 %v2190
    %2335 = vmatprep.subr.bf16.mxu0 %v2195
    %2336 = vmatpush1.bf16.msra.mxu0 %v2194
    %2337 = vmatprep.subr.bf16.mxu0 %v2199
    %2338 = vmatpush1.bf16.msra.mxu0 %v2198
    %2339 = vmatprep.subr.bf16.mxu0 %v2203
    %2340 = vmatpush1.bf16.msra.mxu0 %v2202
    %2341 = vmatprep.mubr.bf16.mxu0 %v1861
    %2342 = vmatmul.mubr.bf16.gmra.mrb[0].mxu0 %v1860
    %v2343 = vpop.f32.mrb[0].mxu0
    %v2344 = vadd.f32 %v1939, %v2343
    %v2345 = vpop.f32.mrb[0].mxu0
    %v2346 = vadd.f32 %v1943, %v2345
    %v2347 = vpop.f32.mrb[0].mxu0
    %v2348 = vpop.f32.mrb[0].mxu0
    %2349 = vdwg.mxu0
    %v2350 = vmax.f32 %v2303, 0.0
    %v2351 = vmax.f32 %v2305, 0.0
    %v2352 = vmax.f32 %v2344, 0.0
    %v2353 = vmax.f32 %v2346, 0.0
    %v2354 = vpack.c.bf16 %v2350, %v2350
    %v2355 = vpack.c.bf16 %v2351, %v2351
    %v2356 = vpack.c.bf16 %v2352, %v2352
    %v2357 = vpack.c.bf16 %v2353, %v2353
    %v2358 = vld [vmem:[#allocation7] sm:$0xff]
    %v2359 = vld [vmem:[#allocation7 + $0x8] sm:$0xff]
    %v2360 = vld [vmem:[#allocation7 + $0x10] sm:$0xff]
    %v2361 = vld [vmem:[#allocation7 + $0x18] sm:$0xff]
    %v2362 = vld [vmem:[#allocation7 + $0x20] sm:$0xff]
    %v2363 = vld [vmem:[#allocation7 + $0x28] sm:$0xff]
    %v2364 = vld [vmem:[#allocation7 + $0x30] sm:$0xff]
    %v2365 = vld [vmem:[#allocation7 + $0x38] sm:$0xff]
    %v2366 = vld [vmem:[#allocation7 + $0x40] sm:$0xff]
    %v2367 = vld [vmem:[#allocation7 + $0x48] sm:$0xff]
    %v2368 = vld [vmem:[#allocation7 + $0x50] sm:$0xff]
    %v2369 = vld [vmem:[#allocation7 + $0x58] sm:$0xff]
    %v2370 = vld [vmem:[#allocation7 + $0x60] sm:$0xff]
    %v2371 = vld [vmem:[#allocation7 + $0x68] sm:$0xff]
    %v2372 = vld [vmem:[#allocation7 + $0x70] sm:$0xff]
    %v2373 = vld [vmem:[#allocation7 + $0x78] sm:$0xff]
    %v2374 = vld [vmem:[#allocation7 + $0x80] sm:$0xff]
    %v2375 = vld [vmem:[#allocation7 + $0x88] sm:$0xff]
    %v2376 = vld [vmem:[#allocation7 + $0x90] sm:$0xff]
    %v2377 = vld [vmem:[#allocation7 + $0x98] sm:$0xff]
    %v2378 = vld [vmem:[#allocation7 + $0xa0] sm:$0xff]
    %v2379 = vld [vmem:[#allocation7 + $0xa8] sm:$0xff]
    %v2380 = vld [vmem:[#allocation7 + $0xb0] sm:$0xff]
    %v2381 = vld [vmem:[#allocation7 + $0xb8] sm:$0xff]
    %v2382 = vld [vmem:[#allocation7 + $0xc0] sm:$0xff]
    %v2383 = vld [vmem:[#allocation7 + $0xc8] sm:$0xff]
    %v2384 = vld [vmem:[#allocation7 + $0xd0] sm:$0xff]
    %v2385 = vld [vmem:[#allocation7 + $0xd8] sm:$0xff]
    %v2386 = vld [vmem:[#allocation7 + $0xe0] sm:$0xff]
    %v2387 = vld [vmem:[#allocation7 + $0xe8] sm:$0xff]
    %v2388 = vld [vmem:[#allocation7 + $0xf0] sm:$0xff]
    %v2389 = vld [vmem:[#allocation7 + $0xf8] sm:$0xff]
    %v2390 = vld [vmem:[#allocation7 + $0x100] sm:$0xff]
    %v2391 = vld [vmem:[#allocation7 + $0x108] sm:$0xff]
    %v2392 = vld [vmem:[#allocation7 + $0x110] sm:$0xff]
    %v2393 = vld [vmem:[#allocation7 + $0x118] sm:$0xff]
    %v2394 = vld [vmem:[#allocation7 + $0x120] sm:$0xff]
    %v2395 = vld [vmem:[#allocation7 + $0x128] sm:$0xff]
    %v2396 = vld [vmem:[#allocation7 + $0x130] sm:$0xff]
    %v2397 = vld [vmem:[#allocation7 + $0x138] sm:$0xff]
    %v2398 = vld [vmem:[#allocation7 + $0x140] sm:$0xff]
    %v2399 = vld [vmem:[#allocation7 + $0x148] sm:$0xff]
    %v2400 = vld [vmem:[#allocation7 + $0x150] sm:$0xff]
    %v2401 = vld [vmem:[#allocation7 + $0x158] sm:$0xff]
    %v2402 = vld [vmem:[#allocation7 + $0x160] sm:$0xff]
    %v2403 = vld [vmem:[#allocation7 + $0x168] sm:$0xff]
    %v2404 = vld [vmem:[#allocation7 + $0x170] sm:$0xff]
    %v2405 = vld [vmem:[#allocation7 + $0x178] sm:$0xff]
    %v2406 = vld [vmem:[#allocation7 + $0x180] sm:$0xff]
    %v2407 = vld [vmem:[#allocation7 + $0x188] sm:$0xff]
    %v2408 = vld [vmem:[#allocation7 + $0x190] sm:$0xff]
    %v2409 = vld [vmem:[#allocation7 + $0x198] sm:$0xff]
    %v2410 = vld [vmem:[#allocation7 + $0x1a0] sm:$0xff]
    %v2411 = vld [vmem:[#allocation7 + $0x1a8] sm:$0xff]
    %v2412 = vld [vmem:[#allocation7 + $0x1b0] sm:$0xff]
    %v2413 = vld [vmem:[#allocation7 + $0x1b8] sm:$0xff]
    %v2414 = vld [vmem:[#allocation7 + $0x1c0] sm:$0xff]
    %v2415 = vld [vmem:[#allocation7 + $0x1c8] sm:$0xff]
    %v2416 = vld [vmem:[#allocation7 + $0x1d0] sm:$0xff]
    %v2417 = vld [vmem:[#allocation7 + $0x1d8] sm:$0xff]
    %v2418 = vld [vmem:[#allocation7 + $0x1e0] sm:$0xff]
    %v2419 = vld [vmem:[#allocation7 + $0x1e8] sm:$0xff]
    %v2420 = vld [vmem:[#allocation7 + $0x1f0] sm:$0xff]
    %v2421 = vld [vmem:[#allocation7 + $0x1f8] sm:$0xff]
    %v2422 = vld [vmem:[#allocation7 + $0x200] sm:$0xff]
    %v2423 = vld [vmem:[#allocation7 + $0x208] sm:$0xff]
    %v2424 = vld [vmem:[#allocation7 + $0x210] sm:$0xff]
    %v2425 = vld [vmem:[#allocation7 + $0x218] sm:$0xff]
    %v2426 = vld [vmem:[#allocation7 + $0x220] sm:$0xff]
    %v2427 = vld [vmem:[#allocation7 + $0x228] sm:$0xff]
    %v2428 = vld [vmem:[#allocation7 + $0x230] sm:$0xff]
    %v2429 = vld [vmem:[#allocation7 + $0x238] sm:$0xff]
    %v2430 = vld [vmem:[#allocation7 + $0x240] sm:$0xff]
    %v2431 = vld [vmem:[#allocation7 + $0x248] sm:$0xff]
    %v2432 = vld [vmem:[#allocation7 + $0x250] sm:$0xff]
    %v2433 = vld [vmem:[#allocation7 + $0x258] sm:$0xff]
    %v2434 = vld [vmem:[#allocation7 + $0x260] sm:$0xff]
    %v2435 = vld [vmem:[#allocation7 + $0x268] sm:$0xff]
    %v2436 = vld [vmem:[#allocation7 + $0x270] sm:$0xff]
    %v2437 = vld [vmem:[#allocation7 + $0x278] sm:$0xff]
    %v2438 = vld [vmem:[#allocation7 + $0x280] sm:$0xff]
    %v2439 = vld [vmem:[#allocation7 + $0x288] sm:$0xff]
    %v2440 = vld [vmem:[#allocation7 + $0x290] sm:$0xff]
    %v2441 = vld [vmem:[#allocation7 + $0x298] sm:$0xff]
    %v2442 = vld [vmem:[#allocation7 + $0x2a0] sm:$0xff]
    %v2443 = vld [vmem:[#allocation7 + $0x2a8] sm:$0xff]
    %v2444 = vld [vmem:[#allocation7 + $0x2b0] sm:$0xff]
    %v2445 = vld [vmem:[#allocation7 + $0x2b8] sm:$0xff]
    %v2446 = vld [vmem:[#allocation7 + $0x2c0] sm:$0xff]
    %v2447 = vld [vmem:[#allocation7 + $0x2c8] sm:$0xff]
    %v2448 = vld [vmem:[#allocation7 + $0x2d0] sm:$0xff]
    %v2449 = vld [vmem:[#allocation7 + $0x2d8] sm:$0xff]
    %v2450 = vld [vmem:[#allocation7 + $0x2e0] sm:$0xff]
    %v2451 = vld [vmem:[#allocation7 + $0x2e8] sm:$0xff]
    %v2452 = vld [vmem:[#allocation7 + $0x2f0] sm:$0xff]
    %v2453 = vld [vmem:[#allocation7 + $0x2f8] sm:$0xff]
    %v2454 = vld [vmem:[#allocation7 + $0x300] sm:$0xff]
    %v2455 = vld [vmem:[#allocation7 + $0x308] sm:$0xff]
    %v2456 = vld [vmem:[#allocation7 + $0x310] sm:$0xff]
    %v2457 = vld [vmem:[#allocation7 + $0x318] sm:$0xff]
    %v2458 = vld [vmem:[#allocation7 + $0x320] sm:$0xff]
    %v2459 = vld [vmem:[#allocation7 + $0x328] sm:$0xff]
    %v2460 = vld [vmem:[#allocation7 + $0x330] sm:$0xff]
    %v2461 = vld [vmem:[#allocation7 + $0x338] sm:$0xff]
    %v2462 = vld [vmem:[#allocation7 + $0x340] sm:$0xff]
    %v2463 = vld [vmem:[#allocation7 + $0x348] sm:$0xff]
    %v2464 = vld [vmem:[#allocation7 + $0x350] sm:$0xff]
    %v2465 = vld [vmem:[#allocation7 + $0x358] sm:$0xff]
    %v2466 = vld [vmem:[#allocation7 + $0x360] sm:$0xff]
    %v2467 = vld [vmem:[#allocation7 + $0x368] sm:$0xff]
    %v2468 = vld [vmem:[#allocation7 + $0x370] sm:$0xff]
    %v2469 = vld [vmem:[#allocation7 + $0x378] sm:$0xff]
    %v2470 = vld [vmem:[#allocation7 + $0x380] sm:$0xff]
    %v2471 = vld [vmem:[#allocation7 + $0x388] sm:$0xff]
    %v2472 = vld [vmem:[#allocation7 + $0x390] sm:$0xff]
    %v2473 = vld [vmem:[#allocation7 + $0x398] sm:$0xff]
    %v2474 = vld [vmem:[#allocation7 + $0x3a0] sm:$0xff]
    %v2475 = vld [vmem:[#allocation7 + $0x3a8] sm:$0xff]
    %v2476 = vld [vmem:[#allocation7 + $0x3b0] sm:$0xff]
    %v2477 = vld [vmem:[#allocation7 + $0x3b8] sm:$0xff]
    %v2478 = vld [vmem:[#allocation7 + $0x3c0] sm:$0xff]
    %v2479 = vld [vmem:[#allocation7 + $0x3c8] sm:$0xff]
    %v2480 = vld [vmem:[#allocation7 + $0x3d0] sm:$0xff]
    %v2481 = vld [vmem:[#allocation7 + $0x3d8] sm:$0xff]
    %v2482 = vld [vmem:[#allocation7 + $0x3e0] sm:$0xff]
    %v2483 = vld [vmem:[#allocation7 + $0x3e8] sm:$0xff]
    %v2484 = vld [vmem:[#allocation7 + $0x3f0] sm:$0xff]
    %v2485 = vld [vmem:[#allocation7 + $0x3f8] sm:$0xff]
    %v2486 = vld [vmem:[%s7] sm:$0xf]
    %v2488 = vlaneseq
    %v2489 = vshrl.u32 %v2488, 7
    %v2490 = vsub.s32 0, %v2489
    %v2491 = vrot.slane %v2486, %v2490
    %v2492 = vlaneseq
    %v2493 = vshrl.u32 %v2492, 7
    %v2494 = vsub.s32 1, %v2493
    %v2495 = vrot.slane %v2486, %v2494
    %v2496 = vlaneseq
    %v2497 = vshrl.u32 %v2496, 7
    %v2498 = vsub.s32 2, %v2497
    %v2499 = vrot.slane %v2486, %v2498
    %v2500 = vlaneseq
    %v2501 = vshrl.u32 %v2500, 7
    %v2502 = vsub.s32 3, %v2501
    %v2503 = vrot.slane %v2486, %v2502
    %v2636 = vunpack.c.l.b16 %v2358
    %v2637 = vunpack.c.h.b16 %v2358
    %v2638 = vunpack.c.l.b16 %v2359
    %v2639 = vunpack.c.h.b16 %v2359
    %v2640 = vunpack.c.l.b16 %v2360
    %v2641 = vunpack.c.h.b16 %v2360
    %v2642 = vunpack.c.l.b16 %v2361
    %v2643 = vunpack.c.h.b16 %v2361
    %v2644 = vunpack.c.l.b16 %v2362
    %v2645 = vunpack.c.h.b16 %v2362
    %v2646 = vunpack.c.l.b16 %v2363
    %v2647 = vunpack.c.h.b16 %v2363
    %v2648 = vunpack.c.l.b16 %v2364
    %v2649 = vunpack.c.h.b16 %v2364
    %v2650 = vunpack.c.l.b16 %v2365
    %v2651 = vunpack.c.h.b16 %v2365
    %v2652 = vunpack.c.l.b16 %v2366
    %v2653 = vunpack.c.h.b16 %v2366
    %v2654 = vunpack.c.l.b16 %v2367
    %v2655 = vunpack.c.h.b16 %v2367
    %v2656 = vunpack.c.l.b16 %v2368
    %v2657 = vunpack.c.h.b16 %v2368
    %v2658 = vunpack.c.l.b16 %v2369
    %v2659 = vunpack.c.h.b16 %v2369
    %v2660 = vunpack.c.l.b16 %v2370
    %v2661 = vunpack.c.h.b16 %v2370
    %v2662 = vunpack.c.l.b16 %v2371
    %v2663 = vunpack.c.h.b16 %v2371
    %v2664 = vunpack.c.l.b16 %v2372
    %v2665 = vunpack.c.h.b16 %v2372
    %v2666 = vunpack.c.l.b16 %v2373
    %v2667 = vunpack.c.h.b16 %v2373
    %v2668 = vunpack.c.l.b16 %v2374
    %v2669 = vunpack.c.h.b16 %v2374
    %v2670 = vunpack.c.l.b16 %v2375
    %v2671 = vunpack.c.h.b16 %v2375
    %v2672 = vunpack.c.l.b16 %v2376
    %v2673 = vunpack.c.h.b16 %v2376
    %v2674 = vunpack.c.l.b16 %v2377
    %v2675 = vunpack.c.h.b16 %v2377
    %v2676 = vunpack.c.l.b16 %v2378
    %v2677 = vunpack.c.h.b16 %v2378
    %v2678 = vunpack.c.l.b16 %v2379
    %v2679 = vunpack.c.h.b16 %v2379
    %v2680 = vunpack.c.l.b16 %v2380
    %v2681 = vunpack.c.h.b16 %v2380
    %v2682 = vunpack.c.l.b16 %v2381
    %v2683 = vunpack.c.h.b16 %v2381
    %v2684 = vunpack.c.l.b16 %v2382
    %v2685 = vunpack.c.h.b16 %v2382
    %v2686 = vunpack.c.l.b16 %v2383
    %v2687 = vunpack.c.h.b16 %v2383
    %v2688 = vunpack.c.l.b16 %v2384
    %v2689 = vunpack.c.h.b16 %v2384
    %v2690 = vunpack.c.l.b16 %v2385
    %v2691 = vunpack.c.h.b16 %v2385
    %v2692 = vunpack.c.l.b16 %v2386
    %v2693 = vunpack.c.h.b16 %v2386
    %v2694 = vunpack.c.l.b16 %v2387
    %v2695 = vunpack.c.h.b16 %v2387
    %v2696 = vunpack.c.l.b16 %v2388
    %v2697 = vunpack.c.h.b16 %v2388
    %v2698 = vunpack.c.l.b16 %v2389
    %v2699 = vunpack.c.h.b16 %v2389
    %v2700 = vunpack.c.l.b16 %v2390
    %v2701 = vunpack.c.h.b16 %v2390
    %v2702 = vunpack.c.l.b16 %v2391
    %v2703 = vunpack.c.h.b16 %v2391
    %v2704 = vunpack.c.l.b16 %v2392
    %v2705 = vunpack.c.h.b16 %v2392
    %v2706 = vunpack.c.l.b16 %v2393
    %v2707 = vunpack.c.h.b16 %v2393
    %v2708 = vunpack.c.l.b16 %v2394
    %v2709 = vunpack.c.h.b16 %v2394
    %v2710 = vunpack.c.l.b16 %v2395
    %v2711 = vunpack.c.h.b16 %v2395
    %v2712 = vunpack.c.l.b16 %v2396
    %v2713 = vunpack.c.h.b16 %v2396
    %v2714 = vunpack.c.l.b16 %v2397
    %v2715 = vunpack.c.h.b16 %v2397
    %v2716 = vunpack.c.l.b16 %v2398
    %v2717 = vunpack.c.h.b16 %v2398
    %v2718 = vunpack.c.l.b16 %v2399
    %v2719 = vunpack.c.h.b16 %v2399
    %v2720 = vunpack.c.l.b16 %v2400
    %v2721 = vunpack.c.h.b16 %v2400
    %v2722 = vunpack.c.l.b16 %v2401
    %v2723 = vunpack.c.h.b16 %v2401
    %v2724 = vunpack.c.l.b16 %v2402
    %v2725 = vunpack.c.h.b16 %v2402
    %v2726 = vunpack.c.l.b16 %v2403
    %v2727 = vunpack.c.h.b16 %v2403
    %v2728 = vunpack.c.l.b16 %v2404
    %v2729 = vunpack.c.h.b16 %v2404
    %v2730 = vunpack.c.l.b16 %v2405
    %v2731 = vunpack.c.h.b16 %v2405
    %v2732 = vunpack.c.l.b16 %v2406
    %v2733 = vunpack.c.h.b16 %v2406
    %v2734 = vunpack.c.l.b16 %v2407
    %v2735 = vunpack.c.h.b16 %v2407
    %v2736 = vunpack.c.l.b16 %v2408
    %v2737 = vunpack.c.h.b16 %v2408
    %v2738 = vunpack.c.l.b16 %v2409
    %v2739 = vunpack.c.h.b16 %v2409
    %v2740 = vunpack.c.l.b16 %v2410
    %v2741 = vunpack.c.h.b16 %v2410
    %v2742 = vunpack.c.l.b16 %v2411
    %v2743 = vunpack.c.h.b16 %v2411
    %v2744 = vunpack.c.l.b16 %v2412
    %v2745 = vunpack.c.h.b16 %v2412
    %v2746 = vunpack.c.l.b16 %v2413
    %v2747 = vunpack.c.h.b16 %v2413
    %v2748 = vunpack.c.l.b16 %v2414
    %v2749 = vunpack.c.h.b16 %v2414
    %v2750 = vunpack.c.l.b16 %v2415
    %v2751 = vunpack.c.h.b16 %v2415
    %v2752 = vunpack.c.l.b16 %v2416
    %v2753 = vunpack.c.h.b16 %v2416
    %v2754 = vunpack.c.l.b16 %v2417
    %v2755 = vunpack.c.h.b16 %v2417
    %v2756 = vunpack.c.l.b16 %v2418
    %v2757 = vunpack.c.h.b16 %v2418
    %v2758 = vunpack.c.l.b16 %v2419
    %v2759 = vunpack.c.h.b16 %v2419
    %v2760 = vunpack.c.l.b16 %v2420
    %v2761 = vunpack.c.h.b16 %v2420
    %v2762 = vunpack.c.l.b16 %v2421
    %v2763 = vunpack.c.h.b16 %v2421
    %v2764 = vunpack.c.l.b16 %v2422
    %v2765 = vunpack.c.h.b16 %v2422
    %v2766 = vunpack.c.l.b16 %v2423
    %v2767 = vunpack.c.h.b16 %v2423
    %v2768 = vunpack.c.l.b16 %v2424
    %v2769 = vunpack.c.h.b16 %v2424
    %v2770 = vunpack.c.l.b16 %v2425
    %v2771 = vunpack.c.h.b16 %v2425
    %v2772 = vunpack.c.l.b16 %v2426
    %v2773 = vunpack.c.h.b16 %v2426
    %v2774 = vunpack.c.l.b16 %v2427
    %v2775 = vunpack.c.h.b16 %v2427
    %v2776 = vunpack.c.l.b16 %v2428
    %v2777 = vunpack.c.h.b16 %v2428
    %v2778 = vunpack.c.l.b16 %v2429
    %v2779 = vunpack.c.h.b16 %v2429
    %v2780 = vunpack.c.l.b16 %v2430
    %v2781 = vunpack.c.h.b16 %v2430
    %v2782 = vunpack.c.l.b16 %v2431
    %v2783 = vunpack.c.h.b16 %v2431
    %v2784 = vunpack.c.l.b16 %v2432
    %v2785 = vunpack.c.h.b16 %v2432
    %v2786 = vunpack.c.l.b16 %v2433
    %v2787 = vunpack.c.h.b16 %v2433
    %v2788 = vunpack.c.l.b16 %v2434
    %v2789 = vunpack.c.h.b16 %v2434
    %v2790 = vunpack.c.l.b16 %v2435
    %v2791 = vunpack.c.h.b16 %v2435
    %v2792 = vunpack.c.l.b16 %v2436
    %v2793 = vunpack.c.h.b16 %v2436
    %v2794 = vunpack.c.l.b16 %v2437
    %v2795 = vunpack.c.h.b16 %v2437
    %v2796 = vunpack.c.l.b16 %v2438
    %v2797 = vunpack.c.h.b16 %v2438
    %v2798 = vunpack.c.l.b16 %v2439
    %v2799 = vunpack.c.h.b16 %v2439
    %v2800 = vunpack.c.l.b16 %v2440
    %v2801 = vunpack.c.h.b16 %v2440
    %v2802 = vunpack.c.l.b16 %v2441
    %v2803 = vunpack.c.h.b16 %v2441
    %v2804 = vunpack.c.l.b16 %v2442
    %v2805 = vunpack.c.h.b16 %v2442
    %v2806 = vunpack.c.l.b16 %v2443
    %v2807 = vunpack.c.h.b16 %v2443
    %v2808 = vunpack.c.l.b16 %v2444
    %v2809 = vunpack.c.h.b16 %v2444
    %v2810 = vunpack.c.l.b16 %v2445
    %v2811 = vunpack.c.h.b16 %v2445
    %v2812 = vunpack.c.l.b16 %v2446
    %v2813 = vunpack.c.h.b16 %v2446
    %v2814 = vunpack.c.l.b16 %v2447
    %v2815 = vunpack.c.h.b16 %v2447
    %v2816 = vunpack.c.l.b16 %v2448
    %v2817 = vunpack.c.h.b16 %v2448
    %v2818 = vunpack.c.l.b16 %v2449
    %v2819 = vunpack.c.h.b16 %v2449
    %v2820 = vunpack.c.l.b16 %v2450
    %v2821 = vunpack.c.h.b16 %v2450
    %v2822 = vunpack.c.l.b16 %v2451
    %v2823 = vunpack.c.h.b16 %v2451
    %v2824 = vunpack.c.l.b16 %v2452
    %v2825 = vunpack.c.h.b16 %v2452
    %v2826 = vunpack.c.l.b16 %v2453
    %v2827 = vunpack.c.h.b16 %v2453
    %v2828 = vunpack.c.l.b16 %v2454
    %v2829 = vunpack.c.h.b16 %v2454
    %v2830 = vunpack.c.l.b16 %v2455
    %v2831 = vunpack.c.h.b16 %v2455
    %v2832 = vunpack.c.l.b16 %v2456
    %v2833 = vunpack.c.h.b16 %v2456
    %v2834 = vunpack.c.l.b16 %v2457
    %v2835 = vunpack.c.h.b16 %v2457
    %v2836 = vunpack.c.l.b16 %v2458
    %v2837 = vunpack.c.h.b16 %v2458
    %v2838 = vunpack.c.l.b16 %v2459
    %v2839 = vunpack.c.h.b16 %v2459
    %v2840 = vunpack.c.l.b16 %v2460
    %v2841 = vunpack.c.h.b16 %v2460
    %v2842 = vunpack.c.l.b16 %v2461
    %v2843 = vunpack.c.h.b16 %v2461
    %v2844 = vunpack.c.l.b16 %v2462
    %v2845 = vunpack.c.h.b16 %v2462
    %v2846 = vunpack.c.l.b16 %v2463
    %v2847 = vunpack.c.h.b16 %v2463
    %v2848 = vunpack.c.l.b16 %v2464
    %v2849 = vunpack.c.h.b16 %v2464
    %v2850 = vunpack.c.l.b16 %v2465
    %v2851 = vunpack.c.h.b16 %v2465
    %v2852 = vunpack.c.l.b16 %v2466
    %v2853 = vunpack.c.h.b16 %v2466
    %v2854 = vunpack.c.l.b16 %v2467
    %v2855 = vunpack.c.h.b16 %v2467
    %v2856 = vunpack.c.l.b16 %v2468
    %v2857 = vunpack.c.h.b16 %v2468
    %v2858 = vunpack.c.l.b16 %v2469
    %v2859 = vunpack.c.h.b16 %v2469
    %v2860 = vunpack.c.l.b16 %v2470
    %v2861 = vunpack.c.h.b16 %v2470
    %v2862 = vunpack.c.l.b16 %v2471
    %v2863 = vunpack.c.h.b16 %v2471
    %v2864 = vunpack.c.l.b16 %v2472
    %v2865 = vunpack.c.h.b16 %v2472
    %v2866 = vunpack.c.l.b16 %v2473
    %v2867 = vunpack.c.h.b16 %v2473
    %v2868 = vunpack.c.l.b16 %v2474
    %v2869 = vunpack.c.h.b16 %v2474
    %v2870 = vunpack.c.l.b16 %v2475
    %v2871 = vunpack.c.h.b16 %v2475
    %v2872 = vunpack.c.l.b16 %v2476
    %v2873 = vunpack.c.h.b16 %v2476
    %v2874 = vunpack.c.l.b16 %v2477
    %v2875 = vunpack.c.h.b16 %v2477
    %v2876 = vunpack.c.l.b16 %v2478
    %v2877 = vunpack.c.h.b16 %v2478
    %v2878 = vunpack.c.l.b16 %v2479
    %v2879 = vunpack.c.h.b16 %v2479
    %v2880 = vunpack.c.l.b16 %v2480
    %v2881 = vunpack.c.h.b16 %v2480
    %v2882 = vunpack.c.l.b16 %v2481
    %v2883 = vunpack.c.h.b16 %v2481
    %v2884 = vunpack.c.l.b16 %v2482
    %v2885 = vunpack.c.h.b16 %v2482
    %v2886 = vunpack.c.l.b16 %v2483
    %v2887 = vunpack.c.h.b16 %v2483
    %v2888 = vunpack.c.l.b16 %v2484
    %v2889 = vunpack.c.h.b16 %v2484
    %v2890 = vunpack.c.l.b16 %v2485
    %v2891 = vunpack.c.h.b16 %v2485
    %v2892 = vpack.c.b16 %v2640, %v2636
    %v2893 = vpack.c.b16 %v2641, %v2637
    %v2894 = vpack.c.b16 %v2642, %v2638
    %v2895 = vpack.c.b16 %v2643, %v2639
    %v2896 = vpack.c.b16 %v2648, %v2644
    %v2897 = vpack.c.b16 %v2649, %v2645
    %v2898 = vpack.c.b16 %v2650, %v2646
    %v2899 = vpack.c.b16 %v2651, %v2647
    %v2900 = vpack.c.b16 %v2656, %v2652
    %v2901 = vpack.c.b16 %v2657, %v2653
    %v2902 = vpack.c.b16 %v2658, %v2654
    %v2903 = vpack.c.b16 %v2659, %v2655
    %v2904 = vpack.c.b16 %v2664, %v2660
    %v2905 = vpack.c.b16 %v2665, %v2661
    %v2906 = vpack.c.b16 %v2666, %v2662
    %v2907 = vpack.c.b16 %v2667, %v2663
    %v2908 = vpack.c.b16 %v2672, %v2668
    %v2909 = vpack.c.b16 %v2673, %v2669
    %v2910 = vpack.c.b16 %v2674, %v2670
    %v2911 = vpack.c.b16 %v2675, %v2671
    %v2912 = vpack.c.b16 %v2680, %v2676
    %v2913 = vpack.c.b16 %v2681, %v2677
    %v2914 = vpack.c.b16 %v2682, %v2678
    %v2915 = vpack.c.b16 %v2683, %v2679
    %v2916 = vpack.c.b16 %v2688, %v2684
    %v2917 = vpack.c.b16 %v2689, %v2685
    %v2918 = vpack.c.b16 %v2690, %v2686
    %v2919 = vpack.c.b16 %v2691, %v2687
    %v2920 = vpack.c.b16 %v2696, %v2692
    %v2921 = vpack.c.b16 %v2697, %v2693
    %v2922 = vpack.c.b16 %v2698, %v2694
    %v2923 = vpack.c.b16 %v2699, %v2695
    %v2924 = vpack.c.b16 %v2704, %v2700
    %v2925 = vpack.c.b16 %v2705, %v2701
    %v2926 = vpack.c.b16 %v2706, %v2702
    %v2927 = vpack.c.b16 %v2707, %v2703
    %v2928 = vpack.c.b16 %v2712, %v2708
    %v2929 = vpack.c.b16 %v2713, %v2709
    %v2930 = vpack.c.b16 %v2714, %v2710
    %v2931 = vpack.c.b16 %v2715, %v2711
    %v2932 = vpack.c.b16 %v2720, %v2716
    %v2933 = vpack.c.b16 %v2721, %v2717
    %v2934 = vpack.c.b16 %v2722, %v2718
    %v2935 = vpack.c.b16 %v2723, %v2719
    %v2936 = vpack.c.b16 %v2728, %v2724
    %v2937 = vpack.c.b16 %v2729, %v2725
    %v2938 = vpack.c.b16 %v2730, %v2726
    %v2939 = vpack.c.b16 %v2731, %v2727
    %v2940 = vpack.c.b16 %v2736, %v2732
    %v2941 = vpack.c.b16 %v2737, %v2733
    %v2942 = vpack.c.b16 %v2738, %v2734
    %v2943 = vpack.c.b16 %v2739, %v2735
    %v2944 = vpack.c.b16 %v2744, %v2740
    %v2945 = vpack.c.b16 %v2745, %v2741
    %v2946 = vpack.c.b16 %v2746, %v2742
    %v2947 = vpack.c.b16 %v2747, %v2743
    %v2948 = vpack.c.b16 %v2752, %v2748
    %v2949 = vpack.c.b16 %v2753, %v2749
    %v2950 = vpack.c.b16 %v2754, %v2750
    %v2951 = vpack.c.b16 %v2755, %v2751
    %v2952 = vpack.c.b16 %v2760, %v2756
    %v2953 = vpack.c.b16 %v2761, %v2757
    %v2954 = vpack.c.b16 %v2762, %v2758
    %v2955 = vpack.c.b16 %v2763, %v2759
    %v2956 = vpack.c.b16 %v2768, %v2764
    %v2957 = vpack.c.b16 %v2769, %v2765
    %v2958 = vpack.c.b16 %v2770, %v2766
    %v2959 = vpack.c.b16 %v2771, %v2767
    %v2960 = vpack.c.b16 %v2776, %v2772
    %v2961 = vpack.c.b16 %v2777, %v2773
    %v2962 = vpack.c.b16 %v2778, %v2774
    %v2963 = vpack.c.b16 %v2779, %v2775
    %v2964 = vpack.c.b16 %v2784, %v2780
    %v2965 = vpack.c.b16 %v2785, %v2781
    %v2966 = vpack.c.b16 %v2786, %v2782
    %v2967 = vpack.c.b16 %v2787, %v2783
    %v2968 = vpack.c.b16 %v2792, %v2788
    %v2969 = vpack.c.b16 %v2793, %v2789
    %v2970 = vpack.c.b16 %v2794, %v2790
    %v2971 = vpack.c.b16 %v2795, %v2791
    %v2972 = vpack.c.b16 %v2800, %v2796
    %v2973 = vpack.c.b16 %v2801, %v2797
    %v2974 = vpack.c.b16 %v2802, %v2798
    %v2975 = vpack.c.b16 %v2803, %v2799
    %v2976 = vpack.c.b16 %v2808, %v2804
    %v2977 = vpack.c.b16 %v2809, %v2805
    %v2978 = vpack.c.b16 %v2810, %v2806
    %v2979 = vpack.c.b16 %v2811, %v2807
    %v2980 = vpack.c.b16 %v2816, %v2812
    %v2981 = vpack.c.b16 %v2817, %v2813
    %v2982 = vpack.c.b16 %v2818, %v2814
    %v2983 = vpack.c.b16 %v2819, %v2815
    %v2984 = vpack.c.b16 %v2824, %v2820
    %v2985 = vpack.c.b16 %v2825, %v2821
    %v2986 = vpack.c.b16 %v2826, %v2822
    %v2987 = vpack.c.b16 %v2827, %v2823
    %v2988 = vpack.c.b16 %v2832, %v2828
    %v2989 = vpack.c.b16 %v2833, %v2829
    %v2990 = vpack.c.b16 %v2834, %v2830
    %v2991 = vpack.c.b16 %v2835, %v2831
    %v2992 = vpack.c.b16 %v2840, %v2836
    %v2993 = vpack.c.b16 %v2841, %v2837
    %v2994 = vpack.c.b16 %v2842, %v2838
    %v2995 = vpack.c.b16 %v2843, %v2839
    %v2996 = vpack.c.b16 %v2848, %v2844
    %v2997 = vpack.c.b16 %v2849, %v2845
    %v2998 = vpack.c.b16 %v2850, %v2846
    %v2999 = vpack.c.b16 %v2851, %v2847
    %v3000 = vpack.c.b16 %v2856, %v2852
    %v3001 = vpack.c.b16 %v2857, %v2853
    %v3002 = vpack.c.b16 %v2858, %v2854
    %v3003 = vpack.c.b16 %v2859, %v2855
    %v3004 = vpack.c.b16 %v2864, %v2860
    %v3005 = vpack.c.b16 %v2865, %v2861
    %v3006 = vpack.c.b16 %v2866, %v2862
    %v3007 = vpack.c.b16 %v2867, %v2863
    %v3008 = vpack.c.b16 %v2872, %v2868
    %v3009 = vpack.c.b16 %v2873, %v2869
    %v3010 = vpack.c.b16 %v2874, %v2870
    %v3011 = vpack.c.b16 %v2875, %v2871
    %v3012 = vpack.c.b16 %v2880, %v2876
    %v3013 = vpack.c.b16 %v2881, %v2877
    %v3014 = vpack.c.b16 %v2882, %v2878
    %v3015 = vpack.c.b16 %v2883, %v2879
    %v3016 = vpack.c.b16 %v2888, %v2884
    %v3017 = vpack.c.b16 %v2889, %v2885
    %v3018 = vpack.c.b16 %v2890, %v2886
    %v3019 = vpack.c.b16 %v2891, %v2887
    %3148 = vmatprep.subr.bf16.mxu0 %v2893
    %3149 = vmatpush1.bf16.msra.mxu0 %v2892
    %3150 = vmatprep.subr.bf16.mxu0 %v2897
    %3151 = vmatpush1.bf16.msra.mxu0 %v2896
    %3152 = vmatprep.subr.bf16.mxu0 %v2901
    %3153 = vmatpush1.bf16.msra.mxu0 %v2900
    %3154 = vmatprep.subr.bf16.mxu0 %v2905
    %3155 = vmatpush1.bf16.msra.mxu0 %v2904
    %3156 = vmatprep.subr.bf16.mxu0 %v2909
    %3157 = vmatpush1.bf16.msra.mxu0 %v2908
    %3158 = vmatprep.subr.bf16.mxu0 %v2913
    %3159 = vmatpush1.bf16.msra.mxu0 %v2912
    %3160 = vmatprep.subr.bf16.mxu0 %v2917
    %3161 = vmatpush1.bf16.msra.mxu0 %v2916
    %3162 = vmatprep.subr.bf16.mxu0 %v2921
    %3163 = vmatpush1.bf16.msra.mxu0 %v2920
    %3164 = vmatprep.subr.bf16.mxu0 %v2925
    %3165 = vmatpush1.bf16.msra.mxu0 %v2924
    %3166 = vmatprep.subr.bf16.mxu0 %v2929
    %3167 = vmatpush1.bf16.msra.mxu0 %v2928
    %3168 = vmatprep.subr.bf16.mxu0 %v2933
    %3169 = vmatpush1.bf16.msra.mxu0 %v2932
    %3170 = vmatprep.subr.bf16.mxu0 %v2937
    %3171 = vmatpush1.bf16.msra.mxu0 %v2936
    %3172 = vmatprep.subr.bf16.mxu0 %v2941
    %3173 = vmatpush1.bf16.msra.mxu0 %v2940
    %3174 = vmatprep.subr.bf16.mxu0 %v2945
    %3175 = vmatpush1.bf16.msra.mxu0 %v2944
    %3176 = vmatprep.subr.bf16.mxu0 %v2949
    %3177 = vmatpush1.bf16.msra.mxu0 %v2948
    %3178 = vmatprep.subr.bf16.mxu0 %v2953
    %3179 = vmatpush1.bf16.msra.mxu0 %v2952
    %3180 = vmatprep.mubr.bf16.mxu0 %v2355
    %3181 = vmatmul.mubr.bf16.gmra.mrb[0].mxu0 %v2354
    %v3182 = vpop.f32.mrb[0].mxu0
    %v3183 = vadd.f32 %v2491, %v3182
    %v3184 = vpop.f32.mrb[0].mxu0
    %v3185 = vadd.f32 %v2495, %v3184
    %v3186 = vpop.f32.mrb[0].mxu0
    %v3187 = vpop.f32.mrb[0].mxu0
    %3188 = vdwg.mxu0
    %3189 = vmatprep.subr.bf16.mxu0 %v2957
    %3190 = vmatpush1.bf16.msra.mxu0 %v2956
    %3191 = vmatprep.subr.bf16.mxu0 %v2961
    %3192 = vmatpush1.bf16.msra.mxu0 %v2960
    %3193 = vmatprep.subr.bf16.mxu0 %v2965
    %3194 = vmatpush1.bf16.msra.mxu0 %v2964
    %3195 = vmatprep.subr.bf16.mxu0 %v2969
    %3196 = vmatpush1.bf16.msra.mxu0 %v2968
    %3197 = vmatprep.subr.bf16.mxu0 %v2973
    %3198 = vmatpush1.bf16.msra.mxu0 %v2972
    %3199 = vmatprep.subr.bf16.mxu0 %v2977
    %3200 = vmatpush1.bf16.msra.mxu0 %v2976
    %3201 = vmatprep.subr.bf16.mxu0 %v2981
    %3202 = vmatpush1.bf16.msra.mxu0 %v2980
    %3203 = vmatprep.subr.bf16.mxu0 %v2985
    %3204 = vmatpush1.bf16.msra.mxu0 %v2984
    %3205 = vmatprep.subr.bf16.mxu0 %v2989
    %3206 = vmatpush1.bf16.msra.mxu0 %v2988
    %3207 = vmatprep.subr.bf16.mxu0 %v2993
    %3208 = vmatpush1.bf16.msra.mxu0 %v2992
    %3209 = vmatprep.subr.bf16.mxu0 %v2997
    %3210 = vmatpush1.bf16.msra.mxu0 %v2996
    %3211 = vmatprep.subr.bf16.mxu0 %v3001
    %3212 = vmatpush1.bf16.msra.mxu0 %v3000
    %3213 = vmatprep.subr.bf16.mxu0 %v3005
    %3214 = vmatpush1.bf16.msra.mxu0 %v3004
    %3215 = vmatprep.subr.bf16.mxu0 %v3009
    %3216 = vmatpush1.bf16.msra.mxu0 %v3008
    %3217 = vmatprep.subr.bf16.mxu0 %v3013
    %3218 = vmatpush1.bf16.msra.mxu0 %v3012
    %3219 = vmatprep.subr.bf16.mxu0 %v3017
    %3220 = vmatpush1.bf16.msra.mxu0 %v3016
    %3221 = vmatprep.mubr.bf16.mxu0 %v2357
    %3222 = vmatmul.mubr.bf16.gmra.mrb[0].mxu0 %v2356
    %v3223 = vpop.f32.mrb[0].mxu0
    %v3224 = vadd.f32 %v3183, %v3223
    %v3225 = vpop.f32.mrb[0].mxu0
    %v3226 = vadd.f32 %v3185, %v3225
    %v3227 = vpop.f32.mrb[0].mxu0
    %v3228 = vpop.f32.mrb[0].mxu0
    %3229 = vdwg.mxu0
    %3230 = vmatprep.subr.bf16.mxu0 %v2895
    %3231 = vmatpush1.bf16.msra.mxu0 %v2894
    %3232 = vmatprep.subr.bf16.mxu0 %v2899
    %3233 = vmatpush1.bf16.msra.mxu0 %v2898
    %3234 = vmatprep.subr.bf16.mxu0 %v2903
    %3235 = vmatpush1.bf16.msra.mxu0 %v2902
    %3236 = vmatprep.subr.bf16.mxu0 %v2907
    %3237 = vmatpush1.bf16.msra.mxu0 %v2906
    %3238 = vmatprep.subr.bf16.mxu0 %v2911
    %3239 = vmatpush1.bf16.msra.mxu0 %v2910
    %3240 = vmatprep.subr.bf16.mxu0 %v2915
    %3241 = vmatpush1.bf16.msra.mxu0 %v2914
    %3242 = vmatprep.subr.bf16.mxu0 %v2919
    %3243 = vmatpush1.bf16.msra.mxu0 %v2918
    %3244 = vmatprep.subr.bf16.mxu0 %v2923
    %3245 = vmatpush1.bf16.msra.mxu0 %v2922
    %3246 = vmatprep.subr.bf16.mxu0 %v2927
    %3247 = vmatpush1.bf16.msra.mxu0 %v2926
    %3248 = vmatprep.subr.bf16.mxu0 %v2931
    %3249 = vmatpush1.bf16.msra.mxu0 %v2930
    %3250 = vmatprep.subr.bf16.mxu0 %v2935
    %3251 = vmatpush1.bf16.msra.mxu0 %v2934
    %3252 = vmatprep.subr.bf16.mxu0 %v2939
    %3253 = vmatpush1.bf16.msra.mxu0 %v2938
    %3254 = vmatprep.subr.bf16.mxu0 %v2943
    %3255 = vmatpush1.bf16.msra.mxu0 %v2942
    %3256 = vmatprep.subr.bf16.mxu0 %v2947
    %3257 = vmatpush1.bf16.msra.mxu0 %v2946
    %3258 = vmatprep.subr.bf16.mxu0 %v2951
    %3259 = vmatpush1.bf16.msra.mxu0 %v2950
    %3260 = vmatprep.subr.bf16.mxu0 %v2955
    %3261 = vmatpush1.bf16.msra.mxu0 %v2954
    %3262 = vmatprep.mubr.bf16.mxu0 %v2355
    %3263 = vmatmul.mubr.bf16.gmra.mrb[0].mxu0 %v2354
    %v3264 = vpop.f32.mrb[0].mxu0
    %v3265 = vadd.f32 %v2499, %v3264
    %v3266 = vpop.f32.mrb[0].mxu0
    %v3267 = vadd.f32 %v2503, %v3266
    %v3268 = vpop.f32.mrb[0].mxu0
    %v3269 = vpop.f32.mrb[0].mxu0
    %3270 = vdwg.mxu0
    %3271 = vmatprep.subr.bf16.mxu0 %v2959
    %3272 = vmatpush1.bf16.msra.mxu0 %v2958
    %3273 = vmatprep.subr.bf16.mxu0 %v2963
    %3274 = vmatpush1.bf16.msra.mxu0 %v2962
    %3275 = vmatprep.subr.bf16.mxu0 %v2967
    %3276 = vmatpush1.bf16.msra.mxu0 %v2966
    %3277 = vmatprep.subr.bf16.mxu0 %v2971
    %3278 = vmatpush1.bf16.msra.mxu0 %v2970
    %3279 = vmatprep.subr.bf16.mxu0 %v2975
    %3280 = vmatpush1.bf16.msra.mxu0 %v2974
    %3281 = vmatprep.subr.bf16.mxu0 %v2979
    %3282 = vmatpush1.bf16.msra.mxu0 %v2978
    %3283 = vmatprep.subr.bf16.mxu0 %v2983
    %3284 = vmatpush1.bf16.msra.mxu0 %v2982
    %3285 = vmatprep.subr.bf16.mxu0 %v2987
    %3286 = vmatpush1.bf16.msra.mxu0 %v2986
    %3287 = vmatprep.subr.bf16.mxu0 %v2991
    %3288 = vmatpush1.bf16.msra.mxu0 %v2990
    %3289 = vmatprep.subr.bf16.mxu0 %v2995
    %3290 = vmatpush1.bf16.msra.mxu0 %v2994
    %3291 = vmatprep.subr.bf16.mxu0 %v2999
    %3292 = vmatpush1.bf16.msra.mxu0 %v2998
    %3293 = vmatprep.subr.bf16.mxu0 %v3003
    %3294 = vmatpush1.bf16.msra.mxu0 %v3002
    %3295 = vmatprep.subr.bf16.mxu0 %v3007
    %3296 = vmatpush1.bf16.msra.mxu0 %v3006
    %3297 = vmatprep.subr.bf16.mxu0 %v3011
    %3298 = vmatpush1.bf16.msra.mxu0 %v3010
    %3299 = vmatprep.subr.bf16.mxu0 %v3015
    %3300 = vmatpush1.bf16.msra.mxu0 %v3014
    %3301 = vmatprep.subr.bf16.mxu0 %v3019
    %3302 = vmatpush1.bf16.msra.mxu0 %v3018
    %3303 = vmatprep.mubr.bf16.mxu0 %v2357
    %3304 = vmatmul.mubr.bf16.gmra.mrb[0].mxu0 %v2356
    %v3305 = vpop.f32.mrb[0].mxu0
    %v3306 = vadd.f32 %v3265, %v3305
    %v3307 = vpop.f32.mrb[0].mxu0
    %v3308 = vadd.f32 %v3267, %v3307
    %v3309 = vpop.f32.mrb[0].mxu0
    %v3310 = vpop.f32.mrb[0].mxu0
    %3311 = vdwg.mxu0
    %v3312 = vmax.f32 %v3224, 0.0
    %v3313 = vmax.f32 %v3226, 0.0
    %v3314 = vmax.f32 %v3306, 0.0
    %v3315 = vmax.f32 %v3308, 0.0
    %v3316 = vpack.c.bf16 %v3312, %v3312
    %v3317 = vpack.c.bf16 %v3313, %v3313
    %v3318 = vpack.c.bf16 %v3314, %v3314
    %v3319 = vpack.c.bf16 %v3315, %v3315
    %v3320 = vld [vmem:[#allocation9] sm:$0xff]
    %v3321 = vld [vmem:[#allocation9 + $0x8] sm:$0xff]
    %v3322 = vld [vmem:[#allocation9 + $0x10] sm:$0xff]
    %v3323 = vld [vmem:[#allocation9 + $0x18] sm:$0xff]
    %v3324 = vld [vmem:[#allocation9 + $0x20] sm:$0xff]
    %v3325 = vld [vmem:[#allocation9 + $0x28] sm:$0xff]
    %v3326 = vld [vmem:[#allocation9 + $0x30] sm:$0xff]
    %v3327 = vld [vmem:[#allocation9 + $0x38] sm:$0xff]
    %v3328 = vld [vmem:[#allocation9 + $0x40] sm:$0xff]
    %v3329 = vld [vmem:[#allocation9 + $0x48] sm:$0xff]
    %v3330 = vld [vmem:[#allocation9 + $0x50] sm:$0xff]
    %v3331 = vld [vmem:[#allocation9 + $0x58] sm:$0xff]
    %v3332 = vld [vmem:[#allocation9 + $0x60] sm:$0xff]
    %v3333 = vld [vmem:[#allocation9 + $0x68] sm:$0xff]
    %v3334 = vld [vmem:[#allocation9 + $0x70] sm:$0xff]
    %v3335 = vld [vmem:[#allocation9 + $0x78] sm:$0xff]
    %v3336 = vld [vmem:[#allocation9 + $0x80] sm:$0xff]
    %v3337 = vld [vmem:[#allocation9 + $0x88] sm:$0xff]
    %v3338 = vld [vmem:[#allocation9 + $0x90] sm:$0xff]
    %v3339 = vld [vmem:[#allocation9 + $0x98] sm:$0xff]
    %v3340 = vld [vmem:[#allocation9 + $0xa0] sm:$0xff]
    %v3341 = vld [vmem:[#allocation9 + $0xa8] sm:$0xff]
    %v3342 = vld [vmem:[#allocation9 + $0xb0] sm:$0xff]
    %v3343 = vld [vmem:[#allocation9 + $0xb8] sm:$0xff]
    %v3344 = vld [vmem:[#allocation9 + $0xc0] sm:$0xff]
    %v3345 = vld [vmem:[#allocation9 + $0xc8] sm:$0xff]
    %v3346 = vld [vmem:[#allocation9 + $0xd0] sm:$0xff]
    %v3347 = vld [vmem:[#allocation9 + $0xd8] sm:$0xff]
    %v3348 = vld [vmem:[#allocation9 + $0xe0] sm:$0xff]
    %v3349 = vld [vmem:[#allocation9 + $0xe8] sm:$0xff]
    %v3350 = vld [vmem:[#allocation9 + $0xf0] sm:$0xff]
    %v3351 = vld [vmem:[#allocation9 + $0xf8] sm:$0xff]
    %v3352 = vld [vmem:[#allocation9 + $0x100] sm:$0xff]
    %v3353 = vld [vmem:[#allocation9 + $0x108] sm:$0xff]
    %v3354 = vld [vmem:[#allocation9 + $0x110] sm:$0xff]
    %v3355 = vld [vmem:[#allocation9 + $0x118] sm:$0xff]
    %v3356 = vld [vmem:[#allocation9 + $0x120] sm:$0xff]
    %v3357 = vld [vmem:[#allocation9 + $0x128] sm:$0xff]
    %v3358 = vld [vmem:[#allocation9 + $0x130] sm:$0xff]
    %v3359 = vld [vmem:[#allocation9 + $0x138] sm:$0xff]
    %v3360 = vld [vmem:[#allocation9 + $0x140] sm:$0xff]
    %v3361 = vld [vmem:[#allocation9 + $0x148] sm:$0xff]
    %v3362 = vld [vmem:[#allocation9 + $0x150] sm:$0xff]
    %v3363 = vld [vmem:[#allocation9 + $0x158] sm:$0xff]
    %v3364 = vld [vmem:[#allocation9 + $0x160] sm:$0xff]
    %v3365 = vld [vmem:[#allocation9 + $0x168] sm:$0xff]
    %v3366 = vld [vmem:[#allocation9 + $0x170] sm:$0xff]
    %v3367 = vld [vmem:[#allocation9 + $0x178] sm:$0xff]
    %v3368 = vld [vmem:[#allocation9 + $0x180] sm:$0xff]
    %v3369 = vld [vmem:[#allocation9 + $0x188] sm:$0xff]
    %v3370 = vld [vmem:[#allocation9 + $0x190] sm:$0xff]
    %v3371 = vld [vmem:[#allocation9 + $0x198] sm:$0xff]
    %v3372 = vld [vmem:[#allocation9 + $0x1a0] sm:$0xff]
    %v3373 = vld [vmem:[#allocation9 + $0x1a8] sm:$0xff]
    %v3374 = vld [vmem:[#allocation9 + $0x1b0] sm:$0xff]
    %v3375 = vld [vmem:[#allocation9 + $0x1b8] sm:$0xff]
    %v3376 = vld [vmem:[#allocation9 + $0x1c0] sm:$0xff]
    %v3377 = vld [vmem:[#allocation9 + $0x1c8] sm:$0xff]
    %v3378 = vld [vmem:[#allocation9 + $0x1d0] sm:$0xff]
    %v3379 = vld [vmem:[#allocation9 + $0x1d8] sm:$0xff]
    %v3380 = vld [vmem:[#allocation9 + $0x1e0] sm:$0xff]
    %v3381 = vld [vmem:[#allocation9 + $0x1e8] sm:$0xff]
    %v3382 = vld [vmem:[#allocation9 + $0x1f0] sm:$0xff]
    %v3383 = vld [vmem:[#allocation9 + $0x1f8] sm:$0xff]
    %v3384 = vld [vmem:[#allocation9 + $0x200] sm:$0xff]
    %v3385 = vld [vmem:[#allocation9 + $0x208] sm:$0xff]
    %v3386 = vld [vmem:[#allocation9 + $0x210] sm:$0xff]
    %v3387 = vld [vmem:[#allocation9 + $0x218] sm:$0xff]
    %v3388 = vld [vmem:[#allocation9 + $0x220] sm:$0xff]
    %v3389 = vld [vmem:[#allocation9 + $0x228] sm:$0xff]
    %v3390 = vld [vmem:[#allocation9 + $0x230] sm:$0xff]
    %v3391 = vld [vmem:[#allocation9 + $0x238] sm:$0xff]
    %v3392 = vld [vmem:[#allocation9 + $0x240] sm:$0xff]
    %v3393 = vld [vmem:[#allocation9 + $0x248] sm:$0xff]
    %v3394 = vld [vmem:[#allocation9 + $0x250] sm:$0xff]
    %v3395 = vld [vmem:[#allocation9 + $0x258] sm:$0xff]
    %v3396 = vld [vmem:[#allocation9 + $0x260] sm:$0xff]
    %v3397 = vld [vmem:[#allocation9 + $0x268] sm:$0xff]
    %v3398 = vld [vmem:[#allocation9 + $0x270] sm:$0xff]
    %v3399 = vld [vmem:[#allocation9 + $0x278] sm:$0xff]
    %v3400 = vld [vmem:[#allocation9 + $0x280] sm:$0xff]
    %v3401 = vld [vmem:[#allocation9 + $0x288] sm:$0xff]
    %v3402 = vld [vmem:[#allocation9 + $0x290] sm:$0xff]
    %v3403 = vld [vmem:[#allocation9 + $0x298] sm:$0xff]
    %v3404 = vld [vmem:[#allocation9 + $0x2a0] sm:$0xff]
    %v3405 = vld [vmem:[#allocation9 + $0x2a8] sm:$0xff]
    %v3406 = vld [vmem:[#allocation9 + $0x2b0] sm:$0xff]
    %v3407 = vld [vmem:[#allocation9 + $0x2b8] sm:$0xff]
    %v3408 = vld [vmem:[#allocation9 + $0x2c0] sm:$0xff]
    %v3409 = vld [vmem:[#allocation9 + $0x2c8] sm:$0xff]
    %v3410 = vld [vmem:[#allocation9 + $0x2d0] sm:$0xff]
    %v3411 = vld [vmem:[#allocation9 + $0x2d8] sm:$0xff]
    %v3412 = vld [vmem:[#allocation9 + $0x2e0] sm:$0xff]
    %v3413 = vld [vmem:[#allocation9 + $0x2e8] sm:$0xff]
    %v3414 = vld [vmem:[#allocation9 + $0x2f0] sm:$0xff]
    %v3415 = vld [vmem:[#allocation9 + $0x2f8] sm:$0xff]
    %v3416 = vld [vmem:[#allocation9 + $0x300] sm:$0xff]
    %v3417 = vld [vmem:[#allocation9 + $0x308] sm:$0xff]
    %v3418 = vld [vmem:[#allocation9 + $0x310] sm:$0xff]
    %v3419 = vld [vmem:[#allocation9 + $0x318] sm:$0xff]
    %v3420 = vld [vmem:[#allocation9 + $0x320] sm:$0xff]
    %v3421 = vld [vmem:[#allocation9 + $0x328] sm:$0xff]
    %v3422 = vld [vmem:[#allocation9 + $0x330] sm:$0xff]
    %v3423 = vld [vmem:[#allocation9 + $0x338] sm:$0xff]
    %v3424 = vld [vmem:[#allocation9 + $0x340] sm:$0xff]
    %v3425 = vld [vmem:[#allocation9 + $0x348] sm:$0xff]
    %v3426 = vld [vmem:[#allocation9 + $0x350] sm:$0xff]
    %v3427 = vld [vmem:[#allocation9 + $0x358] sm:$0xff]
    %v3428 = vld [vmem:[#allocation9 + $0x360] sm:$0xff]
    %v3429 = vld [vmem:[#allocation9 + $0x368] sm:$0xff]
    %v3430 = vld [vmem:[#allocation9 + $0x370] sm:$0xff]
    %v3431 = vld [vmem:[#allocation9 + $0x378] sm:$0xff]
    %v3432 = vld [vmem:[#allocation9 + $0x380] sm:$0xff]
    %v3433 = vld [vmem:[#allocation9 + $0x388] sm:$0xff]
    %v3434 = vld [vmem:[#allocation9 + $0x390] sm:$0xff]
    %v3435 = vld [vmem:[#allocation9 + $0x398] sm:$0xff]
    %v3436 = vld [vmem:[#allocation9 + $0x3a0] sm:$0xff]
    %v3437 = vld [vmem:[#allocation9 + $0x3a8] sm:$0xff]
    %v3438 = vld [vmem:[#allocation9 + $0x3b0] sm:$0xff]
    %v3439 = vld [vmem:[#allocation9 + $0x3b8] sm:$0xff]
    %v3440 = vld [vmem:[#allocation9 + $0x3c0] sm:$0xff]
    %v3441 = vld [vmem:[#allocation9 + $0x3c8] sm:$0xff]
    %v3442 = vld [vmem:[#allocation9 + $0x3d0] sm:$0xff]
    %v3443 = vld [vmem:[#allocation9 + $0x3d8] sm:$0xff]
    %v3444 = vld [vmem:[#allocation9 + $0x3e0] sm:$0xff]
    %v3445 = vld [vmem:[#allocation9 + $0x3e8] sm:$0xff]
    %v3446 = vld [vmem:[#allocation9 + $0x3f0] sm:$0xff]
    %v3447 = vld [vmem:[#allocation9 + $0x3f8] sm:$0xff]
    %v3448 = vld [vmem:[%s9] sm:$0xf]
    %v3450 = vlaneseq
    %v3451 = vshrl.u32 %v3450, 7
    %v3452 = vsub.s32 0, %v3451
    %v3453 = vrot.slane %v3448, %v3452
    %v3454 = vlaneseq
    %v3455 = vshrl.u32 %v3454, 7
    %v3456 = vsub.s32 1, %v3455
    %v3457 = vrot.slane %v3448, %v3456
    %v3458 = vlaneseq
    %v3459 = vshrl.u32 %v3458, 7
    %v3460 = vsub.s32 2, %v3459
    %v3461 = vrot.slane %v3448, %v3460
    %v3462 = vlaneseq
    %v3463 = vshrl.u32 %v3462, 7
    %v3464 = vsub.s32 3, %v3463
    %v3465 = vrot.slane %v3448, %v3464
    %v3598 = vunpack.c.l.b16 %v3320
    %v3599 = vunpack.c.h.b16 %v3320
    %v3600 = vunpack.c.l.b16 %v3321
    %v3601 = vunpack.c.h.b16 %v3321
    %v3602 = vunpack.c.l.b16 %v3322
    %v3603 = vunpack.c.h.b16 %v3322
    %v3604 = vunpack.c.l.b16 %v3323
    %v3605 = vunpack.c.h.b16 %v3323
    %v3606 = vunpack.c.l.b16 %v3324
    %v3607 = vunpack.c.h.b16 %v3324
    %v3608 = vunpack.c.l.b16 %v3325
    %v3609 = vunpack.c.h.b16 %v3325
    %v3610 = vunpack.c.l.b16 %v3326
    %v3611 = vunpack.c.h.b16 %v3326
    %v3612 = vunpack.c.l.b16 %v3327
    %v3613 = vunpack.c.h.b16 %v3327
    %v3614 = vunpack.c.l.b16 %v3328
    %v3615 = vunpack.c.h.b16 %v3328
    %v3616 = vunpack.c.l.b16 %v3329
    %v3617 = vunpack.c.h.b16 %v3329
    %v3618 = vunpack.c.l.b16 %v3330
    %v3619 = vunpack.c.h.b16 %v3330
    %v3620 = vunpack.c.l.b16 %v3331
    %v3621 = vunpack.c.h.b16 %v3331
    %v3622 = vunpack.c.l.b16 %v3332
    %v3623 = vunpack.c.h.b16 %v3332
    %v3624 = vunpack.c.l.b16 %v3333
    %v3625 = vunpack.c.h.b16 %v3333
    %v3626 = vunpack.c.l.b16 %v3334
    %v3627 = vunpack.c.h.b16 %v3334
    %v3628 = vunpack.c.l.b16 %v3335
    %v3629 = vunpack.c.h.b16 %v3335
    %v3630 = vunpack.c.l.b16 %v3336
    %v3631 = vunpack.c.h.b16 %v3336
    %v3632 = vunpack.c.l.b16 %v3337
    %v3633 = vunpack.c.h.b16 %v3337
    %v3634 = vunpack.c.l.b16 %v3338
    %v3635 = vunpack.c.h.b16 %v3338
    %v3636 = vunpack.c.l.b16 %v3339
    %v3637 = vunpack.c.h.b16 %v3339
    %v3638 = vunpack.c.l.b16 %v3340
    %v3639 = vunpack.c.h.b16 %v3340
    %v3640 = vunpack.c.l.b16 %v3341
    %v3641 = vunpack.c.h.b16 %v3341
    %v3642 = vunpack.c.l.b16 %v3342
    %v3643 = vunpack.c.h.b16 %v3342
    %v3644 = vunpack.c.l.b16 %v3343
    %v3645 = vunpack.c.h.b16 %v3343
    %v3646 = vunpack.c.l.b16 %v3344
    %v3647 = vunpack.c.h.b16 %v3344
    %v3648 = vunpack.c.l.b16 %v3345
    %v3649 = vunpack.c.h.b16 %v3345
    %v3650 = vunpack.c.l.b16 %v3346
    %v3651 = vunpack.c.h.b16 %v3346
    %v3652 = vunpack.c.l.b16 %v3347
    %v3653 = vunpack.c.h.b16 %v3347
    %v3654 = vunpack.c.l.b16 %v3348
    %v3655 = vunpack.c.h.b16 %v3348
    %v3656 = vunpack.c.l.b16 %v3349
    %v3657 = vunpack.c.h.b16 %v3349
    %v3658 = vunpack.c.l.b16 %v3350
    %v3659 = vunpack.c.h.b16 %v3350
    %v3660 = vunpack.c.l.b16 %v3351
    %v3661 = vunpack.c.h.b16 %v3351
    %v3662 = vunpack.c.l.b16 %v3352
    %v3663 = vunpack.c.h.b16 %v3352
    %v3664 = vunpack.c.l.b16 %v3353
    %v3665 = vunpack.c.h.b16 %v3353
    %v3666 = vunpack.c.l.b16 %v3354
    %v3667 = vunpack.c.h.b16 %v3354
    %v3668 = vunpack.c.l.b16 %v3355
    %v3669 = vunpack.c.h.b16 %v3355
    %v3670 = vunpack.c.l.b16 %v3356
    %v3671 = vunpack.c.h.b16 %v3356
    %v3672 = vunpack.c.l.b16 %v3357
    %v3673 = vunpack.c.h.b16 %v3357
    %v3674 = vunpack.c.l.b16 %v3358
    %v3675 = vunpack.c.h.b16 %v3358
    %v3676 = vunpack.c.l.b16 %v3359
    %v3677 = vunpack.c.h.b16 %v3359
    %v3678 = vunpack.c.l.b16 %v3360
    %v3679 = vunpack.c.h.b16 %v3360
    %v3680 = vunpack.c.l.b16 %v3361
    %v3681 = vunpack.c.h.b16 %v3361
    %v3682 = vunpack.c.l.b16 %v3362
    %v3683 = vunpack.c.h.b16 %v3362
    %v3684 = vunpack.c.l.b16 %v3363
    %v3685 = vunpack.c.h.b16 %v3363
    %v3686 = vunpack.c.l.b16 %v3364
    %v3687 = vunpack.c.h.b16 %v3364
    %v3688 = vunpack.c.l.b16 %v3365
    %v3689 = vunpack.c.h.b16 %v3365
    %v3690 = vunpack.c.l.b16 %v3366
    %v3691 = vunpack.c.h.b16 %v3366
    %v3692 = vunpack.c.l.b16 %v3367
    %v3693 = vunpack.c.h.b16 %v3367
    %v3694 = vunpack.c.l.b16 %v3368
    %v3695 = vunpack.c.h.b16 %v3368
    %v3696 = vunpack.c.l.b16 %v3369
    %v3697 = vunpack.c.h.b16 %v3369
    %v3698 = vunpack.c.l.b16 %v3370
    %v3699 = vunpack.c.h.b16 %v3370
    %v3700 = vunpack.c.l.b16 %v3371
    %v3701 = vunpack.c.h.b16 %v3371
    %v3702 = vunpack.c.l.b16 %v3372
    %v3703 = vunpack.c.h.b16 %v3372
    %v3704 = vunpack.c.l.b16 %v3373
    %v3705 = vunpack.c.h.b16 %v3373
    %v3706 = vunpack.c.l.b16 %v3374
    %v3707 = vunpack.c.h.b16 %v3374
    %v3708 = vunpack.c.l.b16 %v3375
    %v3709 = vunpack.c.h.b16 %v3375
    %v3710 = vunpack.c.l.b16 %v3376
    %v3711 = vunpack.c.h.b16 %v3376
    %v3712 = vunpack.c.l.b16 %v3377
    %v3713 = vunpack.c.h.b16 %v3377
    %v3714 = vunpack.c.l.b16 %v3378
    %v3715 = vunpack.c.h.b16 %v3378
    %v3716 = vunpack.c.l.b16 %v3379
    %v3717 = vunpack.c.h.b16 %v3379
    %v3718 = vunpack.c.l.b16 %v3380
    %v3719 = vunpack.c.h.b16 %v3380
    %v3720 = vunpack.c.l.b16 %v3381
    %v3721 = vunpack.c.h.b16 %v3381
    %v3722 = vunpack.c.l.b16 %v3382
    %v3723 = vunpack.c.h.b16 %v3382
    %v3724 = vunpack.c.l.b16 %v3383
    %v3725 = vunpack.c.h.b16 %v3383
    %v3726 = vunpack.c.l.b16 %v3384
    %v3727 = vunpack.c.h.b16 %v3384
    %v3728 = vunpack.c.l.b16 %v3385
    %v3729 = vunpack.c.h.b16 %v3385
    %v3730 = vunpack.c.l.b16 %v3386
    %v3731 = vunpack.c.h.b16 %v3386
    %v3732 = vunpack.c.l.b16 %v3387
    %v3733 = vunpack.c.h.b16 %v3387
    %v3734 = vunpack.c.l.b16 %v3388
    %v3735 = vunpack.c.h.b16 %v3388
    %v3736 = vunpack.c.l.b16 %v3389
    %v3737 = vunpack.c.h.b16 %v3389
    %v3738 = vunpack.c.l.b16 %v3390
    %v3739 = vunpack.c.h.b16 %v3390
    %v3740 = vunpack.c.l.b16 %v3391
    %v3741 = vunpack.c.h.b16 %v3391
    %v3742 = vunpack.c.l.b16 %v3392
    %v3743 = vunpack.c.h.b16 %v3392
    %v3744 = vunpack.c.l.b16 %v3393
    %v3745 = vunpack.c.h.b16 %v3393
    %v3746 = vunpack.c.l.b16 %v3394
    %v3747 = vunpack.c.h.b16 %v3394
    %v3748 = vunpack.c.l.b16 %v3395
    %v3749 = vunpack.c.h.b16 %v3395
    %v3750 = vunpack.c.l.b16 %v3396
    %v3751 = vunpack.c.h.b16 %v3396
    %v3752 = vunpack.c.l.b16 %v3397
    %v3753 = vunpack.c.h.b16 %v3397
    %v3754 = vunpack.c.l.b16 %v3398
    %v3755 = vunpack.c.h.b16 %v3398
    %v3756 = vunpack.c.l.b16 %v3399
    %v3757 = vunpack.c.h.b16 %v3399
    %v3758 = vunpack.c.l.b16 %v3400
    %v3759 = vunpack.c.h.b16 %v3400
    %v3760 = vunpack.c.l.b16 %v3401
    %v3761 = vunpack.c.h.b16 %v3401
    %v3762 = vunpack.c.l.b16 %v3402
    %v3763 = vunpack.c.h.b16 %v3402
    %v3764 = vunpack.c.l.b16 %v3403
    %v3765 = vunpack.c.h.b16 %v3403
    %v3766 = vunpack.c.l.b16 %v3404
    %v3767 = vunpack.c.h.b16 %v3404
    %v3768 = vunpack.c.l.b16 %v3405
    %v3769 = vunpack.c.h.b16 %v3405
    %v3770 = vunpack.c.l.b16 %v3406
    %v3771 = vunpack.c.h.b16 %v3406
    %v3772 = vunpack.c.l.b16 %v3407
    %v3773 = vunpack.c.h.b16 %v3407
    %v3774 = vunpack.c.l.b16 %v3408
    %v3775 = vunpack.c.h.b16 %v3408
    %v3776 = vunpack.c.l.b16 %v3409
    %v3777 = vunpack.c.h.b16 %v3409
    %v3778 = vunpack.c.l.b16 %v3410
    %v3779 = vunpack.c.h.b16 %v3410
    %v3780 = vunpack.c.l.b16 %v3411
    %v3781 = vunpack.c.h.b16 %v3411
    %v3782 = vunpack.c.l.b16 %v3412
    %v3783 = vunpack.c.h.b16 %v3412
    %v3784 = vunpack.c.l.b16 %v3413
    %v3785 = vunpack.c.h.b16 %v3413
    %v3786 = vunpack.c.l.b16 %v3414
    %v3787 = vunpack.c.h.b16 %v3414
    %v3788 = vunpack.c.l.b16 %v3415
    %v3789 = vunpack.c.h.b16 %v3415
    %v3790 = vunpack.c.l.b16 %v3416
    %v3791 = vunpack.c.h.b16 %v3416
    %v3792 = vunpack.c.l.b16 %v3417
    %v3793 = vunpack.c.h.b16 %v3417
    %v3794 = vunpack.c.l.b16 %v3418
    %v3795 = vunpack.c.h.b16 %v3418
    %v3796 = vunpack.c.l.b16 %v3419
    %v3797 = vunpack.c.h.b16 %v3419
    %v3798 = vunpack.c.l.b16 %v3420
    %v3799 = vunpack.c.h.b16 %v3420
    %v3800 = vunpack.c.l.b16 %v3421
    %v3801 = vunpack.c.h.b16 %v3421
    %v3802 = vunpack.c.l.b16 %v3422
    %v3803 = vunpack.c.h.b16 %v3422
    %v3804 = vunpack.c.l.b16 %v3423
    %v3805 = vunpack.c.h.b16 %v3423
    %v3806 = vunpack.c.l.b16 %v3424
    %v3807 = vunpack.c.h.b16 %v3424
    %v3808 = vunpack.c.l.b16 %v3425
    %v3809 = vunpack.c.h.b16 %v3425
    %v3810 = vunpack.c.l.b16 %v3426
    %v3811 = vunpack.c.h.b16 %v3426
    %v3812 = vunpack.c.l.b16 %v3427
    %v3813 = vunpack.c.h.b16 %v3427
    %v3814 = vunpack.c.l.b16 %v3428
    %v3815 = vunpack.c.h.b16 %v3428
    %v3816 = vunpack.c.l.b16 %v3429
    %v3817 = vunpack.c.h.b16 %v3429
    %v3818 = vunpack.c.l.b16 %v3430
    %v3819 = vunpack.c.h.b16 %v3430
    %v3820 = vunpack.c.l.b16 %v3431
    %v3821 = vunpack.c.h.b16 %v3431
    %v3822 = vunpack.c.l.b16 %v3432
    %v3823 = vunpack.c.h.b16 %v3432
    %v3824 = vunpack.c.l.b16 %v3433
    %v3825 = vunpack.c.h.b16 %v3433
    %v3826 = vunpack.c.l.b16 %v3434
    %v3827 = vunpack.c.h.b16 %v3434
    %v3828 = vunpack.c.l.b16 %v3435
    %v3829 = vunpack.c.h.b16 %v3435
    %v3830 = vunpack.c.l.b16 %v3436
    %v3831 = vunpack.c.h.b16 %v3436
    %v3832 = vunpack.c.l.b16 %v3437
    %v3833 = vunpack.c.h.b16 %v3437
    %v3834 = vunpack.c.l.b16 %v3438
    %v3835 = vunpack.c.h.b16 %v3438
    %v3836 = vunpack.c.l.b16 %v3439
    %v3837 = vunpack.c.h.b16 %v3439
    %v3838 = vunpack.c.l.b16 %v3440
    %v3839 = vunpack.c.h.b16 %v3440
    %v3840 = vunpack.c.l.b16 %v3441
    %v3841 = vunpack.c.h.b16 %v3441
    %v3842 = vunpack.c.l.b16 %v3442
    %v3843 = vunpack.c.h.b16 %v3442
    %v3844 = vunpack.c.l.b16 %v3443
    %v3845 = vunpack.c.h.b16 %v3443
    %v3846 = vunpack.c.l.b16 %v3444
    %v3847 = vunpack.c.h.b16 %v3444
    %v3848 = vunpack.c.l.b16 %v3445
    %v3849 = vunpack.c.h.b16 %v3445
    %v3850 = vunpack.c.l.b16 %v3446
    %v3851 = vunpack.c.h.b16 %v3446
    %v3852 = vunpack.c.l.b16 %v3447
    %v3853 = vunpack.c.h.b16 %v3447
    %v3854 = vpack.c.b16 %v3602, %v3598
    %v3855 = vpack.c.b16 %v3603, %v3599
    %v3856 = vpack.c.b16 %v3604, %v3600
    %v3857 = vpack.c.b16 %v3605, %v3601
    %v3858 = vpack.c.b16 %v3610, %v3606
    %v3859 = vpack.c.b16 %v3611, %v3607
    %v3860 = vpack.c.b16 %v3612, %v3608
    %v3861 = vpack.c.b16 %v3613, %v3609
    %v3862 = vpack.c.b16 %v3618, %v3614
    %v3863 = vpack.c.b16 %v3619, %v3615
    %v3864 = vpack.c.b16 %v3620, %v3616
    %v3865 = vpack.c.b16 %v3621, %v3617
    %v3866 = vpack.c.b16 %v3626, %v3622
    %v3867 = vpack.c.b16 %v3627, %v3623
    %v3868 = vpack.c.b16 %v3628, %v3624
    %v3869 = vpack.c.b16 %v3629, %v3625
    %v3870 = vpack.c.b16 %v3634, %v3630
    %v3871 = vpack.c.b16 %v3635, %v3631
    %v3872 = vpack.c.b16 %v3636, %v3632
    %v3873 = vpack.c.b16 %v3637, %v3633
    %v3874 = vpack.c.b16 %v3642, %v3638
    %v3875 = vpack.c.b16 %v3643, %v3639
    %v3876 = vpack.c.b16 %v3644, %v3640
    %v3877 = vpack.c.b16 %v3645, %v3641
    %v3878 = vpack.c.b16 %v3650, %v3646
    %v3879 = vpack.c.b16 %v3651, %v3647
    %v3880 = vpack.c.b16 %v3652, %v3648
    %v3881 = vpack.c.b16 %v3653, %v3649
    %v3882 = vpack.c.b16 %v3658, %v3654
    %v3883 = vpack.c.b16 %v3659, %v3655
    %v3884 = vpack.c.b16 %v3660, %v3656
    %v3885 = vpack.c.b16 %v3661, %v3657
    %v3886 = vpack.c.b16 %v3666, %v3662
    %v3887 = vpack.c.b16 %v3667, %v3663
    %v3888 = vpack.c.b16 %v3668, %v3664
    %v3889 = vpack.c.b16 %v3669, %v3665
    %v3890 = vpack.c.b16 %v3674, %v3670
    %v3891 = vpack.c.b16 %v3675, %v3671
    %v3892 = vpack.c.b16 %v3676, %v3672
    %v3893 = vpack.c.b16 %v3677, %v3673
    %v3894 = vpack.c.b16 %v3682, %v3678
    %v3895 = vpack.c.b16 %v3683, %v3679
    %v3896 = vpack.c.b16 %v3684, %v3680
    %v3897 = vpack.c.b16 %v3685, %v3681
    %v3898 = vpack.c.b16 %v3690, %v3686
    %v3899 = vpack.c.b16 %v3691, %v3687
    %v3900 = vpack.c.b16 %v3692, %v3688
    %v3901 = vpack.c.b16 %v3693, %v3689
    %v3902 = vpack.c.b16 %v3698, %v3694
    %v3903 = vpack.c.b16 %v3699, %v3695
    %v3904 = vpack.c.b16 %v3700, %v3696
    %v3905 = vpack.c.b16 %v3701, %v3697
    %v3906 = vpack.c.b16 %v3706, %v3702
    %v3907 = vpack.c.b16 %v3707, %v3703
    %v3908 = vpack.c.b16 %v3708, %v3704
    %v3909 = vpack.c.b16 %v3709, %v3705
    %v3910 = vpack.c.b16 %v3714, %v3710
    %v3911 = vpack.c.b16 %v3715, %v3711
    %v3912 = vpack.c.b16 %v3716, %v3712
    %v3913 = vpack.c.b16 %v3717, %v3713
    %v3914 = vpack.c.b16 %v3722, %v3718
    %v3915 = vpack.c.b16 %v3723, %v3719
    %v3916 = vpack.c.b16 %v3724, %v3720
    %v3917 = vpack.c.b16 %v3725, %v3721
    %v3918 = vpack.c.b16 %v3730, %v3726
    %v3919 = vpack.c.b16 %v3731, %v3727
    %v3920 = vpack.c.b16 %v3732, %v3728
    %v3921 = vpack.c.b16 %v3733, %v3729
    %v3922 = vpack.c.b16 %v3738, %v3734
    %v3923 = vpack.c.b16 %v3739, %v3735
    %v3924 = vpack.c.b16 %v3740, %v3736
    %v3925 = vpack.c.b16 %v3741, %v3737
    %v3926 = vpack.c.b16 %v3746, %v3742
    %v3927 = vpack.c.b16 %v3747, %v3743
    %v3928 = vpack.c.b16 %v3748, %v3744
    %v3929 = vpack.c.b16 %v3749, %v3745
    %v3930 = vpack.c.b16 %v3754, %v3750
    %v3931 = vpack.c.b16 %v3755, %v3751
    %v3932 = vpack.c.b16 %v3756, %v3752
    %v3933 = vpack.c.b16 %v3757, %v3753
    %v3934 = vpack.c.b16 %v3762, %v3758
    %v3935 = vpack.c.b16 %v3763, %v3759
    %v3936 = vpack.c.b16 %v3764, %v3760
    %v3937 = vpack.c.b16 %v3765, %v3761
    %v3938 = vpack.c.b16 %v3770, %v3766
    %v3939 = vpack.c.b16 %v3771, %v3767
    %v3940 = vpack.c.b16 %v3772, %v3768
    %v3941 = vpack.c.b16 %v3773, %v3769
    %v3942 = vpack.c.b16 %v3778, %v3774
    %v3943 = vpack.c.b16 %v3779, %v3775
    %v3944 = vpack.c.b16 %v3780, %v3776
    %v3945 = vpack.c.b16 %v3781, %v3777
    %v3946 = vpack.c.b16 %v3786, %v3782
    %v3947 = vpack.c.b16 %v3787, %v3783
    %v3948 = vpack.c.b16 %v3788, %v3784
    %v3949 = vpack.c.b16 %v3789, %v3785
    %v3950 = vpack.c.b16 %v3794, %v3790
    %v3951 = vpack.c.b16 %v3795, %v3791
    %v3952 = vpack.c.b16 %v3796, %v3792
    %v3953 = vpack.c.b16 %v3797, %v3793
    %v3954 = vpack.c.b16 %v3802, %v3798
    %v3955 = vpack.c.b16 %v3803, %v3799
    %v3956 = vpack.c.b16 %v3804, %v3800
    %v3957 = vpack.c.b16 %v3805, %v3801
    %v3958 = vpack.c.b16 %v3810, %v3806
    %v3959 = vpack.c.b16 %v3811, %v3807
    %v3960 = vpack.c.b16 %v3812, %v3808
    %v3961 = vpack.c.b16 %v3813, %v3809
    %v3962 = vpack.c.b16 %v3818, %v3814
    %v3963 = vpack.c.b16 %v3819, %v3815
    %v3964 = vpack.c.b16 %v3820, %v3816
    %v3965 = vpack.c.b16 %v3821, %v3817
    %v3966 = vpack.c.b16 %v3826, %v3822
    %v3967 = vpack.c.b16 %v3827, %v3823
    %v3968 = vpack.c.b16 %v3828, %v3824
    %v3969 = vpack.c.b16 %v3829, %v3825
    %v3970 = vpack.c.b16 %v3834, %v3830
    %v3971 = vpack.c.b16 %v3835, %v3831
    %v3972 = vpack.c.b16 %v3836, %v3832
    %v3973 = vpack.c.b16 %v3837, %v3833
    %v3974 = vpack.c.b16 %v3842, %v3838
    %v3975 = vpack.c.b16 %v3843, %v3839
    %v3976 = vpack.c.b16 %v3844, %v3840
    %v3977 = vpack.c.b16 %v3845, %v3841
    %v3978 = vpack.c.b16 %v3850, %v3846
    %v3979 = vpack.c.b16 %v3851, %v3847
    %v3980 = vpack.c.b16 %v3852, %v3848
    %v3981 = vpack.c.b16 %v3853, %v3849
    %4110 = vmatprep.subr.bf16.mxu0 %v3855
    %4111 = vmatpush1.bf16.msra.mxu0 %v3854
    %4112 = vmatprep.subr.bf16.mxu0 %v3859
    %4113 = vmatpush1.bf16.msra.mxu0 %v3858
    %4114 = vmatprep.subr.bf16.mxu0 %v3863
    %4115 = vmatpush1.bf16.msra.mxu0 %v3862
    %4116 = vmatprep.subr.bf16.mxu0 %v3867
    %4117 = vmatpush1.bf16.msra.mxu0 %v3866
    %4118 = vmatprep.subr.bf16.mxu0 %v3871
    %4119 = vmatpush1.bf16.msra.mxu0 %v3870
    %4120 = vmatprep.subr.bf16.mxu0 %v3875
    %4121 = vmatpush1.bf16.msra.mxu0 %v3874
    %4122 = vmatprep.subr.bf16.mxu0 %v3879
    %4123 = vmatpush1.bf16.msra.mxu0 %v3878
    %4124 = vmatprep.subr.bf16.mxu0 %v3883
    %4125 = vmatpush1.bf16.msra.mxu0 %v3882
    %4126 = vmatprep.subr.bf16.mxu0 %v3887
    %4127 = vmatpush1.bf16.msra.mxu0 %v3886
    %4128 = vmatprep.subr.bf16.mxu0 %v3891
    %4129 = vmatpush1.bf16.msra.mxu0 %v3890
    %4130 = vmatprep.subr.bf16.mxu0 %v3895
    %4131 = vmatpush1.bf16.msra.mxu0 %v3894
    %4132 = vmatprep.subr.bf16.mxu0 %v3899
    %4133 = vmatpush1.bf16.msra.mxu0 %v3898
    %4134 = vmatprep.subr.bf16.mxu0 %v3903
    %4135 = vmatpush1.bf16.msra.mxu0 %v3902
    %4136 = vmatprep.subr.bf16.mxu0 %v3907
    %4137 = vmatpush1.bf16.msra.mxu0 %v3906
    %4138 = vmatprep.subr.bf16.mxu0 %v3911
    %4139 = vmatpush1.bf16.msra.mxu0 %v3910
    %4140 = vmatprep.subr.bf16.mxu0 %v3915
    %4141 = vmatpush1.bf16.msra.mxu0 %v3914
    %4142 = vmatprep.mubr.bf16.mxu0 %v3317
    %4143 = vmatmul.mubr.bf16.gmra.mrb[0].mxu0 %v3316
    %v4144 = vpop.f32.mrb[0].mxu0
    %v4145 = vadd.f32 %v3453, %v4144
    %v4146 = vpop.f32.mrb[0].mxu0
    %v4147 = vadd.f32 %v3457, %v4146
    %v4148 = vpop.f32.mrb[0].mxu0
    %v4149 = vpop.f32.mrb[0].mxu0
    %4150 = vdwg.mxu0
    %4151 = vmatprep.subr.bf16.mxu0 %v3919
    %4152 = vmatpush1.bf16.msra.mxu0 %v3918
    %4153 = vmatprep.subr.bf16.mxu0 %v3923
    %4154 = vmatpush1.bf16.msra.mxu0 %v3922
    %4155 = vmatprep.subr.bf16.mxu0 %v3927
    %4156 = vmatpush1.bf16.msra.mxu0 %v3926
    %4157 = vmatprep.subr.bf16.mxu0 %v3931
    %4158 = vmatpush1.bf16.msra.mxu0 %v3930
    %4159 = vmatprep.subr.bf16.mxu0 %v3935
    %4160 = vmatpush1.bf16.msra.mxu0 %v3934
    %4161 = vmatprep.subr.bf16.mxu0 %v3939
    %4162 = vmatpush1.bf16.msra.mxu0 %v3938
    %4163 = vmatprep.subr.bf16.mxu0 %v3943
    %4164 = vmatpush1.bf16.msra.mxu0 %v3942
    %4165 = vmatprep.subr.bf16.mxu0 %v3947
    %4166 = vmatpush1.bf16.msra.mxu0 %v3946
    %4167 = vmatprep.subr.bf16.mxu0 %v3951
    %4168 = vmatpush1.bf16.msra.mxu0 %v3950
    %4169 = vmatprep.subr.bf16.mxu0 %v3955
    %4170 = vmatpush1.bf16.msra.mxu0 %v3954
    %4171 = vmatprep.subr.bf16.mxu0 %v3959
    %4172 = vmatpush1.bf16.msra.mxu0 %v3958
    %4173 = vmatprep.subr.bf16.mxu0 %v3963
    %4174 = vmatpush1.bf16.msra.mxu0 %v3962
    %4175 = vmatprep.subr.bf16.mxu0 %v3967
    %4176 = vmatpush1.bf16.msra.mxu0 %v3966
    %4177 = vmatprep.subr.bf16.mxu0 %v3971
    %4178 = vmatpush1.bf16.msra.mxu0 %v3970
    %4179 = vmatprep.subr.bf16.mxu0 %v3975
    %4180 = vmatpush1.bf16.msra.mxu0 %v3974
    %4181 = vmatprep.subr.bf16.mxu0 %v3979
    %4182 = vmatpush1.bf16.msra.mxu0 %v3978
    %4183 = vmatprep.mubr.bf16.mxu0 %v3319
    %4184 = vmatmul.mubr.bf16.gmra.mrb[0].mxu0 %v3318
    %v4185 = vpop.f32.mrb[0].mxu0
    %v4186 = vadd.f32 %v4145, %v4185
    %v4187 = vpop.f32.mrb[0].mxu0
    %v4188 = vadd.f32 %v4147, %v4187
    %v4189 = vpop.f32.mrb[0].mxu0
    %v4190 = vpop.f32.mrb[0].mxu0
    %4191 = vdwg.mxu0
    %4192 = vmatprep.subr.bf16.mxu0 %v3857
    %4193 = vmatpush1.bf16.msra.mxu0 %v3856
    %4194 = vmatprep.subr.bf16.mxu0 %v3861
    %4195 = vmatpush1.bf16.msra.mxu0 %v3860
    %4196 = vmatprep.subr.bf16.mxu0 %v3865
    %4197 = vmatpush1.bf16.msra.mxu0 %v3864
    %4198 = vmatprep.subr.bf16.mxu0 %v3869
    %4199 = vmatpush1.bf16.msra.mxu0 %v3868
    %4200 = vmatprep.subr.bf16.mxu0 %v3873
    %4201 = vmatpush1.bf16.msra.mxu0 %v3872
    %4202 = vmatprep.subr.bf16.mxu0 %v3877
    %4203 = vmatpush1.bf16.msra.mxu0 %v3876
    %4204 = vmatprep.subr.bf16.mxu0 %v3881
    %4205 = vmatpush1.bf16.msra.mxu0 %v3880
    %4206 = vmatprep.subr.bf16.mxu0 %v3885
    %4207 = vmatpush1.bf16.msra.mxu0 %v3884
    %4208 = vmatprep.subr.bf16.mxu0 %v3889
    %4209 = vmatpush1.bf16.msra.mxu0 %v3888
    %4210 = vmatprep.subr.bf16.mxu0 %v3893
    %4211 = vmatpush1.bf16.msra.mxu0 %v3892
    %4212 = vmatprep.subr.bf16.mxu0 %v3897
    %4213 = vmatpush1.bf16.msra.mxu0 %v3896
    %4214 = vmatprep.subr.bf16.mxu0 %v3901
    %4215 = vmatpush1.bf16.msra.mxu0 %v3900
    %4216 = vmatprep.subr.bf16.mxu0 %v3905
    %4217 = vmatpush1.bf16.msra.mxu0 %v3904
    %4218 = vmatprep.subr.bf16.mxu0 %v3909
    %4219 = vmatpush1.bf16.msra.mxu0 %v3908
    %4220 = vmatprep.subr.bf16.mxu0 %v3913
    %4221 = vmatpush1.bf16.msra.mxu0 %v3912
    %4222 = vmatprep.subr.bf16.mxu0 %v3917
    %4223 = vmatpush1.bf16.msra.mxu0 %v3916
    %4224 = vmatprep.mubr.bf16.mxu0 %v3317
    %4225 = vmatmul.mubr.bf16.gmra.mrb[0].mxu0 %v3316
    %v4226 = vpop.f32.mrb[0].mxu0
    %v4227 = vadd.f32 %v3461, %v4226
    %v4228 = vpop.f32.mrb[0].mxu0
    %v4229 = vadd.f32 %v3465, %v4228
    %v4230 = vpop.f32.mrb[0].mxu0
    %v4231 = vpop.f32.mrb[0].mxu0
    %4232 = vdwg.mxu0
    %4233 = vmatprep.subr.bf16.mxu0 %v3921
    %4234 = vmatpush1.bf16.msra.mxu0 %v3920
    %4235 = vmatprep.subr.bf16.mxu0 %v3925
    %4236 = vmatpush1.bf16.msra.mxu0 %v3924
    %4237 = vmatprep.subr.bf16.mxu0 %v3929
    %4238 = vmatpush1.bf16.msra.mxu0 %v3928
    %4239 = vmatprep.subr.bf16.mxu0 %v3933
    %4240 = vmatpush1.bf16.msra.mxu0 %v3932
    %4241 = vmatprep.subr.bf16.mxu0 %v3937
    %4242 = vmatpush1.bf16.msra.mxu0 %v3936
    %4243 = vmatprep.subr.bf16.mxu0 %v3941
    %4244 = vmatpush1.bf16.msra.mxu0 %v3940
    %4245 = vmatprep.subr.bf16.mxu0 %v3945
    %4246 = vmatpush1.bf16.msra.mxu0 %v3944
    %4247 = vmatprep.subr.bf16.mxu0 %v3949
    %4248 = vmatpush1.bf16.msra.mxu0 %v3948
    %4249 = vmatprep.subr.bf16.mxu0 %v3953
    %4250 = vmatpush1.bf16.msra.mxu0 %v3952
    %4251 = vmatprep.subr.bf16.mxu0 %v3957
    %4252 = vmatpush1.bf16.msra.mxu0 %v3956
    %4253 = vmatprep.subr.bf16.mxu0 %v3961
    %4254 = vmatpush1.bf16.msra.mxu0 %v3960
    %4255 = vmatprep.subr.bf16.mxu0 %v3965
    %4256 = vmatpush1.bf16.msra.mxu0 %v3964
    %4257 = vmatprep.subr.bf16.mxu0 %v3969
    %4258 = vmatpush1.bf16.msra.mxu0 %v3968
    %4259 = vmatprep.subr.bf16.mxu0 %v3973
    %4260 = vmatpush1.bf16.msra.mxu0 %v3972
    %4261 = vmatprep.subr.bf16.mxu0 %v3977
    %4262 = vmatpush1.bf16.msra.mxu0 %v3976
    %4263 = vmatprep.subr.bf16.mxu0 %v3981
    %4264 = vmatpush1.bf16.msra.mxu0 %v3980
    %4265 = vmatprep.mubr.bf16.mxu0 %v3319
    %4266 = vmatmul.mubr.bf16.gmra.mrb[0].mxu0 %v3318
    %v4267 = vpop.f32.mrb[0].mxu0
    %v4268 = vadd.f32 %v4227, %v4267
    %v4269 = vpop.f32.mrb[0].mxu0
    %v4270 = vadd.f32 %v4229, %v4269
    %v4271 = vpop.f32.mrb[0].mxu0
    %v4272 = vpop.f32.mrb[0].mxu0
    %4273 = vdwg.mxu0
    %v4274 = vmax.f32 %v4186, 0.0
    %v4275 = vmax.f32 %v4188, 0.0
    %v4276 = vmax.f32 %v4268, 0.0
    %v4277 = vmax.f32 %v4270, 0.0
    %v4278 = vpack.c.bf16 %v4274, %v4274
    %v4279 = vpack.c.bf16 %v4275, %v4275
    %v4280 = vpack.c.bf16 %v4276, %v4276
    %v4281 = vpack.c.bf16 %v4277, %v4277
    %v4282 = vld [vmem:[#allocation10] sm:$0xf]
    %v4283 = vld [vmem:[#allocation10 + $0x4] sm:$0xf]
    %v4284 = vld [vmem:[#allocation10 + $0x8] sm:$0xf]
    %v4285 = vld [vmem:[#allocation10 + $0xc] sm:$0xf]
    %v4286 = vld [vmem:[#allocation10 + $0x10] sm:$0xf]
    %v4287 = vld [vmem:[#allocation10 + $0x14] sm:$0xf]
    %v4288 = vld [vmem:[#allocation10 + $0x18] sm:$0xf]
    %v4289 = vld [vmem:[#allocation10 + $0x1c] sm:$0xf]
    %v4290 = vld [vmem:[#allocation10 + $0x20] sm:$0xf]
    %v4291 = vld [vmem:[#allocation10 + $0x24] sm:$0xf]
    %v4292 = vld [vmem:[#allocation10 + $0x28] sm:$0xf]
    %v4293 = vld [vmem:[#allocation10 + $0x2c] sm:$0xf]
    %v4294 = vld [vmem:[#allocation10 + $0x30] sm:$0xf]
    %v4295 = vld [vmem:[#allocation10 + $0x34] sm:$0xf]
    %v4296 = vld [vmem:[#allocation10 + $0x38] sm:$0xf]
    %v4297 = vld [vmem:[#allocation10 + $0x3c] sm:$0xf]
    %v4298 = vld [vmem:[#allocation10 + $0x40] sm:$0xf]
    %v4299 = vld [vmem:[#allocation10 + $0x44] sm:$0xf]
    %v4300 = vld [vmem:[#allocation10 + $0x48] sm:$0xf]
    %v4301 = vld [vmem:[#allocation10 + $0x4c] sm:$0xf]
    %v4302 = vld [vmem:[#allocation10 + $0x50] sm:$0xf]
    %v4303 = vld [vmem:[#allocation10 + $0x54] sm:$0xf]
    %v4304 = vld [vmem:[#allocation10 + $0x58] sm:$0xf]
    %v4305 = vld [vmem:[#allocation10 + $0x5c] sm:$0xf]
    %v4306 = vld [vmem:[#allocation10 + $0x60] sm:$0xf]
    %v4307 = vld [vmem:[#allocation10 + $0x64] sm:$0xf]
    %v4308 = vld [vmem:[#allocation10 + $0x68] sm:$0xf]
    %v4309 = vld [vmem:[#allocation10 + $0x6c] sm:$0xf]
    %v4310 = vld [vmem:[#allocation10 + $0x70] sm:$0xf]
    %v4311 = vld [vmem:[#allocation10 + $0x74] sm:$0xf]
    %v4312 = vld [vmem:[#allocation10 + $0x78] sm:$0xf]
    %v4313 = vld [vmem:[#allocation10 + $0x7c] sm:$0xf]
    %v4314 = vld [vmem:[#allocation10 + $0x80] sm:$0xf]
    %v4315 = vld [vmem:[#allocation10 + $0x84] sm:$0xf]
    %v4316 = vld [vmem:[#allocation10 + $0x88] sm:$0xf]
    %v4317 = vld [vmem:[#allocation10 + $0x8c] sm:$0xf]
    %v4318 = vld [vmem:[#allocation10 + $0x90] sm:$0xf]
    %v4319 = vld [vmem:[#allocation10 + $0x94] sm:$0xf]
    %v4320 = vld [vmem:[#allocation10 + $0x98] sm:$0xf]
    %v4321 = vld [vmem:[#allocation10 + $0x9c] sm:$0xf]
    %v4322 = vld [vmem:[#allocation10 + $0xa0] sm:$0xf]
    %v4323 = vld [vmem:[#allocation10 + $0xa4] sm:$0xf]
    %v4324 = vld [vmem:[#allocation10 + $0xa8] sm:$0xf]
    %v4325 = vld [vmem:[#allocation10 + $0xac] sm:$0xf]
    %v4326 = vld [vmem:[#allocation10 + $0xb0] sm:$0xf]
    %v4327 = vld [vmem:[#allocation10 + $0xb4] sm:$0xf]
    %v4328 = vld [vmem:[#allocation10 + $0xb8] sm:$0xf]
    %v4329 = vld [vmem:[#allocation10 + $0xbc] sm:$0xf]
    %v4330 = vld [vmem:[#allocation10 + $0xc0] sm:$0xf]
    %v4331 = vld [vmem:[#allocation10 + $0xc4] sm:$0xf]
    %v4332 = vld [vmem:[#allocation10 + $0xc8] sm:$0xf]
    %v4333 = vld [vmem:[#allocation10 + $0xcc] sm:$0xf]
    %v4334 = vld [vmem:[#allocation10 + $0xd0] sm:$0xf]
    %v4335 = vld [vmem:[#allocation10 + $0xd4] sm:$0xf]
    %v4336 = vld [vmem:[#allocation10 + $0xd8] sm:$0xf]
    %v4337 = vld [vmem:[#allocation10 + $0xdc] sm:$0xf]
    %v4338 = vld [vmem:[#allocation10 + $0xe0] sm:$0xf]
    %v4339 = vld [vmem:[#allocation10 + $0xe4] sm:$0xf]
    %v4340 = vld [vmem:[#allocation10 + $0xe8] sm:$0xf]
    %v4341 = vld [vmem:[#allocation10 + $0xec] sm:$0xf]
    %v4342 = vld [vmem:[#allocation10 + $0xf0] sm:$0xf]
    %v4343 = vld [vmem:[#allocation10 + $0xf4] sm:$0xf]
    %v4344 = vld [vmem:[#allocation10 + $0xf8] sm:$0xf]
    %v4345 = vld [vmem:[#allocation10 + $0xfc] sm:$0xf]
    %v4346 = vld [vmem:[%s11] sm:$0x1]
    %v4348 = vlaneseq
    %v4349 = vshrl.u32 %v4348, 7
    %v4350 = vsub.s32 0, %v4349
    %v4351 = vrot.slane %v4346, %v4350
    %v4417 = vunpack.c.l.b16 %v4282
    %v4418 = vunpack.c.l.b16 %v4283
    %v4419 = vunpack.c.l.b16 %v4284
    %v4420 = vunpack.c.l.b16 %v4285
    %v4421 = vunpack.c.l.b16 %v4286
    %v4422 = vunpack.c.l.b16 %v4287
    %v4423 = vunpack.c.l.b16 %v4288
    %v4424 = vunpack.c.l.b16 %v4289
    %v4425 = vunpack.c.l.b16 %v4290
    %v4426 = vunpack.c.l.b16 %v4291
    %v4427 = vunpack.c.l.b16 %v4292
    %v4428 = vunpack.c.l.b16 %v4293
    %v4429 = vunpack.c.l.b16 %v4294
    %v4430 = vunpack.c.l.b16 %v4295
    %v4431 = vunpack.c.l.b16 %v4296
    %v4432 = vunpack.c.l.b16 %v4297
    %v4433 = vunpack.c.l.b16 %v4298
    %v4434 = vunpack.c.l.b16 %v4299
    %v4435 = vunpack.c.l.b16 %v4300
    %v4436 = vunpack.c.l.b16 %v4301
    %v4437 = vunpack.c.l.b16 %v4302
    %v4438 = vunpack.c.l.b16 %v4303
    %v4439 = vunpack.c.l.b16 %v4304
    %v4440 = vunpack.c.l.b16 %v4305
    %v4441 = vunpack.c.l.b16 %v4306
    %v4442 = vunpack.c.l.b16 %v4307
    %v4443 = vunpack.c.l.b16 %v4308
    %v4444 = vunpack.c.l.b16 %v4309
    %v4445 = vunpack.c.l.b16 %v4310
    %v4446 = vunpack.c.l.b16 %v4311
    %v4447 = vunpack.c.l.b16 %v4312
    %v4448 = vunpack.c.l.b16 %v4313
    %v4449 = vunpack.c.l.b16 %v4314
    %v4450 = vunpack.c.l.b16 %v4315
    %v4451 = vunpack.c.l.b16 %v4316
    %v4452 = vunpack.c.l.b16 %v4317
    %v4453 = vunpack.c.l.b16 %v4318
    %v4454 = vunpack.c.l.b16 %v4319
    %v4455 = vunpack.c.l.b16 %v4320
    %v4456 = vunpack.c.l.b16 %v4321
    %v4457 = vunpack.c.l.b16 %v4322
    %v4458 = vunpack.c.l.b16 %v4323
    %v4459 = vunpack.c.l.b16 %v4324
    %v4460 = vunpack.c.l.b16 %v4325
    %v4461 = vunpack.c.l.b16 %v4326
    %v4462 = vunpack.c.l.b16 %v4327
    %v4463 = vunpack.c.l.b16 %v4328
    %v4464 = vunpack.c.l.b16 %v4329
    %v4465 = vunpack.c.l.b16 %v4330
    %v4466 = vunpack.c.l.b16 %v4331
    %v4467 = vunpack.c.l.b16 %v4332
    %v4468 = vunpack.c.l.b16 %v4333
    %v4469 = vunpack.c.l.b16 %v4334
    %v4470 = vunpack.c.l.b16 %v4335
    %v4471 = vunpack.c.l.b16 %v4336
    %v4472 = vunpack.c.l.b16 %v4337
    %v4473 = vunpack.c.l.b16 %v4338
    %v4474 = vunpack.c.l.b16 %v4339
    %v4475 = vunpack.c.l.b16 %v4340
    %v4476 = vunpack.c.l.b16 %v4341
    %v4477 = vunpack.c.l.b16 %v4342
    %v4478 = vunpack.c.l.b16 %v4343
    %v4479 = vunpack.c.l.b16 %v4344
    %v4480 = vunpack.c.l.b16 %v4345
    %v4481 = vpack.c.b16 %v4418, %v4417
    %v4482 = vpack.c.b16 %v4420, %v4419
    %v4483 = vpack.c.b16 %v4422, %v4421
    %v4484 = vpack.c.b16 %v4424, %v4423
    %v4485 = vpack.c.b16 %v4426, %v4425
    %v4486 = vpack.c.b16 %v4428, %v4427
    %v4487 = vpack.c.b16 %v4430, %v4429
    %v4488 = vpack.c.b16 %v4432, %v4431
    %v4489 = vpack.c.b16 %v4434, %v4433
    %v4490 = vpack.c.b16 %v4436, %v4435
    %v4491 = vpack.c.b16 %v4438, %v4437
    %v4492 = vpack.c.b16 %v4440, %v4439
    %v4493 = vpack.c.b16 %v4442, %v4441
    %v4494 = vpack.c.b16 %v4444, %v4443
    %v4495 = vpack.c.b16 %v4446, %v4445
    %v4496 = vpack.c.b16 %v4448, %v4447
    %v4497 = vpack.c.b16 %v4450, %v4449
    %v4498 = vpack.c.b16 %v4452, %v4451
    %v4499 = vpack.c.b16 %v4454, %v4453
    %v4500 = vpack.c.b16 %v4456, %v4455
    %v4501 = vpack.c.b16 %v4458, %v4457
    %v4502 = vpack.c.b16 %v4460, %v4459
    %v4503 = vpack.c.b16 %v4462, %v4461
    %v4504 = vpack.c.b16 %v4464, %v4463
    %v4505 = vpack.c.b16 %v4466, %v4465
    %v4506 = vpack.c.b16 %v4468, %v4467
    %v4507 = vpack.c.b16 %v4470, %v4469
    %v4508 = vpack.c.b16 %v4472, %v4471
    %v4509 = vpack.c.b16 %v4474, %v4473
    %v4510 = vpack.c.b16 %v4476, %v4475
    %v4511 = vpack.c.b16 %v4478, %v4477
    %v4512 = vpack.c.b16 %v4480, %v4479
    %4545 = vmatprep.subr.bf16.mxu0 0
    %4546 = vmatpush1.bf16.msra.mxu0 %v4481
    %4547 = vmatprep.subr.bf16.mxu0 0
    %4548 = vmatpush1.bf16.msra.mxu0 %v4482
    %4549 = vmatprep.subr.bf16.mxu0 0
    %4550 = vmatpush1.bf16.msra.mxu0 %v4483
    %4551 = vmatprep.subr.bf16.mxu0 0
    %4552 = vmatpush1.bf16.msra.mxu0 %v4484
    %4553 = vmatprep.subr.bf16.mxu0 0
    %4554 = vmatpush1.bf16.msra.mxu0 %v4485
    %4555 = vmatprep.subr.bf16.mxu0 0
    %4556 = vmatpush1.bf16.msra.mxu0 %v4486
    %4557 = vmatprep.subr.bf16.mxu0 0
    %4558 = vmatpush1.bf16.msra.mxu0 %v4487
    %4559 = vmatprep.subr.bf16.mxu0 0
    %4560 = vmatpush1.bf16.msra.mxu0 %v4488
    %4561 = vmatprep.subr.bf16.mxu0 0
    %4562 = vmatpush1.bf16.msra.mxu0 %v4489
    %4563 = vmatprep.subr.bf16.mxu0 0
    %4564 = vmatpush1.bf16.msra.mxu0 %v4490
    %4565 = vmatprep.subr.bf16.mxu0 0
    %4566 = vmatpush1.bf16.msra.mxu0 %v4491
    %4567 = vmatprep.subr.bf16.mxu0 0
    %4568 = vmatpush1.bf16.msra.mxu0 %v4492
    %4569 = vmatprep.subr.bf16.mxu0 0
    %4570 = vmatpush1.bf16.msra.mxu0 %v4493
    %4571 = vmatprep.subr.bf16.mxu0 0
    %4572 = vmatpush1.bf16.msra.mxu0 %v4494
    %4573 = vmatprep.subr.bf16.mxu0 0
    %4574 = vmatpush1.bf16.msra.mxu0 %v4495
    %4575 = vmatprep.subr.bf16.mxu0 0
    %4576 = vmatpush1.bf16.msra.mxu0 %v4496
    %4577 = vmatprep.mubr.bf16.mxu0 %v4279
    %4578 = vmatmul.mubr.bf16.gmra.mrb[0].mxu0 %v4278
    %v4579 = vpop.f32.mrb[0].mxu0
    %v4580 = vadd.f32 %v4351, %v4579
    %v4581 = vpop.f32.mrb[0].mxu0
    %v4582 = vpop.f32.mrb[0].mxu0
    %v4583 = vpop.f32.mrb[0].mxu0
    %4584 = vdwg.mxu0
    %4585 = vmatprep.subr.bf16.mxu0 0
    %4586 = vmatpush1.bf16.msra.mxu0 %v4497
    %4587 = vmatprep.subr.bf16.mxu0 0
    %4588 = vmatpush1.bf16.msra.mxu0 %v4498
    %4589 = vmatprep.subr.bf16.mxu0 0
    %4590 = vmatpush1.bf16.msra.mxu0 %v4499
    %4591 = vmatprep.subr.bf16.mxu0 0
    %4592 = vmatpush1.bf16.msra.mxu0 %v4500
    %4593 = vmatprep.subr.bf16.mxu0 0
    %4594 = vmatpush1.bf16.msra.mxu0 %v4501
    %4595 = vmatprep.subr.bf16.mxu0 0
    %4596 = vmatpush1.bf16.msra.mxu0 %v4502
    %4597 = vmatprep.subr.bf16.mxu0 0
    %4598 = vmatpush1.bf16.msra.mxu0 %v4503
    %4599 = vmatprep.subr.bf16.mxu0 0
    %4600 = vmatpush1.bf16.msra.mxu0 %v4504
    %4601 = vmatprep.subr.bf16.mxu0 0
    %4602 = vmatpush1.bf16.msra.mxu0 %v4505
    %4603 = vmatprep.subr.bf16.mxu0 0
    %4604 = vmatpush1.bf16.msra.mxu0 %v4506
    %4605 = vmatprep.subr.bf16.mxu0 0
    %4606 = vmatpush1.bf16.msra.mxu0 %v4507
    %4607 = vmatprep.subr.bf16.mxu0 0
    %4608 = vmatpush1.bf16.msra.mxu0 %v4508
    %4609 = vmatprep.subr.bf16.mxu0 0
    %4610 = vmatpush1.bf16.msra.mxu0 %v4509
    %4611 = vmatprep.subr.bf16.mxu0 0
    %4612 = vmatpush1.bf16.msra.mxu0 %v4510
    %4613 = vmatprep.subr.bf16.mxu0 0
    %4614 = vmatpush1.bf16.msra.mxu0 %v4511
    %4615 = vmatprep.subr.bf16.mxu0 0
    %4616 = vmatpush1.bf16.msra.mxu0 %v4512
    %4617 = vmatprep.mubr.bf16.mxu0 %v4281
    %4618 = vmatmul.mubr.bf16.gmra.mrb[0].mxu0 %v4280
    %v4619 = vpop.f32.mrb[0].mxu0
    %v4620 = vadd.f32 %v4580, %v4619
    %v4621 = vpop.f32.mrb[0].mxu0
    %v4622 = vpop.f32.mrb[0].mxu0
    %v4623 = vpop.f32.mrb[0].mxu0
    %4624 = vdwg.mxu0
    %v4625 = vxor.u32 %v4620, 2147483648
    %v4626 = vmul.f32 %v4625, 1.442695
    %v4627 = vpow.pop %v4626
    %v4628 = vadd.f32 %v4627, 1.0
    %v4629 = vrcp.pop %v4628
    %v4630 = vmul.f32 1.0, %v4629
    %4631 = vst [vmem:[%s12] sm:$0xff] %v4630
    // Predicated region
    $region74: #{light_probe_forward.1} parent=1 // pred_check
      _
    $region75: #{light_probe_forward.1} parent=1 // pred_check_branch
      %4633 = sbr.rel (0) target = $region77
    $region76: #{light_probe_forward.1} parent=1 // pred_region
      _
    $region77: #{light_probe_forward.1} parent=1 // pred_fallthru
      _
    // Predicated region
    $region78: #{light_probe_forward.1} parent=1 // pred_check
      _
    $region79: #{light_probe_forward.1} parent=1 // pred_check_branch
      %4635 = sbr.rel (0) target = $region81
    $region80: #{light_probe_forward.1} parent=1 // pred_region
      _
    $region81: #{light_probe_forward.1} parent=1 // pred_fallthru
      _
    %4636 = vsyncpa [#allocation3], 1
    %4637 = vsyncpa [#allocation5], 1
    %4638 = vsyncpa [#allocation8], 1
    %4639 = vsyncpa [#allocation11], 1

</llo_original>
